<compile_context>
chip_gen: v6e
topology: v6e:2x2x1
jax: 0.10.0
libtpu: 0.0.40
codegen_flags: <defaults>
</compile_context>

<pallas_src>
import jax
import jax.numpy as jnp
from jax.experimental import pallas as pl
from jax.experimental.pallas import tpu as pltpu


def _make_kernel(BN, H, W, C, E, F):
    HW = H * W
    ROWS = BN * HW
    NINEC = 9 * C
    # Static row shifts of the flat (n*H*W + h*W + w) index for the 9 taps.
    shifts = [(dy - 1) * W + (dx - 1) for dy in range(3) for dx in range(3)]

    def kernel(ys_ref, x_ref, mask_ref, wy_ref, by_ref, wimg_ref, wp_ref,
               bc_ref, pool_ref, wf_ref, bf_ref, out_ref):
        x = x_ref[...]                                         # (ROWS, C) f32

        # ---- im2col image columns: XLU sublane rolls + one 0/1 border mask ----
        # For tap shift s, every row whose source pixel would wrap (off the
        # image border, across samples, or around the slab) is exactly a row
        # where mask == 0, so rotate+mask == zero-padded shift.
        cols = []
        for s in shifts:
            shifted = x if s == 0 else pltpu.roll(x, shift=(-s) % ROWS, axis=0)
            cols.append(shifted.astype(jnp.bfloat16))
        a_img = jnp.concatenate(cols, axis=1)                  # (ROWS, 9C) bf16

        m = mask_ref[...]                                      # (HW, 9C) bf16
        if BN > 1:  # tile to ROWS rows: leading-dim broadcast + free reshape (HW % 8 == 0)
            m = jnp.broadcast_to(m[None], (BN, HW, NINEC)).reshape(ROWS, NINEC)
        a_img = a_img * m

        # ---- fused 3x3 conv over image channels: single bf16 MXU matmul ----
        acc = jnp.dot(a_img, wimg_ref[...],
                      preferred_element_type=jnp.float32) + bc_ref[...]    # (ROWS, F) f32

        # ---- y_encoder + spatially-constant y contribution (mask folded into Wp) ----
        y_emb = jnp.dot(ys_ref[...], wy_ref[...],
                        preferred_element_type=jnp.float32) + by_ref[...]  # (BN, E) f32
        y_exp = jnp.broadcast_to(y_emb[:, None, :], (BN, HW, E)).reshape(ROWS, E)
        wp = wp_ref[...]                                       # (HW, E*F) f32
        if BN > 1:
            wp = jnp.broadcast_to(wp[None], (BN, HW, E * F)).reshape(ROWS, E * F)
        for e in range(E):                                     # E lane-broadcast MACs on (ROWS, F)
            acc = acc + y_exp[:, e:e + 1] * wp[:, e * F:(e + 1) * F]

        # LeakyReLU(0.2)
        act = jnp.where(acc > 0, acc, 0.2 * acc)

        # ---- global mean pool (precomputed 1/HW pool matrix, bf16 MXU) + final linear ----
        pooled = jnp.dot(pool_ref[...], act.astype(jnp.bfloat16),
                         preferred_element_type=jnp.float32)               # (BN, F) f32
        out_ref[...] = jnp.dot(pooled.astype(jnp.bfloat16), wf_ref[...],
                               preferred_element_type=jnp.float32) + bf_ref[...]

    return kernel


def _lane_pad(n):
    return -(-n // 128) * 128


def _working_set_bytes(BN, HW, C, E, F):
    """Rough, lane-padding-aware per-grid-step VMEM estimate (bytes)."""
    ROWS = BN * HW
    b = 0
    b += 2 * ROWS * _lane_pad(C) * 4                   # x input block (double-buffered)
    b += 9 * ROWS * _lane_pad(C) * 2                   # rolled bf16 columns (worst-case live)
    b += 2 * ROWS * _lane_pad(9 * C) * 2               # a_img + masked product (bf16)
    b += ROWS * _lane_pad(9 * C) * 2                   # tiled border mask
    b += ROWS * _lane_pad(E * F) * 4                   # tiled Wp
    b += ROWS * _lane_pad(E) * 4                       # y_exp
    b += ROWS * _lane_pad(F) * (4 + 4 + 2)             # acc, act, act(bf16)
    b += BN * _lane_pad(ROWS) * 2                      # pool matrix
    return b


def _choose_block_n(N, HW, C, E, F, block_n, budget_bytes):
    if block_n is not None:
        BN = block_n
    elif N <= 8:
        BN = N
    else:
        cands = [d for d in range(8, N + 1, 8) if N % d == 0]
        fits = [d for d in cands if _working_set_bytes(d, HW, C, E, F) <= budget_bytes]
        # Prefer >= 2 grid steps so the batch axis can span both TensorCores on v7x.
        pref = [d for d in fits if N // d >= 2]
        if pref:
            BN = max(pref)
        elif fits:
            BN = max(fits)
        elif cands:
            BN = min(cands)
        else:
            BN = N
    assert N % BN == 0 and (BN == N or BN % 8 == 0), (N, BN)
    return BN


def discriminator_forward(imgs_nchw, ys_onehot, params, block_n=None,
                          vmem_budget_bytes=28 * 1024 * 1024):
    N, C, H, W = imgs_nchw.shape
    Y = ys_onehot.shape[1]
    E = params["wy"].shape[1]
    F = params["wf"].shape[0]
    HW = H * W
    assert HW % 8 == 0, "H*W must be a multiple of 8 (free in-kernel row reshapes)"

    BN = _choose_block_n(N, HW, C, E, F, block_n, vmem_budget_bytes)
    ROWS = BN * HW

    # Layout plumbing only: NCHW -> NHWC -> flat (N*H*W, C) rows (channels on lanes).
    x2d = jnp.transpose(imgs_nchw, (0, 2, 3, 1)).reshape(N * HW, C).astype(jnp.float32)

    # Per-pixel 3x3 tap validity (same for every sample): tap (dy,dx) is valid at
    # flat pixel p=(h,w) iff the source pixel (h+dy-1, w+dx-1) lies inside the image.
    h_idx = jnp.arange(HW, dtype=jnp.int32) // W
    w_idx = jnp.arange(HW, dtype=jnp.int32) % W
    tap_cols = []
    for dy in range(3):
        for dx in range(3):
            ok = ((h_idx + (dy - 1) >= 0) & (h_idx + (dy - 1) < H)
                  & (w_idx + (dx - 1) >= 0) & (w_idx + (dx - 1) < W))
            tap_cols.append(ok.astype(jnp.float32))
    tapmask = jnp.stack(tap_cols, axis=1)                                  # (HW, 9)

    # 0/1 mask over the im2col slab lanes (tap-major, channel-minor); exact in bf16.
    mask9c = jnp.repeat(tapmask, C, axis=1).astype(jnp.bfloat16)           # (HW, 9C)

    # Image-tap conv weight in im2col order ((dy,dx) major, c minor).
    wimg = params["wci"].reshape(9 * C, F).astype(jnp.bfloat16)            # (9C, F)

    # Border-mask-weighted y conv weight: Wp[p,e,f] = sum_k mask[p,k] * wcy[k,e,f].
    wcy9 = params["wcy"].reshape(9, E, F)
    wp2 = jnp.einsum("pk,kef->pef", tapmask, wcy9).reshape(HW, E * F)      # (HW, E*F) f32

    # Pooling matrix: pooled[n] = (1/HW) * sum of that sample's rows (0/1 * 2^-k, bf16-exact).
    row_sample = jnp.arange(ROWS, dtype=jnp.int32) // HW
    poolmat = ((jnp.arange(BN, dtype=jnp.int32)[:, None] == row_sample[None, :])
               .astype(jnp.float32) / HW).astype(jnp.bfloat16)             # (BN, ROWS)

    kernel = _make_kernel(BN, H, W, C, E, F)
    ws = _working_set_bytes(BN, HW, C, E, F)
    # Explicit scoped-VMEM limit: >= estimate with headroom, safe on v7x (64 MiB/TC).
    vmem_limit = int(min(max(32 * 1024 * 1024, 2 * ws), 48 * 1024 * 1024))

    grid_spec = pltpu.PrefetchScalarGridSpec(
        num_scalar_prefetch=0,
        grid=(N // BN,),
        in_specs=[
            pl.BlockSpec((BN, Y), lambda n: (n, 0)),             # one-hot labels block
            pl.BlockSpec((ROWS, C), lambda n: (n, 0)),           # flat image rows block
            pl.BlockSpec((HW, 9 * C), lambda n: (0, 0)),         # border mask (resident)
            pl.BlockSpec((Y, E), lambda n: (0, 0)),              # y_encoder weight
            pl.BlockSpec((1, E), lambda n: (0, 0)),              # y_encoder bias
            pl.BlockSpec((9 * C, F), lambda n: (0, 0)),          # conv weight (image taps)
            pl.BlockSpec((HW, E * F), lambda n: (0, 0)),         # mask-weighted y conv weight
            pl.BlockSpec((1, F), lambda n: (0, 0)),              # conv bias
            pl.BlockSpec((BN, ROWS), lambda n: (0, 0)),          # pooling matrix
            pl.BlockSpec((F, 1), lambda n: (0, 0)),              # fc weight (bf16)
            pl.BlockSpec((1, 1), lambda n: (0, 0)),              # fc bias
        ],
        out_specs=pl.BlockSpec((BN, 1), lambda n: (n, 0)),
    )
    return pl.pallas_call(
        kernel,
        out_shape=jax.ShapeDtypeStruct((N, 1), jnp.float32),
        grid_spec=grid_spec,
        compiler_params=pltpu.CompilerParams(
            dimension_semantics=("parallel",),
            vmem_limit_bytes=vmem_limit),
    )(ys_onehot.astype(jnp.float32), x2d, mask9c, params["wy"], params["by"],
      wimg, wp2, params["bc"].reshape(1, F), poolmat,
      params["wf"].astype(jnp.bfloat16), params["bf"])


def init_params(key, C, Y, E, F):
    ks = jax.random.split(key, 5)
    return {
        "wy": jax.random.normal(ks[0], (Y, E), jnp.float32) * 0.2,
        "by": jnp.zeros((1, E), jnp.float32),
        "wci": jax.random.normal(ks[1], (3, 3, C, F), jnp.float32) * 0.1,
        "wcy": jax.random.normal(ks[2], (3, 3, E, F), jnp.float32) * 0.1,
        "bc": jax.random.normal(ks[3], (1, 1, F), jnp.float32) * 0.01,
        "wf": jax.random.normal(ks[4], (F, 1), jnp.float32) * 0.1,
        "bf": jnp.zeros((1, 1), jnp.float32),
    }


def reference_forward(imgs_nchw, ys, p):
    """Pure-JAX reference mirroring the PyTorch forward (NCHW)."""
    N, C, H, W = imgs_nchw.shape
    E = p["wy"].shape[1]
    F = p["wf"].shape[0]
    y_emb = ys @ p["wy"] + p["by"]                                    # (N, E)
    y_maps = jnp.broadcast_to(y_emb[:, :, None, None], (N, E, H, W))  # view+expand
    x = jnp.concatenate([imgs_nchw, y_maps], axis=1)                  # cat dim=1
    w_hwio = jnp.concatenate([p["wci"], p["wcy"]], axis=2)            # (3,3,C+E,F)
    w_oihw = jnp.transpose(w_hwio, (3, 2, 0, 1))
    y = jax.lax.conv_general_dilated(
        x, w_oihw, window_strides=(1, 1), padding="SAME",
        dimension_numbers=("NCHW", "OIHW", "NCHW"),
        precision=jax.lax.Precision.HIGHEST)
    y = y + p["bc"].reshape(1, F, 1, 1)
    y = jnp.where(y > 0, y, 0.2 * y)
    pooled = jnp.mean(y, axis=(2, 3))                                 # (N, F)
    return pooled @ p["wf"] + p["bf"]


if __name__ == "__main__":
    key = jax.random.PRNGKey(0)
    N, C, H, W = 2, 4, 16, 16
    Y, E, F = 10, 4, 32
    k_img, k_lbl, k_par = jax.random.split(key, 3)

    imgs = jax.random.normal(k_img, (N, C, H, W), jnp.float32)
    labels = jax.random.randint(k_lbl, (N,), 0, Y)
    ys = jax.nn.one_hot(labels, Y, dtype=jnp.float32)
    params = init_params(k_par, C, Y, E, F)

    out = discriminator_forward(imgs, ys, params)
    out = jax.block_until_ready(out)

    ref = reference_forward(imgs, ys, params)
    assert out.shape == (N, 1)
    assert bool(jnp.allclose(out, ref, rtol=5e-2, atol=2e-2)), (out, ref)
    print("KERNEL_OK")
</pallas_src>

<mosaic_0001>
module attributes {stable_mosaic.version = 11 : i64} {
  func.func @kernel(%arg0: i32, %arg1: memref<2x10xf32, #tpu.memory_space<vmem>>, %arg2: memref<512x4xf32, #tpu.memory_space<vmem>>, %arg3: memref<256x36xbf16, #tpu.memory_space<vmem>>, %arg4: memref<10x4xf32, #tpu.memory_space<vmem>>, %arg5: memref<1x4xf32, #tpu.memory_space<vmem>>, %arg6: memref<36x32xbf16, #tpu.memory_space<vmem>>, %arg7: memref<256x128xf32, #tpu.memory_space<vmem>>, %arg8: memref<1x32xf32, #tpu.memory_space<vmem>>, %arg9: memref<2x512xbf16, #tpu.memory_space<vmem>>, %arg10: memref<32x1xbf16, #tpu.memory_space<vmem>>, %arg11: memref<1x1xf32, #tpu.memory_space<vmem>>, %arg12: memref<2x1xf32, #tpu.memory_space<vmem>>) attributes {dimension_semantics = [#tpu.dimension_semantics<parallel>], iteration_bounds = array<i64: 1>, scalar_prefetch = 0 : i64, scratch_operands = 0 : i64, tpu.core_type = #tpu.core_type<tc>, window_params = [{transform_indices = @transform_0, window_bounds = array<i64: 2, 10>}, {transform_indices = @transform_1, window_bounds = array<i64: 512, 4>}, {pipeline_mode = #tpu.pipeline_mode<synchronous>, transform_indices = @transform_2, window_bounds = array<i64: 256, 36>}, {pipeline_mode = #tpu.pipeline_mode<synchronous>, transform_indices = @transform_3, window_bounds = array<i64: 10, 4>}, {pipeline_mode = #tpu.pipeline_mode<synchronous>, transform_indices = @transform_4, window_bounds = array<i64: 1, 4>}, {pipeline_mode = #tpu.pipeline_mode<synchronous>, transform_indices = @transform_5, window_bounds = array<i64: 36, 32>}, {pipeline_mode = #tpu.pipeline_mode<synchronous>, transform_indices = @transform_6, window_bounds = array<i64: 256, 128>}, {pipeline_mode = #tpu.pipeline_mode<synchronous>, transform_indices = @transform_7, window_bounds = array<i64: 1, 32>}, {pipeline_mode = #tpu.pipeline_mode<synchronous>, transform_indices = @transform_8, window_bounds = array<i64: 2, 512>}, {pipeline_mode = #tpu.pipeline_mode<synchronous>, transform_indices = @transform_9, window_bounds = array<i64: 32, 1>}, {pipeline_mode = #tpu.pipeline_mode<synchronous>, transform_indices = @transform_10, window_bounds = array<i64: 1, 1>}, {transform_indices = @transform_11, window_bounds = array<i64: 2, 1>}]} {
    %c0 = arith.constant 0 : index
    %c0_0 = arith.constant 0 : index
    %0 = vector.load %arg2[%c0, %c0_0] : memref<512x4xf32, #tpu.memory_space<vmem>>, vector<512x4xf32>
    %c17_i32 = arith.constant 17 : i32
    %1 = tpu.dynamic_rotate %0 by %c17_i32 dim 0 : vector<512x4xf32>, i32 -> vector<512x4xf32>
    %2 = arith.truncf %1 : vector<512x4xf32> to vector<512x4xbf16>
    %c16_i32 = arith.constant 16 : i32
    %3 = tpu.dynamic_rotate %0 by %c16_i32 dim 0 : vector<512x4xf32>, i32 -> vector<512x4xf32>
    %4 = arith.truncf %3 : vector<512x4xf32> to vector<512x4xbf16>
    %c15_i32 = arith.constant 15 : i32
    %5 = tpu.dynamic_rotate %0 by %c15_i32 dim 0 : vector<512x4xf32>, i32 -> vector<512x4xf32>
    %6 = arith.truncf %5 : vector<512x4xf32> to vector<512x4xbf16>
    %c1_i32 = arith.constant 1 : i32
    %7 = tpu.dynamic_rotate %0 by %c1_i32 dim 0 : vector<512x4xf32>, i32 -> vector<512x4xf32>
    %8 = arith.truncf %7 : vector<512x4xf32> to vector<512x4xbf16>
    %9 = arith.truncf %0 : vector<512x4xf32> to vector<512x4xbf16>
    %c511_i32 = arith.constant 511 : i32
    %10 = tpu.dynamic_rotate %0 by %c511_i32 dim 0 : vector<512x4xf32>, i32 -> vector<512x4xf32>
    %11 = arith.truncf %10 : vector<512x4xf32> to vector<512x4xbf16>
    %c497_i32 = arith.constant 497 : i32
    %12 = tpu.dynamic_rotate %0 by %c497_i32 dim 0 : vector<512x4xf32>, i32 -> vector<512x4xf32>
    %13 = arith.truncf %12 : vector<512x4xf32> to vector<512x4xbf16>
    %c496_i32 = arith.constant 496 : i32
    %14 = tpu.dynamic_rotate %0 by %c496_i32 dim 0 : vector<512x4xf32>, i32 -> vector<512x4xf32>
    %15 = arith.truncf %14 : vector<512x4xf32> to vector<512x4xbf16>
    %c495_i32 = arith.constant 495 : i32
    %16 = tpu.dynamic_rotate %0 by %c495_i32 dim 0 : vector<512x4xf32>, i32 -> vector<512x4xf32>
    %17 = arith.truncf %16 : vector<512x4xf32> to vector<512x4xbf16>
    %18 = tpu.concatenate %2, %4, %6, %8, %9, %11, %13, %15, %17 in 1 : vector<512x4xbf16>, vector<512x4xbf16>, vector<512x4xbf16>, vector<512x4xbf16>, vector<512x4xbf16>, vector<512x4xbf16>, vector<512x4xbf16>, vector<512x4xbf16>, vector<512x4xbf16> -> vector<512x36xbf16>
    %c0_1 = arith.constant 0 : index
    %c0_2 = arith.constant 0 : index
    %19 = vector.load %arg3[%c0_1, %c0_2] : memref<256x36xbf16, #tpu.memory_space<vmem>>, vector<256x36xbf16>
    %20 = vector.shape_cast %19 : vector<256x36xbf16> to vector<1x256x36xbf16>
    %21 = vector.shape_cast %20 : vector<1x256x36xbf16> to vector<1x256x36xbf16>
    %22 = vector.broadcast %21 : vector<1x256x36xbf16> to vector<2x256x36xbf16>
    %23 = vector.shape_cast %22 : vector<2x256x36xbf16> to vector<512x36xbf16>
    %24 = arith.mulf %18, %23 : vector<512x36xbf16>
    %c0_3 = arith.constant 0 : index
    %c0_4 = arith.constant 0 : index
    %25 = vector.load %arg6[%c0_3, %c0_4] : memref<36x32xbf16, #tpu.memory_space<vmem>>, vector<36x32xbf16>
    %cst = arith.constant dense<0.000000e+00> : vector<512x32xf32>
    %26 = tpu.matmul %24, %25, %cst {dimension_numbers = #tpu.dot_dimension_numbers<[1], [0], [0], [1], [0, 0, 1, 1], [], []>} : vector<512x36xbf16>, vector<36x32xbf16>, vector<512x32xf32> -> vector<512x32xf32>
    %c0_5 = arith.constant 0 : index
    %c0_6 = arith.constant 0 : index
    %27 = vector.load %arg8[%c0_5, %c0_6] : memref<1x32xf32, #tpu.memory_space<vmem>>, vector<1x32xf32>
    %28 = vector.broadcast %27 : vector<1x32xf32> to vector<512x32xf32>
    %29 = arith.addf %26, %28 : vector<512x32xf32>
    %c0_7 = arith.constant 0 : index
    %c0_8 = arith.constant 0 : index
    %30 = vector.load %arg1[%c0_7, %c0_8] : memref<2x10xf32, #tpu.memory_space<vmem>>, vector<2x10xf32>
    %c0_9 = arith.constant 0 : index
    %c0_10 = arith.constant 0 : index
    %31 = vector.load %arg4[%c0_9, %c0_10] : memref<10x4xf32, #tpu.memory_space<vmem>>, vector<10x4xf32>
    %cst_11 = arith.constant dense<0.000000e+00> : vector<2x4xf32>
    %32 = tpu.matmul %30, %31, %cst_11 {dimension_numbers = #tpu.dot_dimension_numbers<[1], [0], [0], [1], [0, 0, 1, 1], [], []>} : vector<2x10xf32>, vector<10x4xf32>, vector<2x4xf32> -> vector<2x4xf32>
    %c0_12 = arith.constant 0 : index
    %c0_13 = arith.constant 0 : index
    %33 = vector.load %arg5[%c0_12, %c0_13] : memref<1x4xf32, #tpu.memory_space<vmem>>, vector<1x4xf32>
    %34 = vector.broadcast %33 : vector<1x4xf32> to vector<2x4xf32>
    %35 = arith.addf %32, %34 : vector<2x4xf32>
    %36 = vector.shape_cast %35 : vector<2x4xf32> to vector<2x1x4xf32>
    %37 = vector.shape_cast %36 : vector<2x1x4xf32> to vector<2x1x4xf32>
    %38 = vector.broadcast %37 : vector<2x1x4xf32> to vector<2x256x4xf32>
    %39 = vector.shape_cast %38 : vector<2x256x4xf32> to vector<512x4xf32>
    %c0_14 = arith.constant 0 : index
    %c0_15 = arith.constant 0 : index
    %40 = vector.load %arg7[%c0_14, %c0_15] : memref<256x128xf32, #tpu.memory_space<vmem>>, vector<256x128xf32>
    %41 = vector.shape_cast %40 : vector<256x128xf32> to vector<1x256x128xf32>
    %42 = vector.shape_cast %41 : vector<1x256x128xf32> to vector<1x256x128xf32>
    %43 = vector.broadcast %42 : vector<1x256x128xf32> to vector<2x256x128xf32>
    %44 = vector.shape_cast %43 : vector<2x256x128xf32> to vector<512x128xf32>
    %45 = vector.extract_strided_slice %39 {offsets = [0, 0], sizes = [512, 1], strides = [1, 1]} : vector<512x4xf32> to vector<512x1xf32>
    %46 = vector.extract_strided_slice %44 {offsets = [0, 0], sizes = [512, 32], strides = [1, 1]} : vector<512x128xf32> to vector<512x32xf32>
    %47 = vector.broadcast %45 : vector<512x1xf32> to vector<512x32xf32>
    %48 = arith.mulf %47, %46 : vector<512x32xf32>
    %49 = arith.addf %29, %48 : vector<512x32xf32>
    %50 = vector.extract_strided_slice %39 {offsets = [0, 1], sizes = [512, 1], strides = [1, 1]} : vector<512x4xf32> to vector<512x1xf32>
    %51 = vector.extract_strided_slice %44 {offsets = [0, 32], sizes = [512, 32], strides = [1, 1]} : vector<512x128xf32> to vector<512x32xf32>
    %52 = vector.broadcast %50 : vector<512x1xf32> to vector<512x32xf32>
    %53 = arith.mulf %52, %51 : vector<512x32xf32>
    %54 = arith.addf %49, %53 : vector<512x32xf32>
    %55 = vector.extract_strided_slice %39 {offsets = [0, 2], sizes = [512, 1], strides = [1, 1]} : vector<512x4xf32> to vector<512x1xf32>
    %56 = vector.extract_strided_slice %44 {offsets = [0, 64], sizes = [512, 32], strides = [1, 1]} : vector<512x128xf32> to vector<512x32xf32>
    %57 = vector.broadcast %55 : vector<512x1xf32> to vector<512x32xf32>
    %58 = arith.mulf %57, %56 : vector<512x32xf32>
    %59 = arith.addf %54, %58 : vector<512x32xf32>
    %60 = vector.extract_strided_slice %39 {offsets = [0, 3], sizes = [512, 1], strides = [1, 1]} : vector<512x4xf32> to vector<512x1xf32>
    %61 = vector.extract_strided_slice %44 {offsets = [0, 96], sizes = [512, 32], strides = [1, 1]} : vector<512x128xf32> to vector<512x32xf32>
    %62 = vector.broadcast %60 : vector<512x1xf32> to vector<512x32xf32>
    %63 = arith.mulf %62, %61 : vector<512x32xf32>
    %64 = arith.addf %59, %63 : vector<512x32xf32>
    %cst_16 = arith.constant 0.000000e+00 : f32
    %65 = vector.broadcast %cst_16 : f32 to vector<512x32xf32>
    %66 = arith.cmpf ogt, %64, %65 : vector<512x32xf32>
    %cst_17 = arith.constant 2.000000e-01 : f32
    %67 = vector.broadcast %cst_17 : f32 to vector<512x32xf32>
    %68 = arith.mulf %67, %64 : vector<512x32xf32>
    %69 = arith.select %66, %64, %68 : vector<512x32xi1>, vector<512x32xf32>
    %c0_18 = arith.constant 0 : index
    %c0_19 = arith.constant 0 : index
    %70 = vector.load %arg9[%c0_18, %c0_19] : memref<2x512xbf16, #tpu.memory_space<vmem>>, vector<2x512xbf16>
    %71 = arith.truncf %69 : vector<512x32xf32> to vector<512x32xbf16>
    %cst_20 = arith.constant dense<0.000000e+00> : vector<2x32xf32>
    %72 = tpu.matmul %70, %71, %cst_20 {dimension_numbers = #tpu.dot_dimension_numbers<[1], [0], [0], [1], [0, 0, 1, 1], [], []>} : vector<2x512xbf16>, vector<512x32xbf16>, vector<2x32xf32> -> vector<2x32xf32>
    %73 = arith.truncf %72 : vector<2x32xf32> to vector<2x32xbf16>
    %c0_21 = arith.constant 0 : index
    %c0_22 = arith.constant 0 : index
    %74 = vector.load %arg10[%c0_21, %c0_22] : memref<32x1xbf16, #tpu.memory_space<vmem>>, vector<32x1xbf16>
    %cst_23 = arith.constant dense<0.000000e+00> : vector<2x1xf32>
    %75 = tpu.matmul %73, %74, %cst_23 {dimension_numbers = #tpu.dot_dimension_numbers<[1], [0], [0], [1], [0, 0, 1, 1], [], []>} : vector<2x32xbf16>, vector<32x1xbf16>, vector<2x1xf32> -> vector<2x1xf32>
    %c0_24 = arith.constant 0 : index
    %c0_25 = arith.constant 0 : index
    %76 = vector.load %arg11[%c0_24, %c0_25] : memref<1x1xf32, #tpu.memory_space<vmem>>, vector<1x1xf32>
    %77 = vector.broadcast %76 : vector<1x1xf32> to vector<2x1xf32>
    %78 = arith.addf %75, %77 : vector<2x1xf32>
    %c0_26 = arith.constant 0 : index
    %c0_27 = arith.constant 0 : index
    %79 = vector.load %arg12[%c0_26, %c0_27] : memref<2x1xf32, #tpu.memory_space<vmem>>, vector<2x1xf32>
    tpu.vector_store %arg12[%c0_26, %c0_27], %78 {strides = array<i32>} : memref<2x1xf32, #tpu.memory_space<vmem>>, vector<2x1xf32>,
    return
  }
  func.func @transform_0(%arg0: i32) -> (i32, i32) {
    %c0_i32 = arith.constant 0 : i32
    %c0_i32_0 = arith.constant 0 : i32
    return %arg0, %c0_i32 : i32, i32
  }
  func.func @transform_1(%arg0: i32) -> (i32, i32) {
    %c0_i32 = arith.constant 0 : i32
    %c0_i32_0 = arith.constant 0 : i32
    return %arg0, %c0_i32 : i32, i32
  }
  func.func @transform_2(%arg0: i32) -> (i32, i32) {
    %c0_i32 = arith.constant 0 : i32
    %c0_i32_0 = arith.constant 0 : i32
    %c0_i32_1 = arith.constant 0 : i32
    return %c0_i32, %c0_i32_0 : i32, i32
  }
  func.func @transform_3(%arg0: i32) -> (i32, i32) {
    %c0_i32 = arith.constant 0 : i32
    %c0_i32_0 = arith.constant 0 : i32
    %c0_i32_1 = arith.constant 0 : i32
    return %c0_i32, %c0_i32_0 : i32, i32
  }
  func.func @transform_4(%arg0: i32) -> (i32, i32) {
    %c0_i32 = arith.constant 0 : i32
    %c0_i32_0 = arith.constant 0 : i32
    %c0_i32_1 = arith.constant 0 : i32
    return %c0_i32, %c0_i32_0 : i32, i32
  }
  func.func @transform_5(%arg0: i32) -> (i32, i32) {
    %c0_i32 = arith.constant 0 : i32
    %c0_i32_0 = arith.constant 0 : i32
    %c0_i32_1 = arith.constant 0 : i32
    return %c0_i32, %c0_i32_0 : i32, i32
  }
  func.func @transform_6(%arg0: i32) -> (i32, i32) {
    %c0_i32 = arith.constant 0 : i32
    %c0_i32_0 = arith.constant 0 : i32
    %c0_i32_1 = arith.constant 0 : i32
    return %c0_i32, %c0_i32_0 : i32, i32
  }
  func.func @transform_7(%arg0: i32) -> (i32, i32) {
    %c0_i32 = arith.constant 0 : i32
    %c0_i32_0 = arith.constant 0 : i32
    %c0_i32_1 = arith.constant 0 : i32
    return %c0_i32, %c0_i32_0 : i32, i32
  }
  func.func @transform_8(%arg0: i32) -> (i32, i32) {
    %c0_i32 = arith.constant 0 : i32
    %c0_i32_0 = arith.constant 0 : i32
    %c0_i32_1 = arith.constant 0 : i32
    return %c0_i32, %c0_i32_0 : i32, i32
  }
  func.func @transform_9(%arg0: i32) -> (i32, i32) {
    %c0_i32 = arith.constant 0 : i32
    %c0_i32_0 = arith.constant 0 : i32
    %c0_i32_1 = arith.constant 0 : i32
    return %c0_i32, %c0_i32_0 : i32, i32
  }
  func.func @transform_10(%arg0: i32) -> (i32, i32) {
    %c0_i32 = arith.constant 0 : i32
    %c0_i32_0 = arith.constant 0 : i32
    %c0_i32_1 = arith.constant 0 : i32
    return %c0_i32, %c0_i32_0 : i32, i32
  }
  func.func @transform_11(%arg0: i32) -> (i32, i32) {
    %c0_i32 = arith.constant 0 : i32
    %c0_i32_0 = arith.constant 0 : i32
    return %arg0, %c0_i32 : i32, i32
  }
}

</mosaic_0001>

<llo_original>
// kernel: tpu_custom_call.1
$region0: #{tpu_custom_call.1}
  #allocation0 [shape = 'u32[]', space=smem, size = 0x4, offset = 0x4, fixed_abs, tag = 'smem constant byte address 0x4 - core index']
  #allocation1 [shape = 'u32[144,128]{1,0:T(1,128)}', space=vmem, size = 0x12000, scoped, tag = 'internal scratch']
  #allocation2 [shape = 'f32[1,1]{1,0:T(1,128)S(1)}', space=vmem, size = 0x200, scoped, tag = 'scoped memory for tpu_custom_call.1']
  %s0 = inlined_call_operand.vmem [shape: f32[2,10], index: 0, kind: input, shape index: {}]
  %s1 = inlined_call_operand.vmem [shape: f32[512,4], index: 1, kind: input, shape index: {}]
  %s2 = inlined_call_operand.vmem [shape: bf16[256,36], index: 2, kind: input, shape index: {}]
  %s3 = inlined_call_operand.vmem [shape: f32[10,4], index: 3, kind: input, shape index: {}]
  %s4 = inlined_call_operand.vmem [shape: f32[1,4], index: 4, kind: input, shape index: {}]
  %s5 = inlined_call_operand.vmem [shape: bf16[36,32], index: 5, kind: input, shape index: {}]
  %s6 = inlined_call_operand.vmem [shape: f32[256,128], index: 6, kind: input, shape index: {}]
  %s7 = inlined_call_operand.vmem [shape: f32[1,32], index: 7, kind: input, shape index: {}]
  %s8 = inlined_call_operand.vmem [shape: bf16[2,512], index: 8, kind: input, shape index: {}]
  %s9 = inlined_call_operand.vmem [shape: bf16[32,1], index: 9, kind: input, shape index: {}]
  %s10 = inlined_call_operand.<no memory space> [shape: f32[1,1], index: 10, kind: input, shape index: {}]
  %s11 = inlined_call_operand.vmem [shape: f32[2,1], index: 11, kind: output, shape index: {}]
  %s12 = sld [smem:[#allocation0]]
  $region54: #{tpu_custom_call.1} parent=0
    _
  %s14 = ssub.s32 1, %s12
  %s15 = scalar_select 0, %s14, %s12
  %v16 = vstv %s10
  %17 = vst [vmem:[#allocation2] sm:$0x1] %v16
  // Predicated region
  $region2: #{tpu_custom_call.1} parent=0 // pred_check
    _
  $region3: #{tpu_custom_call.1} parent=0 // pred_check_branch
    %19 = sbr.rel (0) target = $region5
  $region4: #{tpu_custom_call.1} parent=0 // pred_region
    _
  $region5: #{tpu_custom_call.1} parent=0 // pred_fallthru
    _
  // Predicated region
  $region6: #{tpu_custom_call.1} parent=0 // pred_check
    _
  $region7: #{tpu_custom_call.1} parent=0 // pred_check_branch
    %21 = sbr.rel (0) target = $region9
  $region8: #{tpu_custom_call.1} parent=0 // pred_region
    _
  $region9: #{tpu_custom_call.1} parent=0 // pred_fallthru
    _
  // Predicated region
  $region10: #{tpu_custom_call.1} parent=0 // pred_check
    _
  $region11: #{tpu_custom_call.1} parent=0 // pred_check_branch
    %23 = sbr.rel (0) target = $region13
  $region12: #{tpu_custom_call.1} parent=0 // pred_region
    _
  $region13: #{tpu_custom_call.1} parent=0 // pred_fallthru
    _
  // Predicated region
  $region14: #{tpu_custom_call.1} parent=0 // pred_check
    _
  $region15: #{tpu_custom_call.1} parent=0 // pred_check_branch
    %25 = sbr.rel (0) target = $region17
  $region16: #{tpu_custom_call.1} parent=0 // pred_region
    _
  $region17: #{tpu_custom_call.1} parent=0 // pred_fallthru
    _
  // Predicated region
  $region18: #{tpu_custom_call.1} parent=0 // pred_check
    _
  $region19: #{tpu_custom_call.1} parent=0 // pred_check_branch
    %27 = sbr.rel (0) target = $region21
  $region20: #{tpu_custom_call.1} parent=0 // pred_region
    _
  $region21: #{tpu_custom_call.1} parent=0 // pred_fallthru
    _
  // Predicated region
  $region22: #{tpu_custom_call.1} parent=0 // pred_check
    _
  $region23: #{tpu_custom_call.1} parent=0 // pred_check_branch
    %29 = sbr.rel (0) target = $region25
  $region24: #{tpu_custom_call.1} parent=0 // pred_region
    _
  $region25: #{tpu_custom_call.1} parent=0 // pred_fallthru
    _
  // Predicated region
  $region26: #{tpu_custom_call.1} parent=0 // pred_check
    _
  $region27: #{tpu_custom_call.1} parent=0 // pred_check_branch
    %31 = sbr.rel (0) target = $region29
  $region28: #{tpu_custom_call.1} parent=0 // pred_region
    _
  $region29: #{tpu_custom_call.1} parent=0 // pred_fallthru
    _
  // Predicated region
  $region30: #{tpu_custom_call.1} parent=0 // pred_check
    _
  $region31: #{tpu_custom_call.1} parent=0 // pred_check_branch
    %33 = sbr.rel (0) target = $region33
  $region32: #{tpu_custom_call.1} parent=0 // pred_region
    _
  $region33: #{tpu_custom_call.1} parent=0 // pred_fallthru
    _
  // Predicated region
  $region34: #{tpu_custom_call.1} parent=0 // pred_check
    _
  $region35: #{tpu_custom_call.1} parent=0 // pred_check_branch
    %35 = sbr.rel (0) target = $region37
  $region36: #{tpu_custom_call.1} parent=0 // pred_region
    _
  $region37: #{tpu_custom_call.1} parent=0 // pred_fallthru
    _
  // Predicated region
  $region38: #{tpu_custom_call.1} parent=0 // pred_check
    _
  $region39: #{tpu_custom_call.1} parent=0 // pred_check_branch
    %37 = sbr.rel (0) target = $region41
  $region40: #{tpu_custom_call.1} parent=0 // pred_region
    _
  $region41: #{tpu_custom_call.1} parent=0 // pred_fallthru
    _
  // Predicated region
  $region42: #{tpu_custom_call.1} parent=0 // pred_check
    _
  $region43: #{tpu_custom_call.1} parent=0 // pred_check_branch
    %39 = sbr.rel (0) target = $region45
  $region44: #{tpu_custom_call.1} parent=0 // pred_region
    _
  $region45: #{tpu_custom_call.1} parent=0 // pred_fallthru
    _
  %v41 = vld [vmem:[%s1] sm:$0xff]
  %v42 = vld [vmem:[%s1 + $0x8] sm:$0xff]
  %v43 = vld [vmem:[%s1 + $0x10] sm:$0xff]
  %v44 = vld [vmem:[%s1 + $0x18] sm:$0xff]
  %v45 = vld [vmem:[%s1 + $0x20] sm:$0xff]
  %v46 = vld [vmem:[%s1 + $0x28] sm:$0xff]
  %v47 = vld [vmem:[%s1 + $0x30] sm:$0xff]
  %v48 = vld [vmem:[%s1 + $0x38] sm:$0xff]
  %v49 = vld [vmem:[%s1 + $0x40] sm:$0xff]
  %v50 = vld [vmem:[%s1 + $0x48] sm:$0xff]
  %v51 = vld [vmem:[%s1 + $0x50] sm:$0xff]
  %v52 = vld [vmem:[%s1 + $0x58] sm:$0xff]
  %v53 = vld [vmem:[%s1 + $0x60] sm:$0xff]
  %v54 = vld [vmem:[%s1 + $0x68] sm:$0xff]
  %v55 = vld [vmem:[%s1 + $0x70] sm:$0xff]
  %v56 = vld [vmem:[%s1 + $0x78] sm:$0xff]
  %v57 = vld [vmem:[%s1 + $0x80] sm:$0xff]
  %v58 = vld [vmem:[%s1 + $0x88] sm:$0xff]
  %v59 = vld [vmem:[%s1 + $0x90] sm:$0xff]
  %v60 = vld [vmem:[%s1 + $0x98] sm:$0xff]
  %v61 = vld [vmem:[%s1 + $0xa0] sm:$0xff]
  %v62 = vld [vmem:[%s1 + $0xa8] sm:$0xff]
  %v63 = vld [vmem:[%s1 + $0xb0] sm:$0xff]
  %v64 = vld [vmem:[%s1 + $0xb8] sm:$0xff]
  %v65 = vld [vmem:[%s1 + $0xc0] sm:$0xff]
  %v66 = vld [vmem:[%s1 + $0xc8] sm:$0xff]
  %v67 = vld [vmem:[%s1 + $0xd0] sm:$0xff]
  %v68 = vld [vmem:[%s1 + $0xd8] sm:$0xff]
  %v69 = vld [vmem:[%s1 + $0xe0] sm:$0xff]
  %v70 = vld [vmem:[%s1 + $0xe8] sm:$0xff]
  %v71 = vld [vmem:[%s1 + $0xf0] sm:$0xff]
  %v72 = vld [vmem:[%s1 + $0xf8] sm:$0xff]
  %v73 = vld [vmem:[%s1 + $0x100] sm:$0xff]
  %v74 = vld [vmem:[%s1 + $0x108] sm:$0xff]
  %v75 = vld [vmem:[%s1 + $0x110] sm:$0xff]
  %v76 = vld [vmem:[%s1 + $0x118] sm:$0xff]
  %v77 = vld [vmem:[%s1 + $0x120] sm:$0xff]
  %v78 = vld [vmem:[%s1 + $0x128] sm:$0xff]
  %v79 = vld [vmem:[%s1 + $0x130] sm:$0xff]
  %v80 = vld [vmem:[%s1 + $0x138] sm:$0xff]
  %v81 = vld [vmem:[%s1 + $0x140] sm:$0xff]
  %v82 = vld [vmem:[%s1 + $0x148] sm:$0xff]
  %v83 = vld [vmem:[%s1 + $0x150] sm:$0xff]
  %v84 = vld [vmem:[%s1 + $0x158] sm:$0xff]
  %v85 = vld [vmem:[%s1 + $0x160] sm:$0xff]
  %v86 = vld [vmem:[%s1 + $0x168] sm:$0xff]
  %v87 = vld [vmem:[%s1 + $0x170] sm:$0xff]
  %v88 = vld [vmem:[%s1 + $0x178] sm:$0xff]
  %v89 = vld [vmem:[%s1 + $0x180] sm:$0xff]
  %v90 = vld [vmem:[%s1 + $0x188] sm:$0xff]
  %v91 = vld [vmem:[%s1 + $0x190] sm:$0xff]
  %v92 = vld [vmem:[%s1 + $0x198] sm:$0xff]
  %v93 = vld [vmem:[%s1 + $0x1a0] sm:$0xff]
  %v94 = vld [vmem:[%s1 + $0x1a8] sm:$0xff]
  %v95 = vld [vmem:[%s1 + $0x1b0] sm:$0xff]
  %v96 = vld [vmem:[%s1 + $0x1b8] sm:$0xff]
  %v97 = vld [vmem:[%s1 + $0x1c0] sm:$0xff]
  %v98 = vld [vmem:[%s1 + $0x1c8] sm:$0xff]
  %v99 = vld [vmem:[%s1 + $0x1d0] sm:$0xff]
  %v100 = vld [vmem:[%s1 + $0x1d8] sm:$0xff]
  %v101 = vld [vmem:[%s1 + $0x1e0] sm:$0xff]
  %v102 = vld [vmem:[%s1 + $0x1e8] sm:$0xff]
  %v103 = vld [vmem:[%s1 + $0x1f0] sm:$0xff]
  %v104 = vld [vmem:[%s1 + $0x1f8] sm:$0xff]
  %v105 = vrot.slane %v41, 7
  %v106 = vrot.slane %v42, 7
  %v107 = vrot.slane %v43, 7
  %v108 = vrot.slane %v44, 7
  %v109 = vrot.slane %v45, 7
  %v110 = vrot.slane %v46, 7
  %v111 = vrot.slane %v47, 7
  %v112 = vrot.slane %v48, 7
  %v113 = vrot.slane %v49, 7
  %v114 = vrot.slane %v50, 7
  %v115 = vrot.slane %v51, 7
  %v116 = vrot.slane %v52, 7
  %v117 = vrot.slane %v53, 7
  %v118 = vrot.slane %v54, 7
  %v119 = vrot.slane %v55, 7
  %v120 = vrot.slane %v56, 7
  %v121 = vrot.slane %v57, 7
  %v122 = vrot.slane %v58, 7
  %v123 = vrot.slane %v59, 7
  %v124 = vrot.slane %v60, 7
  %v125 = vrot.slane %v61, 7
  %v126 = vrot.slane %v62, 7
  %v127 = vrot.slane %v63, 7
  %v128 = vrot.slane %v64, 7
  %v129 = vrot.slane %v65, 7
  %v130 = vrot.slane %v66, 7
  %v131 = vrot.slane %v67, 7
  %v132 = vrot.slane %v68, 7
  %v133 = vrot.slane %v69, 7
  %v134 = vrot.slane %v70, 7
  %v135 = vrot.slane %v71, 7
  %v136 = vrot.slane %v72, 7
  %v137 = vrot.slane %v73, 7
  %v138 = vrot.slane %v74, 7
  %v139 = vrot.slane %v75, 7
  %v140 = vrot.slane %v76, 7
  %v141 = vrot.slane %v77, 7
  %v142 = vrot.slane %v78, 7
  %v143 = vrot.slane %v79, 7
  %v144 = vrot.slane %v80, 7
  %v145 = vrot.slane %v81, 7
  %v146 = vrot.slane %v82, 7
  %v147 = vrot.slane %v83, 7
  %v148 = vrot.slane %v84, 7
  %v149 = vrot.slane %v85, 7
  %v150 = vrot.slane %v86, 7
  %v151 = vrot.slane %v87, 7
  %v152 = vrot.slane %v88, 7
  %v153 = vrot.slane %v89, 7
  %v154 = vrot.slane %v90, 7
  %v155 = vrot.slane %v91, 7
  %v156 = vrot.slane %v92, 7
  %v157 = vrot.slane %v93, 7
  %v158 = vrot.slane %v94, 7
  %v159 = vrot.slane %v95, 7
  %v160 = vrot.slane %v96, 7
  %v161 = vrot.slane %v97, 7
  %v162 = vrot.slane %v98, 7
  %v163 = vrot.slane %v99, 7
  %v164 = vrot.slane %v100, 7
  %v165 = vrot.slane %v101, 7
  %v166 = vrot.slane %v102, 7
  %v167 = vrot.slane %v103, 7
  %v168 = vrot.slane %v104, 7
  %v169 = vlaneseq
  %v170 = vshrl.u32 %v169, 7
  %vm171 = vcmp.lt.s32.totalorder %v170, 1
  %v172 = vsel %vm171, %v167, %v168
  %v173 = vsel %vm171, %v166, %v167
  %v174 = vsel %vm171, %v165, %v166
  %v175 = vsel %vm171, %v164, %v165
  %v176 = vsel %vm171, %v163, %v164
  %v177 = vsel %vm171, %v162, %v163
  %v178 = vsel %vm171, %v161, %v162
  %v179 = vsel %vm171, %v160, %v161
  %v180 = vsel %vm171, %v159, %v160
  %v181 = vsel %vm171, %v158, %v159
  %v182 = vsel %vm171, %v157, %v158
  %v183 = vsel %vm171, %v156, %v157
  %v184 = vsel %vm171, %v155, %v156
  %v185 = vsel %vm171, %v154, %v155
  %v186 = vsel %vm171, %v153, %v154
  %v187 = vsel %vm171, %v152, %v153
  %v188 = vsel %vm171, %v151, %v152
  %v189 = vsel %vm171, %v150, %v151
  %v190 = vsel %vm171, %v149, %v150
  %v191 = vsel %vm171, %v148, %v149
  %v192 = vsel %vm171, %v147, %v148
  %v193 = vsel %vm171, %v146, %v147
  %v194 = vsel %vm171, %v145, %v146
  %v195 = vsel %vm171, %v144, %v145
  %v196 = vsel %vm171, %v143, %v144
  %v197 = vsel %vm171, %v142, %v143
  %v198 = vsel %vm171, %v141, %v142
  %v199 = vsel %vm171, %v140, %v141
  %v200 = vsel %vm171, %v139, %v140
  %v201 = vsel %vm171, %v138, %v139
  %v202 = vsel %vm171, %v137, %v138
  %v203 = vsel %vm171, %v136, %v137
  %v204 = vsel %vm171, %v135, %v136
  %v205 = vsel %vm171, %v134, %v135
  %v206 = vsel %vm171, %v133, %v134
  %v207 = vsel %vm171, %v132, %v133
  %v208 = vsel %vm171, %v131, %v132
  %v209 = vsel %vm171, %v130, %v131
  %v210 = vsel %vm171, %v129, %v130
  %v211 = vsel %vm171, %v128, %v129
  %v212 = vsel %vm171, %v127, %v128
  %v213 = vsel %vm171, %v126, %v127
  %v214 = vsel %vm171, %v125, %v126
  %v215 = vsel %vm171, %v124, %v125
  %v216 = vsel %vm171, %v123, %v124
  %v217 = vsel %vm171, %v122, %v123
  %v218 = vsel %vm171, %v121, %v122
  %v219 = vsel %vm171, %v120, %v121
  %v220 = vsel %vm171, %v119, %v120
  %v221 = vsel %vm171, %v118, %v119
  %v222 = vsel %vm171, %v117, %v118
  %v223 = vsel %vm171, %v116, %v117
  %v224 = vsel %vm171, %v115, %v116
  %v225 = vsel %vm171, %v114, %v115
  %v226 = vsel %vm171, %v113, %v114
  %v227 = vsel %vm171, %v112, %v113
  %v228 = vsel %vm171, %v111, %v112
  %v229 = vsel %vm171, %v110, %v111
  %v230 = vsel %vm171, %v109, %v110
  %v231 = vsel %vm171, %v108, %v109
  %v232 = vsel %vm171, %v107, %v108
  %v233 = vsel %vm171, %v106, %v107
  %v234 = vsel %vm171, %v105, %v106
  %v235 = vsel %vm171, %v168, %v105
  %v236 = vpack.c.bf16 %v172, %v173
  %v237 = vpack.c.bf16 %v234, %v235
  %v238 = vpack.c.bf16 %v232, %v233
  %v239 = vpack.c.bf16 %v230, %v231
  %v240 = vpack.c.bf16 %v228, %v229
  %v241 = vpack.c.bf16 %v226, %v227
  %v242 = vpack.c.bf16 %v224, %v225
  %v243 = vpack.c.bf16 %v222, %v223
  %v244 = vpack.c.bf16 %v220, %v221
  %v245 = vpack.c.bf16 %v218, %v219
  %v246 = vpack.c.bf16 %v216, %v217
  %v247 = vpack.c.bf16 %v214, %v215
  %v248 = vpack.c.bf16 %v212, %v213
  %v249 = vpack.c.bf16 %v210, %v211
  %v250 = vpack.c.bf16 %v208, %v209
  %v251 = vpack.c.bf16 %v206, %v207
  %v252 = vpack.c.bf16 %v204, %v205
  %v253 = vpack.c.bf16 %v202, %v203
  %v254 = vpack.c.bf16 %v200, %v201
  %v255 = vpack.c.bf16 %v198, %v199
  %v256 = vpack.c.bf16 %v196, %v197
  %v257 = vpack.c.bf16 %v194, %v195
  %v258 = vpack.c.bf16 %v192, %v193
  %v259 = vpack.c.bf16 %v190, %v191
  %v260 = vpack.c.bf16 %v188, %v189
  %v261 = vpack.c.bf16 %v186, %v187
  %v262 = vpack.c.bf16 %v184, %v185
  %v263 = vpack.c.bf16 %v182, %v183
  %v264 = vpack.c.bf16 %v180, %v181
  %v265 = vpack.c.bf16 %v178, %v179
  %v266 = vpack.c.bf16 %v176, %v177
  %v267 = vpack.c.bf16 %v174, %v175
  %v268 = vpack.c.bf16 %v104, %v103
  %v269 = vpack.c.bf16 %v42, %v41
  %v270 = vpack.c.bf16 %v44, %v43
  %v271 = vpack.c.bf16 %v46, %v45
  %v272 = vpack.c.bf16 %v48, %v47
  %v273 = vpack.c.bf16 %v50, %v49
  %v274 = vpack.c.bf16 %v52, %v51
  %v275 = vpack.c.bf16 %v54, %v53
  %v276 = vpack.c.bf16 %v56, %v55
  %v277 = vpack.c.bf16 %v58, %v57
  %v278 = vpack.c.bf16 %v60, %v59
  %v279 = vpack.c.bf16 %v62, %v61
  %v280 = vpack.c.bf16 %v64, %v63
  %v281 = vpack.c.bf16 %v66, %v65
  %v282 = vpack.c.bf16 %v68, %v67
  %v283 = vpack.c.bf16 %v70, %v69
  %v284 = vpack.c.bf16 %v72, %v71
  %v285 = vpack.c.bf16 %v74, %v73
  %v286 = vpack.c.bf16 %v76, %v75
  %v287 = vpack.c.bf16 %v78, %v77
  %v288 = vpack.c.bf16 %v80, %v79
  %v289 = vpack.c.bf16 %v82, %v81
  %v290 = vpack.c.bf16 %v84, %v83
  %v291 = vpack.c.bf16 %v86, %v85
  %v292 = vpack.c.bf16 %v88, %v87
  %v293 = vpack.c.bf16 %v90, %v89
  %v294 = vpack.c.bf16 %v92, %v91
  %v295 = vpack.c.bf16 %v94, %v93
  %v296 = vpack.c.bf16 %v96, %v95
  %v297 = vpack.c.bf16 %v98, %v97
  %v298 = vpack.c.bf16 %v100, %v99
  %v299 = vpack.c.bf16 %v102, %v101
  %v300 = vrot.slane %v41, 1
  %v301 = vrot.slane %v42, 1
  %v302 = vrot.slane %v43, 1
  %v303 = vrot.slane %v44, 1
  %v304 = vrot.slane %v45, 1
  %v305 = vrot.slane %v46, 1
  %v306 = vrot.slane %v47, 1
  %v307 = vrot.slane %v48, 1
  %v308 = vrot.slane %v49, 1
  %v309 = vrot.slane %v50, 1
  %v310 = vrot.slane %v51, 1
  %v311 = vrot.slane %v52, 1
  %v312 = vrot.slane %v53, 1
  %v313 = vrot.slane %v54, 1
  %v314 = vrot.slane %v55, 1
  %v315 = vrot.slane %v56, 1
  %v316 = vrot.slane %v57, 1
  %v317 = vrot.slane %v58, 1
  %v318 = vrot.slane %v59, 1
  %v319 = vrot.slane %v60, 1
  %v320 = vrot.slane %v61, 1
  %v321 = vrot.slane %v62, 1
  %v322 = vrot.slane %v63, 1
  %v323 = vrot.slane %v64, 1
  %v324 = vrot.slane %v65, 1
  %v325 = vrot.slane %v66, 1
  %v326 = vrot.slane %v67, 1
  %v327 = vrot.slane %v68, 1
  %v328 = vrot.slane %v69, 1
  %v329 = vrot.slane %v70, 1
  %v330 = vrot.slane %v71, 1
  %v331 = vrot.slane %v72, 1
  %v332 = vrot.slane %v73, 1
  %v333 = vrot.slane %v74, 1
  %v334 = vrot.slane %v75, 1
  %v335 = vrot.slane %v76, 1
  %v336 = vrot.slane %v77, 1
  %v337 = vrot.slane %v78, 1
  %v338 = vrot.slane %v79, 1
  %v339 = vrot.slane %v80, 1
  %v340 = vrot.slane %v81, 1
  %v341 = vrot.slane %v82, 1
  %v342 = vrot.slane %v83, 1
  %v343 = vrot.slane %v84, 1
  %v344 = vrot.slane %v85, 1
  %v345 = vrot.slane %v86, 1
  %v346 = vrot.slane %v87, 1
  %v347 = vrot.slane %v88, 1
  %v348 = vrot.slane %v89, 1
  %v349 = vrot.slane %v90, 1
  %v350 = vrot.slane %v91, 1
  %v351 = vrot.slane %v92, 1
  %v352 = vrot.slane %v93, 1
  %v353 = vrot.slane %v94, 1
  %v354 = vrot.slane %v95, 1
  %v355 = vrot.slane %v96, 1
  %v356 = vrot.slane %v97, 1
  %v357 = vrot.slane %v98, 1
  %v358 = vrot.slane %v99, 1
  %v359 = vrot.slane %v100, 1
  %v360 = vrot.slane %v101, 1
  %v361 = vrot.slane %v102, 1
  %v362 = vrot.slane %v103, 1
  %v363 = vrot.slane %v104, 1
  %vm364 = vcmp.lt.s32.totalorder %v170, 7
  %v365 = vsel %vm364, %v362, %v363
  %v366 = vsel %vm364, %v361, %v362
  %v367 = vsel %vm364, %v360, %v361
  %v368 = vsel %vm364, %v359, %v360
  %v369 = vsel %vm364, %v358, %v359
  %v370 = vsel %vm364, %v357, %v358
  %v371 = vsel %vm364, %v356, %v357
  %v372 = vsel %vm364, %v355, %v356
  %v373 = vsel %vm364, %v354, %v355
  %v374 = vsel %vm364, %v353, %v354
  %v375 = vsel %vm364, %v352, %v353
  %v376 = vsel %vm364, %v351, %v352
  %v377 = vsel %vm364, %v350, %v351
  %v378 = vsel %vm364, %v349, %v350
  %v379 = vsel %vm364, %v348, %v349
  %v380 = vsel %vm364, %v347, %v348
  %v381 = vsel %vm364, %v346, %v347
  %v382 = vsel %vm364, %v345, %v346
  %v383 = vsel %vm364, %v344, %v345
  %v384 = vsel %vm364, %v343, %v344
  %v385 = vsel %vm364, %v342, %v343
  %v386 = vsel %vm364, %v341, %v342
  %v387 = vsel %vm364, %v340, %v341
  %v388 = vsel %vm364, %v339, %v340
  %v389 = vsel %vm364, %v338, %v339
  %v390 = vsel %vm364, %v337, %v338
  %v391 = vsel %vm364, %v336, %v337
  %v392 = vsel %vm364, %v335, %v336
  %v393 = vsel %vm364, %v334, %v335
  %v394 = vsel %vm364, %v333, %v334
  %v395 = vsel %vm364, %v332, %v333
  %v396 = vsel %vm364, %v331, %v332
  %v397 = vsel %vm364, %v330, %v331
  %v398 = vsel %vm364, %v329, %v330
  %v399 = vsel %vm364, %v328, %v329
  %v400 = vsel %vm364, %v327, %v328
  %v401 = vsel %vm364, %v326, %v327
  %v402 = vsel %vm364, %v325, %v326
  %v403 = vsel %vm364, %v324, %v325
  %v404 = vsel %vm364, %v323, %v324
  %v405 = vsel %vm364, %v322, %v323
  %v406 = vsel %vm364, %v321, %v322
  %v407 = vsel %vm364, %v320, %v321
  %v408 = vsel %vm364, %v319, %v320
  %v409 = vsel %vm364, %v318, %v319
  %v410 = vsel %vm364, %v317, %v318
  %v411 = vsel %vm364, %v316, %v317
  %v412 = vsel %vm364, %v315, %v316
  %v413 = vsel %vm364, %v314, %v315
  %v414 = vsel %vm364, %v313, %v314
  %v415 = vsel %vm364, %v312, %v313
  %v416 = vsel %vm364, %v311, %v312
  %v417 = vsel %vm364, %v310, %v311
  %v418 = vsel %vm364, %v309, %v310
  %v419 = vsel %vm364, %v308, %v309
  %v420 = vsel %vm364, %v307, %v308
  %v421 = vsel %vm364, %v306, %v307
  %v422 = vsel %vm364, %v305, %v306
  %v423 = vsel %vm364, %v304, %v305
  %v424 = vsel %vm364, %v303, %v304
  %v425 = vsel %vm364, %v302, %v303
  %v426 = vsel %vm364, %v301, %v302
  %v427 = vsel %vm364, %v300, %v301
  %v428 = vsel %vm364, %v363, %v300
  %v429 = vpack.c.bf16 %v428, %v365
  %v430 = vpack.c.bf16 %v426, %v427
  %v431 = vpack.c.bf16 %v424, %v425
  %v432 = vpack.c.bf16 %v422, %v423
  %v433 = vpack.c.bf16 %v420, %v421
  %v434 = vpack.c.bf16 %v418, %v419
  %v435 = vpack.c.bf16 %v416, %v417
  %v436 = vpack.c.bf16 %v414, %v415
  %v437 = vpack.c.bf16 %v412, %v413
  %v438 = vpack.c.bf16 %v410, %v411
  %v439 = vpack.c.bf16 %v408, %v409
  %v440 = vpack.c.bf16 %v406, %v407
  %v441 = vpack.c.bf16 %v404, %v405
  %v442 = vpack.c.bf16 %v402, %v403
  %v443 = vpack.c.bf16 %v400, %v401
  %v444 = vpack.c.bf16 %v398, %v399
  %v445 = vpack.c.bf16 %v396, %v397
  %v446 = vpack.c.bf16 %v394, %v395
  %v447 = vpack.c.bf16 %v392, %v393
  %v448 = vpack.c.bf16 %v390, %v391
  %v449 = vpack.c.bf16 %v388, %v389
  %v450 = vpack.c.bf16 %v386, %v387
  %v451 = vpack.c.bf16 %v384, %v385
  %v452 = vpack.c.bf16 %v382, %v383
  %v453 = vpack.c.bf16 %v380, %v381
  %v454 = vpack.c.bf16 %v378, %v379
  %v455 = vpack.c.bf16 %v376, %v377
  %v456 = vpack.c.bf16 %v374, %v375
  %v457 = vpack.c.bf16 %v372, %v373
  %v458 = vpack.c.bf16 %v370, %v371
  %v459 = vpack.c.bf16 %v368, %v369
  %v460 = vpack.c.bf16 %v366, %v367
  %493 = vrot.lane.b32.xlu0 %v268, 4
  %v494 = vpop.permute.xlu0 %493
  %495 = vrot.lane.b32.xlu0 %v269, 4
  %v496 = vpop.permute.xlu0 %495
  %497 = vrot.lane.b32.xlu0 %v270, 4
  %v498 = vpop.permute.xlu0 %497
  %499 = vrot.lane.b32.xlu0 %v271, 4
  %v500 = vpop.permute.xlu0 %499
  %501 = vrot.lane.b32.xlu0 %v272, 4
  %v502 = vpop.permute.xlu0 %501
  %503 = vrot.lane.b32.xlu0 %v273, 4
  %v504 = vpop.permute.xlu0 %503
  %505 = vrot.lane.b32.xlu0 %v274, 4
  %v506 = vpop.permute.xlu0 %505
  %507 = vrot.lane.b32.xlu0 %v275, 4
  %v508 = vpop.permute.xlu0 %507
  %509 = vrot.lane.b32.xlu0 %v276, 4
  %v510 = vpop.permute.xlu0 %509
  %511 = vrot.lane.b32.xlu0 %v277, 4
  %v512 = vpop.permute.xlu0 %511
  %513 = vrot.lane.b32.xlu0 %v278, 4
  %v514 = vpop.permute.xlu0 %513
  %515 = vrot.lane.b32.xlu0 %v279, 4
  %v516 = vpop.permute.xlu0 %515
  %517 = vrot.lane.b32.xlu0 %v280, 4
  %v518 = vpop.permute.xlu0 %517
  %519 = vrot.lane.b32.xlu0 %v281, 4
  %v520 = vpop.permute.xlu0 %519
  %521 = vrot.lane.b32.xlu0 %v282, 4
  %v522 = vpop.permute.xlu0 %521
  %523 = vrot.lane.b32.xlu0 %v283, 4
  %v524 = vpop.permute.xlu0 %523
  %525 = vrot.lane.b32.xlu0 %v284, 4
  %v526 = vpop.permute.xlu0 %525
  %527 = vrot.lane.b32.xlu0 %v285, 4
  %v528 = vpop.permute.xlu0 %527
  %529 = vrot.lane.b32.xlu0 %v286, 4
  %v530 = vpop.permute.xlu0 %529
  %531 = vrot.lane.b32.xlu0 %v287, 4
  %v532 = vpop.permute.xlu0 %531
  %533 = vrot.lane.b32.xlu0 %v288, 4
  %v534 = vpop.permute.xlu0 %533
  %535 = vrot.lane.b32.xlu0 %v289, 4
  %v536 = vpop.permute.xlu0 %535
  %537 = vrot.lane.b32.xlu0 %v290, 4
  %v538 = vpop.permute.xlu0 %537
  %539 = vrot.lane.b32.xlu0 %v291, 4
  %v540 = vpop.permute.xlu0 %539
  %541 = vrot.lane.b32.xlu0 %v292, 4
  %v542 = vpop.permute.xlu0 %541
  %543 = vrot.lane.b32.xlu0 %v293, 4
  %v544 = vpop.permute.xlu0 %543
  %545 = vrot.lane.b32.xlu0 %v294, 4
  %v546 = vpop.permute.xlu0 %545
  %547 = vrot.lane.b32.xlu0 %v295, 4
  %v548 = vpop.permute.xlu0 %547
  %549 = vrot.lane.b32.xlu0 %v296, 4
  %v550 = vpop.permute.xlu0 %549
  %551 = vrot.lane.b32.xlu0 %v297, 4
  %v552 = vpop.permute.xlu0 %551
  %553 = vrot.lane.b32.xlu0 %v298, 4
  %v554 = vpop.permute.xlu0 %553
  %555 = vrot.lane.b32.xlu0 %v299, 4
  %v556 = vpop.permute.xlu0 %555
  %589 = vrot.lane.b32.xlu0 %v429, 8
  %v590 = vpop.permute.xlu0 %589
  %591 = vrot.lane.b32.xlu0 %v430, 8
  %v592 = vpop.permute.xlu0 %591
  %593 = vrot.lane.b32.xlu0 %v431, 8
  %v594 = vpop.permute.xlu0 %593
  %595 = vrot.lane.b32.xlu0 %v432, 8
  %v596 = vpop.permute.xlu0 %595
  %597 = vrot.lane.b32.xlu0 %v433, 8
  %v598 = vpop.permute.xlu0 %597
  %599 = vrot.lane.b32.xlu0 %v434, 8
  %v600 = vpop.permute.xlu0 %599
  %601 = vrot.lane.b32.xlu0 %v435, 8
  %v602 = vpop.permute.xlu0 %601
  %603 = vrot.lane.b32.xlu0 %v436, 8
  %v604 = vpop.permute.xlu0 %603
  %605 = vrot.lane.b32.xlu0 %v437, 8
  %v606 = vpop.permute.xlu0 %605
  %607 = vrot.lane.b32.xlu0 %v438, 8
  %v608 = vpop.permute.xlu0 %607
  %609 = vrot.lane.b32.xlu0 %v439, 8
  %v610 = vpop.permute.xlu0 %609
  %611 = vrot.lane.b32.xlu0 %v440, 8
  %v612 = vpop.permute.xlu0 %611
  %613 = vrot.lane.b32.xlu0 %v441, 8
  %v614 = vpop.permute.xlu0 %613
  %615 = vrot.lane.b32.xlu0 %v442, 8
  %v616 = vpop.permute.xlu0 %615
  %617 = vrot.lane.b32.xlu0 %v443, 8
  %v618 = vpop.permute.xlu0 %617
  %619 = vrot.lane.b32.xlu0 %v444, 8
  %v620 = vpop.permute.xlu0 %619
  %621 = vrot.lane.b32.xlu0 %v445, 8
  %v622 = vpop.permute.xlu0 %621
  %623 = vrot.lane.b32.xlu0 %v446, 8
  %v624 = vpop.permute.xlu0 %623
  %625 = vrot.lane.b32.xlu0 %v447, 8
  %v626 = vpop.permute.xlu0 %625
  %627 = vrot.lane.b32.xlu0 %v448, 8
  %v628 = vpop.permute.xlu0 %627
  %629 = vrot.lane.b32.xlu0 %v449, 8
  %v630 = vpop.permute.xlu0 %629
  %631 = vrot.lane.b32.xlu0 %v450, 8
  %v632 = vpop.permute.xlu0 %631
  %633 = vrot.lane.b32.xlu0 %v451, 8
  %v634 = vpop.permute.xlu0 %633
  %635 = vrot.lane.b32.xlu0 %v452, 8
  %v636 = vpop.permute.xlu0 %635
  %637 = vrot.lane.b32.xlu0 %v453, 8
  %v638 = vpop.permute.xlu0 %637
  %639 = vrot.lane.b32.xlu0 %v454, 8
  %v640 = vpop.permute.xlu0 %639
  %641 = vrot.lane.b32.xlu0 %v455, 8
  %v642 = vpop.permute.xlu0 %641
  %643 = vrot.lane.b32.xlu0 %v456, 8
  %v644 = vpop.permute.xlu0 %643
  %645 = vrot.lane.b32.xlu0 %v457, 8
  %v646 = vpop.permute.xlu0 %645
  %647 = vrot.lane.b32.xlu0 %v458, 8
  %v648 = vpop.permute.xlu0 %647
  %649 = vrot.lane.b32.xlu0 %v459, 8
  %v650 = vpop.permute.xlu0 %649
  %651 = vrot.lane.b32.xlu0 %v460, 8
  %v652 = vpop.permute.xlu0 %651
  %685 = vrot.lane.b32.xlu0 %v237, 12
  %v686 = vpop.permute.xlu0 %685
  %687 = vrot.lane.b32.xlu0 %v238, 12
  %v688 = vpop.permute.xlu0 %687
  %689 = vrot.lane.b32.xlu0 %v239, 12
  %v690 = vpop.permute.xlu0 %689
  %691 = vrot.lane.b32.xlu0 %v240, 12
  %v692 = vpop.permute.xlu0 %691
  %693 = vrot.lane.b32.xlu0 %v241, 12
  %v694 = vpop.permute.xlu0 %693
  %695 = vrot.lane.b32.xlu0 %v242, 12
  %v696 = vpop.permute.xlu0 %695
  %697 = vrot.lane.b32.xlu0 %v243, 12
  %v698 = vpop.permute.xlu0 %697
  %699 = vrot.lane.b32.xlu0 %v244, 12
  %v700 = vpop.permute.xlu0 %699
  %701 = vrot.lane.b32.xlu0 %v245, 12
  %v702 = vpop.permute.xlu0 %701
  %703 = vrot.lane.b32.xlu0 %v246, 12
  %v704 = vpop.permute.xlu0 %703
  %705 = vrot.lane.b32.xlu0 %v247, 12
  %v706 = vpop.permute.xlu0 %705
  %707 = vrot.lane.b32.xlu0 %v248, 12
  %v708 = vpop.permute.xlu0 %707
  %709 = vrot.lane.b32.xlu0 %v249, 12
  %v710 = vpop.permute.xlu0 %709
  %711 = vrot.lane.b32.xlu0 %v250, 12
  %v712 = vpop.permute.xlu0 %711
  %713 = vrot.lane.b32.xlu0 %v251, 12
  %v714 = vpop.permute.xlu0 %713
  %715 = vrot.lane.b32.xlu0 %v252, 12
  %v716 = vpop.permute.xlu0 %715
  %717 = vrot.lane.b32.xlu0 %v253, 12
  %v718 = vpop.permute.xlu0 %717
  %719 = vrot.lane.b32.xlu0 %v254, 12
  %v720 = vpop.permute.xlu0 %719
  %721 = vrot.lane.b32.xlu0 %v255, 12
  %v722 = vpop.permute.xlu0 %721
  %723 = vrot.lane.b32.xlu0 %v256, 12
  %v724 = vpop.permute.xlu0 %723
  %725 = vrot.lane.b32.xlu0 %v257, 12
  %v726 = vpop.permute.xlu0 %725
  %727 = vrot.lane.b32.xlu0 %v258, 12
  %v728 = vpop.permute.xlu0 %727
  %729 = vrot.lane.b32.xlu0 %v259, 12
  %v730 = vpop.permute.xlu0 %729
  %731 = vrot.lane.b32.xlu0 %v260, 12
  %v732 = vpop.permute.xlu0 %731
  %733 = vrot.lane.b32.xlu0 %v261, 12
  %v734 = vpop.permute.xlu0 %733
  %735 = vrot.lane.b32.xlu0 %v262, 12
  %v736 = vpop.permute.xlu0 %735
  %737 = vrot.lane.b32.xlu0 %v263, 12
  %v738 = vpop.permute.xlu0 %737
  %739 = vrot.lane.b32.xlu0 %v264, 12
  %v740 = vpop.permute.xlu0 %739
  %741 = vrot.lane.b32.xlu0 %v265, 12
  %v742 = vpop.permute.xlu0 %741
  %743 = vrot.lane.b32.xlu0 %v266, 12
  %v744 = vpop.permute.xlu0 %743
  %745 = vrot.lane.b32.xlu0 %v267, 12
  %v746 = vpop.permute.xlu0 %745
  %747 = vrot.lane.b32.xlu0 %v236, 12
  %v748 = vpop.permute.xlu0 %747
  %749 = vrot.lane.b32.xlu0 %v269, 16
  %v750 = vpop.permute.xlu0 %749
  %751 = vrot.lane.b32.xlu0 %v270, 16
  %v752 = vpop.permute.xlu0 %751
  %753 = vrot.lane.b32.xlu0 %v271, 16
  %v754 = vpop.permute.xlu0 %753
  %755 = vrot.lane.b32.xlu0 %v272, 16
  %v756 = vpop.permute.xlu0 %755
  %757 = vrot.lane.b32.xlu0 %v273, 16
  %v758 = vpop.permute.xlu0 %757
  %759 = vrot.lane.b32.xlu0 %v274, 16
  %v760 = vpop.permute.xlu0 %759
  %761 = vrot.lane.b32.xlu0 %v275, 16
  %v762 = vpop.permute.xlu0 %761
  %763 = vrot.lane.b32.xlu0 %v276, 16
  %v764 = vpop.permute.xlu0 %763
  %765 = vrot.lane.b32.xlu0 %v277, 16
  %v766 = vpop.permute.xlu0 %765
  %767 = vrot.lane.b32.xlu0 %v278, 16
  %v768 = vpop.permute.xlu0 %767
  %769 = vrot.lane.b32.xlu0 %v279, 16
  %v770 = vpop.permute.xlu0 %769
  %771 = vrot.lane.b32.xlu0 %v280, 16
  %v772 = vpop.permute.xlu0 %771
  %773 = vrot.lane.b32.xlu0 %v281, 16
  %v774 = vpop.permute.xlu0 %773
  %775 = vrot.lane.b32.xlu0 %v282, 16
  %v776 = vpop.permute.xlu0 %775
  %777 = vrot.lane.b32.xlu0 %v283, 16
  %v778 = vpop.permute.xlu0 %777
  %779 = vrot.lane.b32.xlu0 %v284, 16
  %v780 = vpop.permute.xlu0 %779
  %781 = vrot.lane.b32.xlu0 %v285, 16
  %v782 = vpop.permute.xlu0 %781
  %783 = vrot.lane.b32.xlu0 %v286, 16
  %v784 = vpop.permute.xlu0 %783
  %785 = vrot.lane.b32.xlu0 %v287, 16
  %v786 = vpop.permute.xlu0 %785
  %787 = vrot.lane.b32.xlu0 %v288, 16
  %v788 = vpop.permute.xlu0 %787
  %789 = vrot.lane.b32.xlu0 %v289, 16
  %v790 = vpop.permute.xlu0 %789
  %791 = vrot.lane.b32.xlu0 %v290, 16
  %v792 = vpop.permute.xlu0 %791
  %793 = vrot.lane.b32.xlu0 %v291, 16
  %v794 = vpop.permute.xlu0 %793
  %795 = vrot.lane.b32.xlu0 %v292, 16
  %v796 = vpop.permute.xlu0 %795
  %797 = vrot.lane.b32.xlu0 %v293, 16
  %v798 = vpop.permute.xlu0 %797
  %799 = vrot.lane.b32.xlu0 %v294, 16
  %v800 = vpop.permute.xlu0 %799
  %801 = vrot.lane.b32.xlu0 %v295, 16
  %v802 = vpop.permute.xlu0 %801
  %803 = vrot.lane.b32.xlu0 %v296, 16
  %v804 = vpop.permute.xlu0 %803
  %805 = vrot.lane.b32.xlu0 %v297, 16
  %v806 = vpop.permute.xlu0 %805
  %807 = vrot.lane.b32.xlu0 %v298, 16
  %v808 = vpop.permute.xlu0 %807
  %809 = vrot.lane.b32.xlu0 %v299, 16
  %v810 = vpop.permute.xlu0 %809
  %811 = vrot.lane.b32.xlu0 %v268, 16
  %v812 = vpop.permute.xlu0 %811
  %813 = vrot.lane.b32.xlu0 %v430, 20
  %v814 = vpop.permute.xlu0 %813
  %815 = vrot.lane.b32.xlu0 %v431, 20
  %v816 = vpop.permute.xlu0 %815
  %817 = vrot.lane.b32.xlu0 %v432, 20
  %v818 = vpop.permute.xlu0 %817
  %819 = vrot.lane.b32.xlu0 %v433, 20
  %v820 = vpop.permute.xlu0 %819
  %821 = vrot.lane.b32.xlu0 %v434, 20
  %v822 = vpop.permute.xlu0 %821
  %823 = vrot.lane.b32.xlu0 %v435, 20
  %v824 = vpop.permute.xlu0 %823
  %825 = vrot.lane.b32.xlu0 %v436, 20
  %v826 = vpop.permute.xlu0 %825
  %827 = vrot.lane.b32.xlu0 %v437, 20
  %v828 = vpop.permute.xlu0 %827
  %829 = vrot.lane.b32.xlu0 %v438, 20
  %v830 = vpop.permute.xlu0 %829
  %831 = vrot.lane.b32.xlu0 %v439, 20
  %v832 = vpop.permute.xlu0 %831
  %833 = vrot.lane.b32.xlu0 %v440, 20
  %v834 = vpop.permute.xlu0 %833
  %835 = vrot.lane.b32.xlu0 %v441, 20
  %v836 = vpop.permute.xlu0 %835
  %837 = vrot.lane.b32.xlu0 %v442, 20
  %v838 = vpop.permute.xlu0 %837
  %839 = vrot.lane.b32.xlu0 %v443, 20
  %v840 = vpop.permute.xlu0 %839
  %841 = vrot.lane.b32.xlu0 %v444, 20
  %v842 = vpop.permute.xlu0 %841
  %843 = vrot.lane.b32.xlu0 %v445, 20
  %v844 = vpop.permute.xlu0 %843
  %845 = vrot.lane.b32.xlu0 %v446, 20
  %v846 = vpop.permute.xlu0 %845
  %847 = vrot.lane.b32.xlu0 %v447, 20
  %v848 = vpop.permute.xlu0 %847
  %849 = vrot.lane.b32.xlu0 %v448, 20
  %v850 = vpop.permute.xlu0 %849
  %851 = vrot.lane.b32.xlu0 %v449, 20
  %v852 = vpop.permute.xlu0 %851
  %853 = vrot.lane.b32.xlu0 %v450, 20
  %v854 = vpop.permute.xlu0 %853
  %855 = vrot.lane.b32.xlu0 %v451, 20
  %v856 = vpop.permute.xlu0 %855
  %857 = vrot.lane.b32.xlu0 %v452, 20
  %v858 = vpop.permute.xlu0 %857
  %859 = vrot.lane.b32.xlu0 %v453, 20
  %v860 = vpop.permute.xlu0 %859
  %861 = vrot.lane.b32.xlu0 %v454, 20
  %v862 = vpop.permute.xlu0 %861
  %863 = vrot.lane.b32.xlu0 %v455, 20
  %v864 = vpop.permute.xlu0 %863
  %865 = vrot.lane.b32.xlu0 %v456, 20
  %v866 = vpop.permute.xlu0 %865
  %867 = vrot.lane.b32.xlu0 %v457, 20
  %v868 = vpop.permute.xlu0 %867
  %869 = vrot.lane.b32.xlu0 %v458, 20
  %v870 = vpop.permute.xlu0 %869
  %871 = vrot.lane.b32.xlu0 %v459, 20
  %v872 = vpop.permute.xlu0 %871
  %873 = vrot.lane.b32.xlu0 %v460, 20
  %v874 = vpop.permute.xlu0 %873
  %875 = vrot.lane.b32.xlu0 %v429, 20
  %v876 = vpop.permute.xlu0 %875
  %877 = vrot.lane.b32.xlu0 %v238, 24
  %v878 = vpop.permute.xlu0 %877
  %879 = vrot.lane.b32.xlu0 %v239, 24
  %v880 = vpop.permute.xlu0 %879
  %881 = vrot.lane.b32.xlu0 %v240, 24
  %v882 = vpop.permute.xlu0 %881
  %883 = vrot.lane.b32.xlu0 %v241, 24
  %v884 = vpop.permute.xlu0 %883
  %885 = vrot.lane.b32.xlu0 %v242, 24
  %v886 = vpop.permute.xlu0 %885
  %887 = vrot.lane.b32.xlu0 %v243, 24
  %v888 = vpop.permute.xlu0 %887
  %889 = vrot.lane.b32.xlu0 %v244, 24
  %v890 = vpop.permute.xlu0 %889
  %891 = vrot.lane.b32.xlu0 %v245, 24
  %v892 = vpop.permute.xlu0 %891
  %893 = vrot.lane.b32.xlu0 %v246, 24
  %v894 = vpop.permute.xlu0 %893
  %895 = vrot.lane.b32.xlu0 %v247, 24
  %v896 = vpop.permute.xlu0 %895
  %897 = vrot.lane.b32.xlu0 %v248, 24
  %v898 = vpop.permute.xlu0 %897
  %899 = vrot.lane.b32.xlu0 %v249, 24
  %v900 = vpop.permute.xlu0 %899
  %901 = vrot.lane.b32.xlu0 %v250, 24
  %v902 = vpop.permute.xlu0 %901
  %903 = vrot.lane.b32.xlu0 %v251, 24
  %v904 = vpop.permute.xlu0 %903
  %905 = vrot.lane.b32.xlu0 %v252, 24
  %v906 = vpop.permute.xlu0 %905
  %907 = vrot.lane.b32.xlu0 %v253, 24
  %v908 = vpop.permute.xlu0 %907
  %909 = vrot.lane.b32.xlu0 %v254, 24
  %v910 = vpop.permute.xlu0 %909
  %911 = vrot.lane.b32.xlu0 %v255, 24
  %v912 = vpop.permute.xlu0 %911
  %913 = vrot.lane.b32.xlu0 %v256, 24
  %v914 = vpop.permute.xlu0 %913
  %915 = vrot.lane.b32.xlu0 %v257, 24
  %v916 = vpop.permute.xlu0 %915
  %917 = vrot.lane.b32.xlu0 %v258, 24
  %v918 = vpop.permute.xlu0 %917
  %919 = vrot.lane.b32.xlu0 %v259, 24
  %v920 = vpop.permute.xlu0 %919
  %921 = vrot.lane.b32.xlu0 %v260, 24
  %v922 = vpop.permute.xlu0 %921
  %923 = vrot.lane.b32.xlu0 %v261, 24
  %v924 = vpop.permute.xlu0 %923
  %925 = vrot.lane.b32.xlu0 %v262, 24
  %v926 = vpop.permute.xlu0 %925
  %927 = vrot.lane.b32.xlu0 %v263, 24
  %v928 = vpop.permute.xlu0 %927
  %929 = vrot.lane.b32.xlu0 %v264, 24
  %v930 = vpop.permute.xlu0 %929
  %931 = vrot.lane.b32.xlu0 %v265, 24
  %v932 = vpop.permute.xlu0 %931
  %933 = vrot.lane.b32.xlu0 %v266, 24
  %v934 = vpop.permute.xlu0 %933
  %935 = vrot.lane.b32.xlu0 %v267, 24
  %v936 = vpop.permute.xlu0 %935
  %937 = vrot.lane.b32.xlu0 %v236, 24
  %v938 = vpop.permute.xlu0 %937
  %939 = vrot.lane.b32.xlu0 %v237, 24
  %v940 = vpop.permute.xlu0 %939
  %941 = vrot.lane.b32.xlu0 %v270, 28
  %v942 = vpop.permute.xlu0 %941
  %943 = vrot.lane.b32.xlu0 %v271, 28
  %v944 = vpop.permute.xlu0 %943
  %945 = vrot.lane.b32.xlu0 %v272, 28
  %v946 = vpop.permute.xlu0 %945
  %947 = vrot.lane.b32.xlu0 %v273, 28
  %v948 = vpop.permute.xlu0 %947
  %949 = vrot.lane.b32.xlu0 %v274, 28
  %v950 = vpop.permute.xlu0 %949
  %951 = vrot.lane.b32.xlu0 %v275, 28
  %v952 = vpop.permute.xlu0 %951
  %953 = vrot.lane.b32.xlu0 %v276, 28
  %v954 = vpop.permute.xlu0 %953
  %955 = vrot.lane.b32.xlu0 %v277, 28
  %v956 = vpop.permute.xlu0 %955
  %957 = vrot.lane.b32.xlu0 %v278, 28
  %v958 = vpop.permute.xlu0 %957
  %959 = vrot.lane.b32.xlu0 %v279, 28
  %v960 = vpop.permute.xlu0 %959
  %961 = vrot.lane.b32.xlu0 %v280, 28
  %v962 = vpop.permute.xlu0 %961
  %963 = vrot.lane.b32.xlu0 %v281, 28
  %v964 = vpop.permute.xlu0 %963
  %965 = vrot.lane.b32.xlu0 %v282, 28
  %v966 = vpop.permute.xlu0 %965
  %967 = vrot.lane.b32.xlu0 %v283, 28
  %v968 = vpop.permute.xlu0 %967
  %969 = vrot.lane.b32.xlu0 %v284, 28
  %v970 = vpop.permute.xlu0 %969
  %971 = vrot.lane.b32.xlu0 %v285, 28
  %v972 = vpop.permute.xlu0 %971
  %973 = vrot.lane.b32.xlu0 %v286, 28
  %v974 = vpop.permute.xlu0 %973
  %975 = vrot.lane.b32.xlu0 %v287, 28
  %v976 = vpop.permute.xlu0 %975
  %977 = vrot.lane.b32.xlu0 %v288, 28
  %v978 = vpop.permute.xlu0 %977
  %979 = vrot.lane.b32.xlu0 %v289, 28
  %v980 = vpop.permute.xlu0 %979
  %981 = vrot.lane.b32.xlu0 %v290, 28
  %v982 = vpop.permute.xlu0 %981
  %983 = vrot.lane.b32.xlu0 %v291, 28
  %v984 = vpop.permute.xlu0 %983
  %985 = vrot.lane.b32.xlu0 %v292, 28
  %v986 = vpop.permute.xlu0 %985
  %987 = vrot.lane.b32.xlu0 %v293, 28
  %v988 = vpop.permute.xlu0 %987
  %989 = vrot.lane.b32.xlu0 %v294, 28
  %v990 = vpop.permute.xlu0 %989
  %991 = vrot.lane.b32.xlu0 %v295, 28
  %v992 = vpop.permute.xlu0 %991
  %993 = vrot.lane.b32.xlu0 %v296, 28
  %v994 = vpop.permute.xlu0 %993
  %995 = vrot.lane.b32.xlu0 %v297, 28
  %v996 = vpop.permute.xlu0 %995
  %997 = vrot.lane.b32.xlu0 %v298, 28
  %v998 = vpop.permute.xlu0 %997
  %999 = vrot.lane.b32.xlu0 %v299, 28
  %v1000 = vpop.permute.xlu0 %999
  %1001 = vrot.lane.b32.xlu0 %v268, 28
  %v1002 = vpop.permute.xlu0 %1001
  %1003 = vrot.lane.b32.xlu0 %v269, 28
  %v1004 = vpop.permute.xlu0 %1003
  %1005 = vrot.lane.b32.xlu0 %v431, 32
  %v1006 = vpop.permute.xlu0 %1005
  %1007 = vrot.lane.b32.xlu0 %v432, 32
  %v1008 = vpop.permute.xlu0 %1007
  %1009 = vrot.lane.b32.xlu0 %v433, 32
  %v1010 = vpop.permute.xlu0 %1009
  %1011 = vrot.lane.b32.xlu0 %v434, 32
  %v1012 = vpop.permute.xlu0 %1011
  %1013 = vrot.lane.b32.xlu0 %v435, 32
  %v1014 = vpop.permute.xlu0 %1013
  %1015 = vrot.lane.b32.xlu0 %v436, 32
  %v1016 = vpop.permute.xlu0 %1015
  %1017 = vrot.lane.b32.xlu0 %v437, 32
  %v1018 = vpop.permute.xlu0 %1017
  %1019 = vrot.lane.b32.xlu0 %v438, 32
  %v1020 = vpop.permute.xlu0 %1019
  %1021 = vrot.lane.b32.xlu0 %v439, 32
  %v1022 = vpop.permute.xlu0 %1021
  %1023 = vrot.lane.b32.xlu0 %v440, 32
  %v1024 = vpop.permute.xlu0 %1023
  %1025 = vrot.lane.b32.xlu0 %v441, 32
  %v1026 = vpop.permute.xlu0 %1025
  %1027 = vrot.lane.b32.xlu0 %v442, 32
  %v1028 = vpop.permute.xlu0 %1027
  %1029 = vrot.lane.b32.xlu0 %v443, 32
  %v1030 = vpop.permute.xlu0 %1029
  %1031 = vrot.lane.b32.xlu0 %v444, 32
  %v1032 = vpop.permute.xlu0 %1031
  %1033 = vrot.lane.b32.xlu0 %v445, 32
  %v1034 = vpop.permute.xlu0 %1033
  %1035 = vrot.lane.b32.xlu0 %v446, 32
  %v1036 = vpop.permute.xlu0 %1035
  %1037 = vrot.lane.b32.xlu0 %v447, 32
  %v1038 = vpop.permute.xlu0 %1037
  %1039 = vrot.lane.b32.xlu0 %v448, 32
  %v1040 = vpop.permute.xlu0 %1039
  %1041 = vrot.lane.b32.xlu0 %v449, 32
  %v1042 = vpop.permute.xlu0 %1041
  %1043 = vrot.lane.b32.xlu0 %v450, 32
  %v1044 = vpop.permute.xlu0 %1043
  %1045 = vrot.lane.b32.xlu0 %v451, 32
  %v1046 = vpop.permute.xlu0 %1045
  %1047 = vrot.lane.b32.xlu0 %v452, 32
  %v1048 = vpop.permute.xlu0 %1047
  %1049 = vrot.lane.b32.xlu0 %v453, 32
  %v1050 = vpop.permute.xlu0 %1049
  %1051 = vrot.lane.b32.xlu0 %v454, 32
  %v1052 = vpop.permute.xlu0 %1051
  %1053 = vrot.lane.b32.xlu0 %v455, 32
  %v1054 = vpop.permute.xlu0 %1053
  %1055 = vrot.lane.b32.xlu0 %v456, 32
  %v1056 = vpop.permute.xlu0 %1055
  %1057 = vrot.lane.b32.xlu0 %v457, 32
  %v1058 = vpop.permute.xlu0 %1057
  %1059 = vrot.lane.b32.xlu0 %v458, 32
  %v1060 = vpop.permute.xlu0 %1059
  %1061 = vrot.lane.b32.xlu0 %v459, 32
  %v1062 = vpop.permute.xlu0 %1061
  %1063 = vrot.lane.b32.xlu0 %v460, 32
  %v1064 = vpop.permute.xlu0 %1063
  %1065 = vrot.lane.b32.xlu0 %v429, 32
  %v1066 = vpop.permute.xlu0 %1065
  %1067 = vrot.lane.b32.xlu0 %v430, 32
  %v1068 = vpop.permute.xlu0 %1067
  %vm1069 = vcmask 31744
  %v1072 = vsel %vm1069, %v236, %v494
  %v1075 = vsel %vm1069, %v237, %v496
  %v1078 = vsel %vm1069, %v238, %v498
  %v1081 = vsel %vm1069, %v239, %v500
  %v1084 = vsel %vm1069, %v240, %v502
  %v1087 = vsel %vm1069, %v241, %v504
  %v1090 = vsel %vm1069, %v242, %v506
  %v1093 = vsel %vm1069, %v243, %v508
  %v1096 = vsel %vm1069, %v244, %v510
  %v1099 = vsel %vm1069, %v245, %v512
  %v1102 = vsel %vm1069, %v246, %v514
  %v1105 = vsel %vm1069, %v247, %v516
  %v1108 = vsel %vm1069, %v248, %v518
  %v1111 = vsel %vm1069, %v249, %v520
  %v1114 = vsel %vm1069, %v250, %v522
  %v1117 = vsel %vm1069, %v251, %v524
  %v1120 = vsel %vm1069, %v252, %v526
  %v1123 = vsel %vm1069, %v253, %v528
  %v1126 = vsel %vm1069, %v254, %v530
  %v1129 = vsel %vm1069, %v255, %v532
  %v1132 = vsel %vm1069, %v256, %v534
  %v1135 = vsel %vm1069, %v257, %v536
  %v1138 = vsel %vm1069, %v258, %v538
  %v1141 = vsel %vm1069, %v259, %v540
  %v1144 = vsel %vm1069, %v260, %v542
  %v1147 = vsel %vm1069, %v261, %v544
  %v1150 = vsel %vm1069, %v262, %v546
  %v1153 = vsel %vm1069, %v263, %v548
  %v1156 = vsel %vm1069, %v264, %v550
  %v1159 = vsel %vm1069, %v265, %v552
  %v1162 = vsel %vm1069, %v266, %v554
  %v1165 = vsel %vm1069, %v267, %v556
  %vm1166 = vcmask 64512
  %v1168 = vsel %vm1166, %v1072, %v590
  %v1170 = vsel %vm1166, %v1075, %v592
  %v1172 = vsel %vm1166, %v1078, %v594
  %v1174 = vsel %vm1166, %v1081, %v596
  %v1176 = vsel %vm1166, %v1084, %v598
  %v1178 = vsel %vm1166, %v1087, %v600
  %v1180 = vsel %vm1166, %v1090, %v602
  %v1182 = vsel %vm1166, %v1093, %v604
  %v1184 = vsel %vm1166, %v1096, %v606
  %v1186 = vsel %vm1166, %v1099, %v608
  %v1188 = vsel %vm1166, %v1102, %v610
  %v1190 = vsel %vm1166, %v1105, %v612
  %v1192 = vsel %vm1166, %v1108, %v614
  %v1194 = vsel %vm1166, %v1111, %v616
  %v1196 = vsel %vm1166, %v1114, %v618
  %v1198 = vsel %vm1166, %v1117, %v620
  %v1200 = vsel %vm1166, %v1120, %v622
  %v1202 = vsel %vm1166, %v1123, %v624
  %v1204 = vsel %vm1166, %v1126, %v626
  %v1206 = vsel %vm1166, %v1129, %v628
  %v1208 = vsel %vm1166, %v1132, %v630
  %v1210 = vsel %vm1166, %v1135, %v632
  %v1212 = vsel %vm1166, %v1138, %v634
  %v1214 = vsel %vm1166, %v1141, %v636
  %v1216 = vsel %vm1166, %v1144, %v638
  %v1218 = vsel %vm1166, %v1147, %v640
  %v1220 = vsel %vm1166, %v1150, %v642
  %v1222 = vsel %vm1166, %v1153, %v644
  %v1224 = vsel %vm1166, %v1156, %v646
  %v1226 = vsel %vm1166, %v1159, %v648
  %v1228 = vsel %vm1166, %v1162, %v650
  %v1230 = vsel %vm1166, %v1165, %v652
  %vm1231 = vcmask 97280
  %v1233 = vsel %vm1231, %v1168, %v686
  %v1235 = vsel %vm1231, %v1170, %v688
  %v1237 = vsel %vm1231, %v1172, %v690
  %v1239 = vsel %vm1231, %v1174, %v692
  %v1241 = vsel %vm1231, %v1176, %v694
  %v1243 = vsel %vm1231, %v1178, %v696
  %v1245 = vsel %vm1231, %v1180, %v698
  %v1247 = vsel %vm1231, %v1182, %v700
  %v1249 = vsel %vm1231, %v1184, %v702
  %v1251 = vsel %vm1231, %v1186, %v704
  %v1253 = vsel %vm1231, %v1188, %v706
  %v1255 = vsel %vm1231, %v1190, %v708
  %v1257 = vsel %vm1231, %v1192, %v710
  %v1259 = vsel %vm1231, %v1194, %v712
  %v1261 = vsel %vm1231, %v1196, %v714
  %v1263 = vsel %vm1231, %v1198, %v716
  %v1265 = vsel %vm1231, %v1200, %v718
  %v1267 = vsel %vm1231, %v1202, %v720
  %v1269 = vsel %vm1231, %v1204, %v722
  %v1271 = vsel %vm1231, %v1206, %v724
  %v1273 = vsel %vm1231, %v1208, %v726
  %v1275 = vsel %vm1231, %v1210, %v728
  %v1277 = vsel %vm1231, %v1212, %v730
  %v1279 = vsel %vm1231, %v1214, %v732
  %v1281 = vsel %vm1231, %v1216, %v734
  %v1283 = vsel %vm1231, %v1218, %v736
  %v1285 = vsel %vm1231, %v1220, %v738
  %v1287 = vsel %vm1231, %v1222, %v740
  %v1289 = vsel %vm1231, %v1224, %v742
  %v1291 = vsel %vm1231, %v1226, %v744
  %v1293 = vsel %vm1231, %v1228, %v746
  %v1295 = vsel %vm1231, %v1230, %v748
  %vm1296 = vcmask 130048
  %v1298 = vsel %vm1296, %v1233, %v750
  %v1300 = vsel %vm1296, %v1235, %v752
  %v1302 = vsel %vm1296, %v1237, %v754
  %v1304 = vsel %vm1296, %v1239, %v756
  %v1306 = vsel %vm1296, %v1241, %v758
  %v1308 = vsel %vm1296, %v1243, %v760
  %v1310 = vsel %vm1296, %v1245, %v762
  %v1312 = vsel %vm1296, %v1247, %v764
  %v1314 = vsel %vm1296, %v1249, %v766
  %v1316 = vsel %vm1296, %v1251, %v768
  %v1318 = vsel %vm1296, %v1253, %v770
  %v1320 = vsel %vm1296, %v1255, %v772
  %v1322 = vsel %vm1296, %v1257, %v774
  %v1324 = vsel %vm1296, %v1259, %v776
  %v1326 = vsel %vm1296, %v1261, %v778
  %v1328 = vsel %vm1296, %v1263, %v780
  %v1330 = vsel %vm1296, %v1265, %v782
  %v1332 = vsel %vm1296, %v1267, %v784
  %v1334 = vsel %vm1296, %v1269, %v786
  %v1336 = vsel %vm1296, %v1271, %v788
  %v1338 = vsel %vm1296, %v1273, %v790
  %v1340 = vsel %vm1296, %v1275, %v792
  %v1342 = vsel %vm1296, %v1277, %v794
  %v1344 = vsel %vm1296, %v1279, %v796
  %v1346 = vsel %vm1296, %v1281, %v798
  %v1348 = vsel %vm1296, %v1283, %v800
  %v1350 = vsel %vm1296, %v1285, %v802
  %v1352 = vsel %vm1296, %v1287, %v804
  %v1354 = vsel %vm1296, %v1289, %v806
  %v1356 = vsel %vm1296, %v1291, %v808
  %v1358 = vsel %vm1296, %v1293, %v810
  %v1360 = vsel %vm1296, %v1295, %v812
  %vm1361 = vcmask 162816
  %v1363 = vsel %vm1361, %v1298, %v814
  %v1365 = vsel %vm1361, %v1300, %v816
  %v1367 = vsel %vm1361, %v1302, %v818
  %v1369 = vsel %vm1361, %v1304, %v820
  %v1371 = vsel %vm1361, %v1306, %v822
  %v1373 = vsel %vm1361, %v1308, %v824
  %v1375 = vsel %vm1361, %v1310, %v826
  %v1377 = vsel %vm1361, %v1312, %v828
  %v1379 = vsel %vm1361, %v1314, %v830
  %v1381 = vsel %vm1361, %v1316, %v832
  %v1383 = vsel %vm1361, %v1318, %v834
  %v1385 = vsel %vm1361, %v1320, %v836
  %v1387 = vsel %vm1361, %v1322, %v838
  %v1389 = vsel %vm1361, %v1324, %v840
  %v1391 = vsel %vm1361, %v1326, %v842
  %v1393 = vsel %vm1361, %v1328, %v844
  %v1395 = vsel %vm1361, %v1330, %v846
  %v1397 = vsel %vm1361, %v1332, %v848
  %v1399 = vsel %vm1361, %v1334, %v850
  %v1401 = vsel %vm1361, %v1336, %v852
  %v1403 = vsel %vm1361, %v1338, %v854
  %v1405 = vsel %vm1361, %v1340, %v856
  %v1407 = vsel %vm1361, %v1342, %v858
  %v1409 = vsel %vm1361, %v1344, %v860
  %v1411 = vsel %vm1361, %v1346, %v862
  %v1413 = vsel %vm1361, %v1348, %v864
  %v1415 = vsel %vm1361, %v1350, %v866
  %v1417 = vsel %vm1361, %v1352, %v868
  %v1419 = vsel %vm1361, %v1354, %v870
  %v1421 = vsel %vm1361, %v1356, %v872
  %v1423 = vsel %vm1361, %v1358, %v874
  %v1425 = vsel %vm1361, %v1360, %v876
  %vm1426 = vcmask 195584
  %v1428 = vsel %vm1426, %v1363, %v878
  %v1430 = vsel %vm1426, %v1365, %v880
  %v1432 = vsel %vm1426, %v1367, %v882
  %v1434 = vsel %vm1426, %v1369, %v884
  %v1436 = vsel %vm1426, %v1371, %v886
  %v1438 = vsel %vm1426, %v1373, %v888
  %v1440 = vsel %vm1426, %v1375, %v890
  %v1442 = vsel %vm1426, %v1377, %v892
  %v1444 = vsel %vm1426, %v1379, %v894
  %v1446 = vsel %vm1426, %v1381, %v896
  %v1448 = vsel %vm1426, %v1383, %v898
  %v1450 = vsel %vm1426, %v1385, %v900
  %v1452 = vsel %vm1426, %v1387, %v902
  %v1454 = vsel %vm1426, %v1389, %v904
  %v1456 = vsel %vm1426, %v1391, %v906
  %v1458 = vsel %vm1426, %v1393, %v908
  %v1460 = vsel %vm1426, %v1395, %v910
  %v1462 = vsel %vm1426, %v1397, %v912
  %v1464 = vsel %vm1426, %v1399, %v914
  %v1466 = vsel %vm1426, %v1401, %v916
  %v1468 = vsel %vm1426, %v1403, %v918
  %v1470 = vsel %vm1426, %v1405, %v920
  %v1472 = vsel %vm1426, %v1407, %v922
  %v1474 = vsel %vm1426, %v1409, %v924
  %v1476 = vsel %vm1426, %v1411, %v926
  %v1478 = vsel %vm1426, %v1413, %v928
  %v1480 = vsel %vm1426, %v1415, %v930
  %v1482 = vsel %vm1426, %v1417, %v932
  %v1484 = vsel %vm1426, %v1419, %v934
  %v1486 = vsel %vm1426, %v1421, %v936
  %v1488 = vsel %vm1426, %v1423, %v938
  %v1490 = vsel %vm1426, %v1425, %v940
  %vm1491 = vcmask 228352
  %v1493 = vsel %vm1491, %v1428, %v942
  %v1495 = vsel %vm1491, %v1430, %v944
  %v1497 = vsel %vm1491, %v1432, %v946
  %v1499 = vsel %vm1491, %v1434, %v948
  %v1501 = vsel %vm1491, %v1436, %v950
  %v1503 = vsel %vm1491, %v1438, %v952
  %v1505 = vsel %vm1491, %v1440, %v954
  %v1507 = vsel %vm1491, %v1442, %v956
  %v1509 = vsel %vm1491, %v1444, %v958
  %v1511 = vsel %vm1491, %v1446, %v960
  %v1513 = vsel %vm1491, %v1448, %v962
  %v1515 = vsel %vm1491, %v1450, %v964
  %v1517 = vsel %vm1491, %v1452, %v966
  %v1519 = vsel %vm1491, %v1454, %v968
  %v1521 = vsel %vm1491, %v1456, %v970
  %v1523 = vsel %vm1491, %v1458, %v972
  %v1525 = vsel %vm1491, %v1460, %v974
  %v1527 = vsel %vm1491, %v1462, %v976
  %v1529 = vsel %vm1491, %v1464, %v978
  %v1531 = vsel %vm1491, %v1466, %v980
  %v1533 = vsel %vm1491, %v1468, %v982
  %v1535 = vsel %vm1491, %v1470, %v984
  %v1537 = vsel %vm1491, %v1472, %v986
  %v1539 = vsel %vm1491, %v1474, %v988
  %v1541 = vsel %vm1491, %v1476, %v990
  %v1543 = vsel %vm1491, %v1478, %v992
  %v1545 = vsel %vm1491, %v1480, %v994
  %v1547 = vsel %vm1491, %v1482, %v996
  %v1549 = vsel %vm1491, %v1484, %v998
  %v1551 = vsel %vm1491, %v1486, %v1000
  %v1553 = vsel %vm1491, %v1488, %v1002
  %v1555 = vsel %vm1491, %v1490, %v1004
  %vm1556 = vcmask 261120
  %v1558 = vsel %vm1556, %v1493, %v1006
  %v1561 = vsel %vm1556, %v1495, %v1008
  %v1564 = vsel %vm1556, %v1497, %v1010
  %v1567 = vsel %vm1556, %v1499, %v1012
  %v1570 = vsel %vm1556, %v1501, %v1014
  %v1573 = vsel %vm1556, %v1503, %v1016
  %v1576 = vsel %vm1556, %v1505, %v1018
  %v1579 = vsel %vm1556, %v1507, %v1020
  %v1582 = vsel %vm1556, %v1509, %v1022
  %v1585 = vsel %vm1556, %v1511, %v1024
  %v1588 = vsel %vm1556, %v1513, %v1026
  %v1591 = vsel %vm1556, %v1515, %v1028
  %v1594 = vsel %vm1556, %v1517, %v1030
  %v1597 = vsel %vm1556, %v1519, %v1032
  %v1600 = vsel %vm1556, %v1521, %v1034
  %v1603 = vsel %vm1556, %v1523, %v1036
  %v1606 = vsel %vm1556, %v1525, %v1038
  %v1609 = vsel %vm1556, %v1527, %v1040
  %v1612 = vsel %vm1556, %v1529, %v1042
  %v1615 = vsel %vm1556, %v1531, %v1044
  %v1618 = vsel %vm1556, %v1533, %v1046
  %v1621 = vsel %vm1556, %v1535, %v1048
  %v1624 = vsel %vm1556, %v1537, %v1050
  %v1627 = vsel %vm1556, %v1539, %v1052
  %v1630 = vsel %vm1556, %v1541, %v1054
  %v1633 = vsel %vm1556, %v1543, %v1056
  %v1636 = vsel %vm1556, %v1545, %v1058
  %v1639 = vsel %vm1556, %v1547, %v1060
  %v1642 = vsel %vm1556, %v1549, %v1062
  %v1645 = vsel %vm1556, %v1551, %v1064
  %v1648 = vsel %vm1556, %v1553, %v1066
  %v1651 = vsel %vm1556, %v1555, %v1068
  %v1653 = vld [vmem:[%s2] sm:$0xf]
  %v1654 = vld [vmem:[%s2 + $0x4] sm:$0xf]
  %v1655 = vld [vmem:[%s2 + $0x8] sm:$0xf]
  %v1656 = vld [vmem:[%s2 + $0xc] sm:$0xf]
  %v1657 = vld [vmem:[%s2 + $0x10] sm:$0xf]
  %v1658 = vld [vmem:[%s2 + $0x14] sm:$0xf]
  %v1659 = vld [vmem:[%s2 + $0x18] sm:$0xf]
  %v1660 = vld [vmem:[%s2 + $0x1c] sm:$0xf]
  %v1661 = vld [vmem:[%s2 + $0x20] sm:$0xf]
  %v1662 = vld [vmem:[%s2 + $0x24] sm:$0xf]
  %v1663 = vld [vmem:[%s2 + $0x28] sm:$0xf]
  %v1664 = vld [vmem:[%s2 + $0x2c] sm:$0xf]
  %v1665 = vld [vmem:[%s2 + $0x30] sm:$0xf]
  %v1666 = vld [vmem:[%s2 + $0x34] sm:$0xf]
  %v1667 = vld [vmem:[%s2 + $0x38] sm:$0xf]
  %v1668 = vld [vmem:[%s2 + $0x3c] sm:$0xf]
  %v1669 = vld [vmem:[%s2 + $0x40] sm:$0xf]
  %v1670 = vld [vmem:[%s2 + $0x44] sm:$0xf]
  %v1671 = vld [vmem:[%s2 + $0x48] sm:$0xf]
  %v1672 = vld [vmem:[%s2 + $0x4c] sm:$0xf]
  %v1673 = vld [vmem:[%s2 + $0x50] sm:$0xf]
  %v1674 = vld [vmem:[%s2 + $0x54] sm:$0xf]
  %v1675 = vld [vmem:[%s2 + $0x58] sm:$0xf]
  %v1676 = vld [vmem:[%s2 + $0x5c] sm:$0xf]
  %v1677 = vld [vmem:[%s2 + $0x60] sm:$0xf]
  %v1678 = vld [vmem:[%s2 + $0x64] sm:$0xf]
  %v1679 = vld [vmem:[%s2 + $0x68] sm:$0xf]
  %v1680 = vld [vmem:[%s2 + $0x6c] sm:$0xf]
  %v1681 = vld [vmem:[%s2 + $0x70] sm:$0xf]
  %v1682 = vld [vmem:[%s2 + $0x74] sm:$0xf]
  %v1683 = vld [vmem:[%s2 + $0x78] sm:$0xf]
  %v1684 = vld [vmem:[%s2 + $0x7c] sm:$0xf]
  %v1717 = vunpack.c.l.b16 %v1653
  %v1718 = vunpack.c.l.b16 %v1654
  %v1719 = vunpack.c.l.b16 %v1655
  %v1720 = vunpack.c.l.b16 %v1656
  %v1721 = vunpack.c.l.b16 %v1657
  %v1722 = vunpack.c.l.b16 %v1658
  %v1723 = vunpack.c.l.b16 %v1659
  %v1724 = vunpack.c.l.b16 %v1660
  %v1725 = vunpack.c.l.b16 %v1661
  %v1726 = vunpack.c.l.b16 %v1662
  %v1727 = vunpack.c.l.b16 %v1663
  %v1728 = vunpack.c.l.b16 %v1664
  %v1729 = vunpack.c.l.b16 %v1665
  %v1730 = vunpack.c.l.b16 %v1666
  %v1731 = vunpack.c.l.b16 %v1667
  %v1732 = vunpack.c.l.b16 %v1668
  %v1733 = vunpack.c.l.b16 %v1669
  %v1734 = vunpack.c.l.b16 %v1670
  %v1735 = vunpack.c.l.b16 %v1671
  %v1736 = vunpack.c.l.b16 %v1672
  %v1737 = vunpack.c.l.b16 %v1673
  %v1738 = vunpack.c.l.b16 %v1674
  %v1739 = vunpack.c.l.b16 %v1675
  %v1740 = vunpack.c.l.b16 %v1676
  %v1741 = vunpack.c.l.b16 %v1677
  %v1742 = vunpack.c.l.b16 %v1678
  %v1743 = vunpack.c.l.b16 %v1679
  %v1744 = vunpack.c.l.b16 %v1680
  %v1745 = vunpack.c.l.b16 %v1681
  %v1746 = vunpack.c.l.b16 %v1682
  %v1747 = vunpack.c.l.b16 %v1683
  %v1748 = vunpack.c.l.b16 %v1684
  %v1749 = vpack.c.b16 %v1718, %v1717
  %v1750 = vpack.c.b16 %v1720, %v1719
  %v1751 = vpack.c.b16 %v1722, %v1721
  %v1752 = vpack.c.b16 %v1724, %v1723
  %v1753 = vpack.c.b16 %v1726, %v1725
  %v1754 = vpack.c.b16 %v1728, %v1727
  %v1755 = vpack.c.b16 %v1730, %v1729
  %v1756 = vpack.c.b16 %v1732, %v1731
  %v1757 = vpack.c.b16 %v1734, %v1733
  %v1758 = vpack.c.b16 %v1736, %v1735
  %v1759 = vpack.c.b16 %v1738, %v1737
  %v1760 = vpack.c.b16 %v1740, %v1739
  %v1761 = vpack.c.b16 %v1742, %v1741
  %v1762 = vpack.c.b16 %v1744, %v1743
  %v1763 = vpack.c.b16 %v1746, %v1745
  %v1764 = vpack.c.b16 %v1748, %v1747
  %v1781 = vmul.bf16 %v1558, %v1749
  %v1782 = vmul.bf16 %v1561, %v1750
  %v1783 = vmul.bf16 %v1564, %v1751
  %v1784 = vmul.bf16 %v1567, %v1752
  %v1785 = vmul.bf16 %v1570, %v1753
  %v1786 = vmul.bf16 %v1573, %v1754
  %v1787 = vmul.bf16 %v1576, %v1755
  %v1788 = vmul.bf16 %v1579, %v1756
  %v1789 = vmul.bf16 %v1582, %v1757
  %v1790 = vmul.bf16 %v1585, %v1758
  %v1791 = vmul.bf16 %v1588, %v1759
  %v1792 = vmul.bf16 %v1591, %v1760
  %v1793 = vmul.bf16 %v1594, %v1761
  %v1794 = vmul.bf16 %v1597, %v1762
  %v1795 = vmul.bf16 %v1600, %v1763
  %v1796 = vmul.bf16 %v1603, %v1764
  %v1797 = vmul.bf16 %v1606, %v1749
  %v1798 = vmul.bf16 %v1609, %v1750
  %v1799 = vmul.bf16 %v1612, %v1751
  %v1800 = vmul.bf16 %v1615, %v1752
  %v1801 = vmul.bf16 %v1618, %v1753
  %v1802 = vmul.bf16 %v1621, %v1754
  %v1803 = vmul.bf16 %v1624, %v1755
  %v1804 = vmul.bf16 %v1627, %v1756
  %v1805 = vmul.bf16 %v1630, %v1757
  %v1806 = vmul.bf16 %v1633, %v1758
  %v1807 = vmul.bf16 %v1636, %v1759
  %v1808 = vmul.bf16 %v1639, %v1760
  %v1809 = vmul.bf16 %v1642, %v1761
  %v1810 = vmul.bf16 %v1645, %v1762
  %v1811 = vmul.bf16 %v1648, %v1763
  %v1812 = vmul.bf16 %v1651, %v1764
  %v1813 = vld [vmem:[%s5] sm:$0xf]
  %v1814 = vld [vmem:[%s5 + $0x4] sm:$0xf]
  %v1815 = vld [vmem:[%s5 + $0x8] sm:$0xf]
  %v1816 = vld [vmem:[%s5 + $0xc] sm:$0xf]
  %v1817 = vld [vmem:[%s5 + $0x10] sm:$0x3]
  %v1818 = vld [vmem:[%s7] sm:$0x1]
  %v1820 = vlaneseq
  %v1821 = vshrl.u32 %v1820, 7
  %v1822 = vsub.s32 0, %v1821
  %v1823 = vrot.slane %v1818, %v1822
  %v1830 = vunpack.c.l.b16 %v1813
  %v1831 = vunpack.c.l.b16 %v1814
  %v1832 = vunpack.c.l.b16 %v1815
  %v1833 = vunpack.c.l.b16 %v1816
  %v1834 = vunpack.c.l.b16 %v1817
  %v1835 = vpack.c.b16 %v1831, %v1830
  %v1836 = vpack.c.b16 %v1833, %v1832
  %v1837 = vpack.c.b16 %v1834, %v1834
  %vm1840 = vcmask 293888
  %v1842 = vsel %vm1840, %v1781, 0
  %v1845 = vsel %vm1840, %v1782, 0
  %v1848 = vsel %vm1840, %v1783, 0
  %v1851 = vsel %vm1840, %v1784, 0
  %v1854 = vsel %vm1840, %v1785, 0
  %v1857 = vsel %vm1840, %v1786, 0
  %v1860 = vsel %vm1840, %v1787, 0
  %v1863 = vsel %vm1840, %v1788, 0
  %v1866 = vsel %vm1840, %v1789, 0
  %v1869 = vsel %vm1840, %v1790, 0
  %v1872 = vsel %vm1840, %v1791, 0
  %v1875 = vsel %vm1840, %v1792, 0
  %v1878 = vsel %vm1840, %v1793, 0
  %v1881 = vsel %vm1840, %v1794, 0
  %v1884 = vsel %vm1840, %v1795, 0
  %v1887 = vsel %vm1840, %v1796, 0
  %v1890 = vsel %vm1840, %v1797, 0
  %v1893 = vsel %vm1840, %v1798, 0
  %v1896 = vsel %vm1840, %v1799, 0
  %v1899 = vsel %vm1840, %v1800, 0
  %v1902 = vsel %vm1840, %v1801, 0
  %v1905 = vsel %vm1840, %v1802, 0
  %v1908 = vsel %vm1840, %v1803, 0
  %v1911 = vsel %vm1840, %v1804, 0
  %v1914 = vsel %vm1840, %v1805, 0
  %v1917 = vsel %vm1840, %v1806, 0
  %v1920 = vsel %vm1840, %v1807, 0
  %v1923 = vsel %vm1840, %v1808, 0
  %v1926 = vsel %vm1840, %v1809, 0
  %v1929 = vsel %vm1840, %v1810, 0
  %v1932 = vsel %vm1840, %v1811, 0
  %v1935 = vsel %vm1840, %v1812, 0
  %vm1937 = vcmask 1041408
  %v1939 = vsel %vm1937, %v1837, 0
  %1941 = vmatprep.subr.bf16.mxu0 0
  %1942 = vmatpush1.bf16.msra.mxu0 0
  %1943 = vmatprep.subr.bf16.mxu0 0
  %1944 = vmatpush1.bf16.msra.mxu0 0
  %1945 = vmatprep.subr.bf16.mxu0 0
  %1946 = vmatpush1.bf16.msra.mxu0 0
  %1947 = vmatprep.subr.bf16.mxu0 0
  %1948 = vmatpush1.bf16.msra.mxu0 0
  %1949 = vmatprep.subr.bf16.mxu0 0
  %1950 = vmatpush1.bf16.msra.mxu0 0
  %1951 = vmatprep.subr.bf16.mxu0 0
  %1952 = vmatpush1.bf16.msra.mxu0 %v1939
  %1953 = vmatprep.subr.bf16.mxu0 0
  %1954 = vmatpush1.bf16.msra.mxu0 %v1836
  %1955 = vmatprep.subr.bf16.mxu0 0
  %1956 = vmatpush1.bf16.msra.mxu0 %v1835
  %1957 = vmatprep.subr.bf16.mxu0 0
  %1958 = vmatpush2.bf16.msra.mxu0 0
  %1959 = vmatprep.subr.bf16.mxu0 0
  %1960 = vmatpush2.bf16.msra.mxu0 0
  %1961 = vmatprep.subr.bf16.mxu0 0
  %1962 = vmatpush2.bf16.msra.mxu0 0
  %1963 = vmatprep.subr.bf16.mxu0 0
  %1964 = vmatpush2.bf16.msra.mxu0 0
  %1965 = vmatprep.subr.bf16.mxu0 0
  %1966 = vmatpush2.bf16.msra.mxu0 0
  %1967 = vmatprep.subr.bf16.mxu0 0
  %1968 = vmatpush2.bf16.msra.mxu0 0
  %1969 = vmatprep.subr.bf16.mxu0 0
  %1970 = vmatpush2.bf16.msra.mxu0 0
  %1971 = vmatprep.subr.bf16.mxu0 0
  %1972 = vmatpush2.bf16.msra.mxu0 0
  %1973 = vmatprep.mubr.bf16.mxu0 0
  %1974 = vmatmul.mubr.bf16.gmra.mxu0 %v1842
  %v1975 = vpop.f32.mrf.mxu0
  %v1976 = vadd.f32 %v1823, %v1975
  %v1977 = vpop.f32.mrf.mxu0
  %v1978 = vpop.f32.mrf.mxu0
  %v1979 = vadd.f32 %v1823, %v1978
  %v1980 = vpop.f32.mrf.mxu0
  %1981 = vmatprep.mubr.bf16.mxu0 0
  %1982 = vmatmul.mubr.bf16.gmra.mxu0 %v1845
  %v1983 = vpop.f32.mrf.mxu0
  %v1984 = vadd.f32 %v1823, %v1983
  %v1985 = vpop.f32.mrf.mxu0
  %v1986 = vpop.f32.mrf.mxu0
  %v1987 = vadd.f32 %v1823, %v1986
  %v1988 = vpop.f32.mrf.mxu0
  %1989 = vmatprep.mubr.bf16.mxu0 0
  %1990 = vmatmul.mubr.bf16.gmra.mxu0 %v1848
  %v1991 = vpop.f32.mrf.mxu0
  %v1992 = vadd.f32 %v1823, %v1991
  %v1993 = vpop.f32.mrf.mxu0
  %v1994 = vpop.f32.mrf.mxu0
  %v1995 = vadd.f32 %v1823, %v1994
  %v1996 = vpop.f32.mrf.mxu0
  %1997 = vmatprep.mubr.bf16.mxu0 0
  %1998 = vmatmul.mubr.bf16.gmra.mxu0 %v1851
  %v1999 = vpop.f32.mrf.mxu0
  %v2000 = vadd.f32 %v1823, %v1999
  %v2001 = vpop.f32.mrf.mxu0
  %v2002 = vpop.f32.mrf.mxu0
  %v2003 = vadd.f32 %v1823, %v2002
  %v2004 = vpop.f32.mrf.mxu0
  %2005 = vmatprep.mubr.bf16.mxu0 0
  %2006 = vmatmul.mubr.bf16.gmra.mxu0 %v1854
  %v2007 = vpop.f32.mrf.mxu0
  %v2008 = vadd.f32 %v1823, %v2007
  %v2009 = vpop.f32.mrf.mxu0
  %v2010 = vpop.f32.mrf.mxu0
  %v2011 = vadd.f32 %v1823, %v2010
  %v2012 = vpop.f32.mrf.mxu0
  %2013 = vmatprep.mubr.bf16.mxu0 0
  %2014 = vmatmul.mubr.bf16.gmra.mxu0 %v1857
  %v2015 = vpop.f32.mrf.mxu0
  %v2016 = vadd.f32 %v1823, %v2015
  %v2017 = vpop.f32.mrf.mxu0
  %v2018 = vpop.f32.mrf.mxu0
  %v2019 = vadd.f32 %v1823, %v2018
  %v2020 = vpop.f32.mrf.mxu0
  %2021 = vmatprep.mubr.bf16.mxu0 0
  %2022 = vmatmul.mubr.bf16.gmra.mxu0 %v1860
  %v2023 = vpop.f32.mrf.mxu0
  %v2024 = vadd.f32 %v1823, %v2023
  %v2025 = vpop.f32.mrf.mxu0
  %v2026 = vpop.f32.mrf.mxu0
  %v2027 = vadd.f32 %v1823, %v2026
  %v2028 = vpop.f32.mrf.mxu0
  %2029 = vmatprep.mubr.bf16.mxu0 0
  %2030 = vmatmul.mubr.bf16.gmra.mxu0 %v1863
  %v2031 = vpop.f32.mrf.mxu0
  %v2032 = vadd.f32 %v1823, %v2031
  %v2033 = vpop.f32.mrf.mxu0
  %v2034 = vpop.f32.mrf.mxu0
  %v2035 = vadd.f32 %v1823, %v2034
  %v2036 = vpop.f32.mrf.mxu0
  %2037 = vmatprep.mubr.bf16.mxu0 0
  %2038 = vmatmul.mubr.bf16.gmra.mxu0 %v1866
  %v2039 = vpop.f32.mrf.mxu0
  %v2040 = vadd.f32 %v1823, %v2039
  %v2041 = vpop.f32.mrf.mxu0
  %v2042 = vpop.f32.mrf.mxu0
  %v2043 = vadd.f32 %v1823, %v2042
  %v2044 = vpop.f32.mrf.mxu0
  %2045 = vmatprep.mubr.bf16.mxu0 0
  %2046 = vmatmul.mubr.bf16.gmra.mxu0 %v1869
  %v2047 = vpop.f32.mrf.mxu0
  %v2048 = vadd.f32 %v1823, %v2047
  %v2049 = vpop.f32.mrf.mxu0
  %v2050 = vpop.f32.mrf.mxu0
  %v2051 = vadd.f32 %v1823, %v2050
  %v2052 = vpop.f32.mrf.mxu0
  %2053 = vmatprep.mubr.bf16.mxu0 0
  %2054 = vmatmul.mubr.bf16.gmra.mxu0 %v1872
  %v2055 = vpop.f32.mrf.mxu0
  %v2056 = vadd.f32 %v1823, %v2055
  %v2057 = vpop.f32.mrf.mxu0
  %v2058 = vpop.f32.mrf.mxu0
  %v2059 = vadd.f32 %v1823, %v2058
  %v2060 = vpop.f32.mrf.mxu0
  %2061 = vmatprep.mubr.bf16.mxu0 0
  %2062 = vmatmul.mubr.bf16.gmra.mxu0 %v1875
  %v2063 = vpop.f32.mrf.mxu0
  %v2064 = vadd.f32 %v1823, %v2063
  %v2065 = vpop.f32.mrf.mxu0
  %v2066 = vpop.f32.mrf.mxu0
  %v2067 = vadd.f32 %v1823, %v2066
  %v2068 = vpop.f32.mrf.mxu0
  %2069 = vmatprep.mubr.bf16.mxu0 0
  %2070 = vmatmul.mubr.bf16.gmra.mxu0 %v1878
  %v2071 = vpop.f32.mrf.mxu0
  %v2072 = vadd.f32 %v1823, %v2071
  %v2073 = vpop.f32.mrf.mxu0
  %v2074 = vpop.f32.mrf.mxu0
  %v2075 = vadd.f32 %v1823, %v2074
  %v2076 = vpop.f32.mrf.mxu0
  %2077 = vmatprep.mubr.bf16.mxu0 0
  %2078 = vmatmul.mubr.bf16.gmra.mxu0 %v1881
  %v2079 = vpop.f32.mrf.mxu0
  %v2080 = vadd.f32 %v1823, %v2079
  %v2081 = vpop.f32.mrf.mxu0
  %v2082 = vpop.f32.mrf.mxu0
  %v2083 = vadd.f32 %v1823, %v2082
  %v2084 = vpop.f32.mrf.mxu0
  %2085 = vmatprep.mubr.bf16.mxu0 0
  %2086 = vmatmul.mubr.bf16.gmra.mxu0 %v1884
  %v2087 = vpop.f32.mrf.mxu0
  %v2088 = vadd.f32 %v1823, %v2087
  %v2089 = vpop.f32.mrf.mxu0
  %v2090 = vpop.f32.mrf.mxu0
  %v2091 = vadd.f32 %v1823, %v2090
  %v2092 = vpop.f32.mrf.mxu0
  %2093 = vmatprep.mubr.bf16.mxu0 0
  %2094 = vmatmul.mubr.bf16.gmra.mxu0 %v1887
  %v2095 = vpop.f32.mrf.mxu0
  %v2096 = vadd.f32 %v1823, %v2095
  %v2097 = vpop.f32.mrf.mxu0
  %v2098 = vpop.f32.mrf.mxu0
  %v2099 = vadd.f32 %v1823, %v2098
  %v2100 = vpop.f32.mrf.mxu0
  %2101 = vmatprep.mubr.bf16.mxu0 0
  %2102 = vmatmul.mubr.bf16.gmra.mxu0 %v1890
  %v2103 = vpop.f32.mrf.mxu0
  %v2104 = vadd.f32 %v1823, %v2103
  %v2105 = vpop.f32.mrf.mxu0
  %v2106 = vpop.f32.mrf.mxu0
  %v2107 = vadd.f32 %v1823, %v2106
  %v2108 = vpop.f32.mrf.mxu0
  %2109 = vmatprep.mubr.bf16.mxu0 0
  %2110 = vmatmul.mubr.bf16.gmra.mxu0 %v1893
  %v2111 = vpop.f32.mrf.mxu0
  %v2112 = vadd.f32 %v1823, %v2111
  %v2113 = vpop.f32.mrf.mxu0
  %v2114 = vpop.f32.mrf.mxu0
  %v2115 = vadd.f32 %v1823, %v2114
  %v2116 = vpop.f32.mrf.mxu0
  %2117 = vmatprep.mubr.bf16.mxu0 0
  %2118 = vmatmul.mubr.bf16.gmra.mxu0 %v1896
  %v2119 = vpop.f32.mrf.mxu0
  %v2120 = vadd.f32 %v1823, %v2119
  %v2121 = vpop.f32.mrf.mxu0
  %v2122 = vpop.f32.mrf.mxu0
  %v2123 = vadd.f32 %v1823, %v2122
  %v2124 = vpop.f32.mrf.mxu0
  %2125 = vmatprep.mubr.bf16.mxu0 0
  %2126 = vmatmul.mubr.bf16.gmra.mxu0 %v1899
  %v2127 = vpop.f32.mrf.mxu0
  %v2128 = vadd.f32 %v1823, %v2127
  %v2129 = vpop.f32.mrf.mxu0
  %v2130 = vpop.f32.mrf.mxu0
  %v2131 = vadd.f32 %v1823, %v2130
  %v2132 = vpop.f32.mrf.mxu0
  %2133 = vmatprep.mubr.bf16.mxu0 0
  %2134 = vmatmul.mubr.bf16.gmra.mxu0 %v1902
  %v2135 = vpop.f32.mrf.mxu0
  %v2136 = vadd.f32 %v1823, %v2135
  %v2137 = vpop.f32.mrf.mxu0
  %v2138 = vpop.f32.mrf.mxu0
  %v2139 = vadd.f32 %v1823, %v2138
  %v2140 = vpop.f32.mrf.mxu0
  %2141 = vmatprep.mubr.bf16.mxu0 0
  %2142 = vmatmul.mubr.bf16.gmra.mxu0 %v1905
  %v2143 = vpop.f32.mrf.mxu0
  %v2144 = vadd.f32 %v1823, %v2143
  %v2145 = vpop.f32.mrf.mxu0
  %v2146 = vpop.f32.mrf.mxu0
  %v2147 = vadd.f32 %v1823, %v2146
  %v2148 = vpop.f32.mrf.mxu0
  %2149 = vmatprep.mubr.bf16.mxu0 0
  %2150 = vmatmul.mubr.bf16.gmra.mxu0 %v1908
  %v2151 = vpop.f32.mrf.mxu0
  %v2152 = vadd.f32 %v1823, %v2151
  %v2153 = vpop.f32.mrf.mxu0
  %v2154 = vpop.f32.mrf.mxu0
  %v2155 = vadd.f32 %v1823, %v2154
  %v2156 = vpop.f32.mrf.mxu0
  %2157 = vmatprep.mubr.bf16.mxu0 0
  %2158 = vmatmul.mubr.bf16.gmra.mxu0 %v1911
  %v2159 = vpop.f32.mrf.mxu0
  %v2160 = vadd.f32 %v1823, %v2159
  %v2161 = vpop.f32.mrf.mxu0
  %v2162 = vpop.f32.mrf.mxu0
  %v2163 = vadd.f32 %v1823, %v2162
  %v2164 = vpop.f32.mrf.mxu0
  %2165 = vmatprep.mubr.bf16.mxu0 0
  %2166 = vmatmul.mubr.bf16.gmra.mxu0 %v1914
  %v2167 = vpop.f32.mrf.mxu0
  %v2168 = vadd.f32 %v1823, %v2167
  %v2169 = vpop.f32.mrf.mxu0
  %v2170 = vpop.f32.mrf.mxu0
  %v2171 = vadd.f32 %v1823, %v2170
  %v2172 = vpop.f32.mrf.mxu0
  %2173 = vmatprep.mubr.bf16.mxu0 0
  %2174 = vmatmul.mubr.bf16.gmra.mxu0 %v1917
  %v2175 = vpop.f32.mrf.mxu0
  %v2176 = vadd.f32 %v1823, %v2175
  %v2177 = vpop.f32.mrf.mxu0
  %v2178 = vpop.f32.mrf.mxu0
  %v2179 = vadd.f32 %v1823, %v2178
  %v2180 = vpop.f32.mrf.mxu0
  %2181 = vmatprep.mubr.bf16.mxu0 0
  %2182 = vmatmul.mubr.bf16.gmra.mxu0 %v1920
  %v2183 = vpop.f32.mrf.mxu0
  %v2184 = vadd.f32 %v1823, %v2183
  %v2185 = vpop.f32.mrf.mxu0
  %v2186 = vpop.f32.mrf.mxu0
  %v2187 = vadd.f32 %v1823, %v2186
  %v2188 = vpop.f32.mrf.mxu0
  %2189 = vmatprep.mubr.bf16.mxu0 0
  %2190 = vmatmul.mubr.bf16.gmra.mxu0 %v1923
  %v2191 = vpop.f32.mrf.mxu0
  %v2192 = vadd.f32 %v1823, %v2191
  %v2193 = vpop.f32.mrf.mxu0
  %v2194 = vpop.f32.mrf.mxu0
  %v2195 = vadd.f32 %v1823, %v2194
  %v2196 = vpop.f32.mrf.mxu0
  %2197 = vmatprep.mubr.bf16.mxu0 0
  %2198 = vmatmul.mubr.bf16.gmra.mxu0 %v1926
  %v2199 = vpop.f32.mrf.mxu0
  %v2200 = vadd.f32 %v1823, %v2199
  %v2201 = vpop.f32.mrf.mxu0
  %v2202 = vpop.f32.mrf.mxu0
  %v2203 = vadd.f32 %v1823, %v2202
  %v2204 = vpop.f32.mrf.mxu0
  %2205 = vmatprep.mubr.bf16.mxu0 0
  %2206 = vmatmul.mubr.bf16.gmra.mxu0 %v1929
  %v2207 = vpop.f32.mrf.mxu0
  %v2208 = vadd.f32 %v1823, %v2207
  %v2209 = vpop.f32.mrf.mxu0
  %v2210 = vpop.f32.mrf.mxu0
  %v2211 = vadd.f32 %v1823, %v2210
  %v2212 = vpop.f32.mrf.mxu0
  %2213 = vmatprep.mubr.bf16.mxu0 0
  %2214 = vmatmul.mubr.bf16.gmra.mxu0 %v1932
  %v2215 = vpop.f32.mrf.mxu0
  %v2216 = vadd.f32 %v1823, %v2215
  %v2217 = vpop.f32.mrf.mxu0
  %v2218 = vpop.f32.mrf.mxu0
  %v2219 = vadd.f32 %v1823, %v2218
  %v2220 = vpop.f32.mrf.mxu0
  %2221 = vmatprep.mubr.bf16.mxu0 0
  %2222 = vmatmul.mubr.bf16.gmra.mxu0 %v1935
  %v2223 = vpop.f32.mrf.mxu0
  %v2224 = vadd.f32 %v1823, %v2223
  %v2225 = vpop.f32.mrf.mxu0
  %v2226 = vpop.f32.mrf.mxu0
  %v2227 = vadd.f32 %v1823, %v2226
  %v2228 = vpop.f32.mrf.mxu0
  %2229 = vdwg.mxu0
  %v2230 = vld [vmem:[%s0] sm:$0x3]
  %v2231 = vld [vmem:[%s3] sm:$0xff]
  %v2232 = vld [vmem:[%s3 + $0x8] sm:$0x3]
  %v2233 = vld [vmem:[%s4] sm:$0x1]
  %v2235 = vlaneseq
  %v2236 = vshrl.u32 %v2235, 7
  %v2237 = vsub.s32 0, %v2236
  %v2238 = vrot.slane %v2233, %v2237
  %vm2240 = vcmask 80896
  %v2242 = vsel %vm2240, %v2230, 0
  %v2245 = vsel %vm1937, %v2232, 0
  %2247 = vmatprep.subr.mxu0 0.0
  %2248 = vmatpush1.msra.mxu0 0.0
  %2249 = vmatprep.subr.mxu0 0.0
  %2250 = vmatpush1.msra.mxu0 0.0
  %2251 = vmatprep.subr.mxu0 0.0
  %2252 = vmatpush1.msra.mxu0 0.0
  %2253 = vmatprep.subr.mxu0 0.0
  %2254 = vmatpush1.msra.mxu0 0.0
  %2255 = vmatprep.subr.mxu0 0.0
  %2256 = vmatpush1.msra.mxu0 0.0
  %2257 = vmatprep.subr.mxu0 0.0
  %2258 = vmatpush1.msra.mxu0 0.0
  %2259 = vmatprep.subr.mxu0 0.0
  %2260 = vmatpush1.msra.mxu0 0.0
  %2261 = vmatprep.subr.mxu0 0.0
  %2262 = vmatpush1.msra.mxu0 0.0
  %2263 = vmatprep.subr.mxu0 0.0
  %2264 = vmatpush1.msra.mxu0 0.0
  %2265 = vmatprep.subr.mxu0 0.0
  %2266 = vmatpush1.msra.mxu0 0.0
  %2267 = vmatprep.subr.mxu0 0.0
  %2268 = vmatpush1.msra.mxu0 0.0
  %2269 = vmatprep.subr.mxu0 0.0
  %2270 = vmatpush1.msra.mxu0 0.0
  %2271 = vmatprep.subr.mxu0 0.0
  %2272 = vmatpush1.msra.mxu0 0.0
  %2273 = vmatprep.subr.mxu0 0.0
  %2274 = vmatpush1.msra.mxu0 0.0
  %2275 = vmatprep.subr.mxu0 0.0
  %2276 = vmatpush1.msra.mxu0 %v2245
  %2277 = vmatprep.subr.mxu0 0.0
  %2278 = vmatpush1.msra.mxu0 %v2231
  %2279 = vmatprep.subr.mxu0 0.0
  %2280 = vmatpush2.msra.mxu0 0.0
  %2281 = vmatprep.subr.mxu0 0.0
  %2282 = vmatpush2.msra.mxu0 0.0
  %2283 = vmatprep.subr.mxu0 0.0
  %2284 = vmatpush2.msra.mxu0 0.0
  %2285 = vmatprep.subr.mxu0 0.0
  %2286 = vmatpush2.msra.mxu0 0.0
  %2287 = vmatprep.subr.mxu0 0.0
  %2288 = vmatpush2.msra.mxu0 0.0
  %2289 = vmatprep.subr.mxu0 0.0
  %2290 = vmatpush2.msra.mxu0 0.0
  %2291 = vmatprep.subr.mxu0 0.0
  %2292 = vmatpush2.msra.mxu0 0.0
  %2293 = vmatprep.subr.mxu0 0.0
  %2294 = vmatpush2.msra.mxu0 0.0
  %2295 = vmatprep.subr.mxu0 0.0
  %2296 = vmatpush2.msra.mxu0 0.0
  %2297 = vmatprep.subr.mxu0 0.0
  %2298 = vmatpush2.msra.mxu0 0.0
  %2299 = vmatprep.subr.mxu0 0.0
  %2300 = vmatpush2.msra.mxu0 0.0
  %2301 = vmatprep.subr.mxu0 0.0
  %2302 = vmatpush2.msra.mxu0 0.0
  %2303 = vmatprep.subr.mxu0 0.0
  %2304 = vmatpush2.msra.mxu0 0.0
  %2305 = vmatprep.subr.mxu0 0.0
  %2306 = vmatpush2.msra.mxu0 0.0
  %2307 = vmatprep.subr.mxu0 0.0
  %2308 = vmatpush2.msra.mxu0 0.0
  %2309 = vmatprep.subr.mxu0 0.0
  %2310 = vmatpush2.msra.mxu0 0.0
  %2311 = vmatprep.mubr.f32.mxu0 0.0
  %2312 = vmatmul.mubr.f32.gmra.mxu0 %v2242
  %v2313 = vpop.f32.mrf.mxu0
  %v2314 = vadd.f32 %v2238, %v2313
  %v2315 = vpop.f32.mrf.mxu0
  %2316 = vdwg.mxu0
  %v2319 = vunpack.c.l.s4 1966171168
  %v2320 = vunpack.c.0.s8 %v2319
  %v2321 = vlaneseq
  %v2322 = vshrl.u32 %v2321, 7
  %v2323 = vsub.s32 %v2320, %v2322
  %v2324 = vrot.slane %v2314, %v2323
  %v2325 = vcombine.high %v2324, %v2324
  %v2327 = vunpack.c.l.s4 1966171168
  %v2328 = vunpack.c.0.s8 %v2327
  %v2329 = vlaneseq
  %v2330 = vshrl.u32 %v2329, 7
  %v2331 = vsub.s32 %v2328, %v2330
  %v2332 = vrot.slane %v2324, %v2331
  %v2334 = vunpack.c.l.s4 1966171168
  %v2335 = vunpack.c.0.s8 %v2334
  %v2336 = vlaneseq
  %v2337 = vshrl.u32 %v2336, 7
  %v2338 = vsub.s32 %v2335, %v2337
  %v2339 = vrot.slane %v2325, %v2338
  %v2340 = vlaneseq
  %v2341 = vshrl.u32 %v2340, 7
  %v2342 = vsub.s32 0, %v2341
  %v2343 = vrot.slane %v2332, %v2342
  %v2344 = vlaneseq
  %v2345 = vshrl.u32 %v2344, 7
  %v2346 = vsub.s32 0, %v2345
  %v2347 = vrot.slane %v2339, %v2346
  %v2348 = vld [vmem:[%s6] sm:$0xff]
  %v2349 = vld [vmem:[%s6 + $0x8] sm:$0xff]
  %v2350 = vld [vmem:[%s6 + $0x10] sm:$0xff]
  %v2351 = vld [vmem:[%s6 + $0x18] sm:$0xff]
  %v2352 = vld [vmem:[%s6 + $0x20] sm:$0xff]
  %v2353 = vld [vmem:[%s6 + $0x28] sm:$0xff]
  %v2354 = vld [vmem:[%s6 + $0x30] sm:$0xff]
  %v2355 = vld [vmem:[%s6 + $0x38] sm:$0xff]
  %v2356 = vld [vmem:[%s6 + $0x40] sm:$0xff]
  %v2357 = vld [vmem:[%s6 + $0x48] sm:$0xff]
  %v2358 = vld [vmem:[%s6 + $0x50] sm:$0xff]
  %v2359 = vld [vmem:[%s6 + $0x58] sm:$0xff]
  %v2360 = vld [vmem:[%s6 + $0x60] sm:$0xff]
  %v2361 = vld [vmem:[%s6 + $0x68] sm:$0xff]
  %v2362 = vld [vmem:[%s6 + $0x70] sm:$0xff]
  %v2363 = vld [vmem:[%s6 + $0x78] sm:$0xff]
  %v2364 = vld [vmem:[%s6 + $0x80] sm:$0xff]
  %v2365 = vld [vmem:[%s6 + $0x88] sm:$0xff]
  %v2366 = vld [vmem:[%s6 + $0x90] sm:$0xff]
  %v2367 = vld [vmem:[%s6 + $0x98] sm:$0xff]
  %v2368 = vld [vmem:[%s6 + $0xa0] sm:$0xff]
  %v2369 = vld [vmem:[%s6 + $0xa8] sm:$0xff]
  %v2370 = vld [vmem:[%s6 + $0xb0] sm:$0xff]
  %v2371 = vld [vmem:[%s6 + $0xb8] sm:$0xff]
  %v2372 = vld [vmem:[%s6 + $0xc0] sm:$0xff]
  %v2373 = vld [vmem:[%s6 + $0xc8] sm:$0xff]
  %v2374 = vld [vmem:[%s6 + $0xd0] sm:$0xff]
  %v2375 = vld [vmem:[%s6 + $0xd8] sm:$0xff]
  %v2376 = vld [vmem:[%s6 + $0xe0] sm:$0xff]
  %v2377 = vld [vmem:[%s6 + $0xe8] sm:$0xff]
  %v2378 = vld [vmem:[%s6 + $0xf0] sm:$0xff]
  %v2379 = vld [vmem:[%s6 + $0xf8] sm:$0xff]
  %2380 = vset.pattern.permute.xlu0 0
  %2381 = vperm.xlu0 %2380, %v2343
  %v2382 = vpop.permute.xlu0 %2381
  %2384 = vset.pattern.permute.xlu0 0
  %2385 = vperm.xlu0 %2384, %v2347
  %v2386 = vpop.permute.xlu0 %2385
  %v2388 = vmul.f32 %v2382, %v2348
  %v2389 = vmul.f32 %v2382, %v2349
  %v2390 = vmul.f32 %v2382, %v2350
  %v2391 = vmul.f32 %v2382, %v2351
  %v2392 = vmul.f32 %v2382, %v2352
  %v2393 = vmul.f32 %v2382, %v2353
  %v2394 = vmul.f32 %v2382, %v2354
  %v2395 = vmul.f32 %v2382, %v2355
  %v2396 = vmul.f32 %v2382, %v2356
  %v2397 = vmul.f32 %v2382, %v2357
  %v2398 = vmul.f32 %v2382, %v2358
  %v2399 = vmul.f32 %v2382, %v2359
  %v2400 = vmul.f32 %v2382, %v2360
  %v2401 = vmul.f32 %v2382, %v2361
  %v2402 = vmul.f32 %v2382, %v2362
  %v2403 = vmul.f32 %v2382, %v2363
  %v2404 = vmul.f32 %v2382, %v2364
  %v2405 = vmul.f32 %v2382, %v2365
  %v2406 = vmul.f32 %v2382, %v2366
  %v2407 = vmul.f32 %v2382, %v2367
  %v2408 = vmul.f32 %v2382, %v2368
  %v2409 = vmul.f32 %v2382, %v2369
  %v2410 = vmul.f32 %v2382, %v2370
  %v2411 = vmul.f32 %v2382, %v2371
  %v2412 = vmul.f32 %v2382, %v2372
  %v2413 = vmul.f32 %v2382, %v2373
  %v2414 = vmul.f32 %v2382, %v2374
  %v2415 = vmul.f32 %v2382, %v2375
  %v2416 = vmul.f32 %v2382, %v2376
  %v2417 = vmul.f32 %v2382, %v2377
  %v2418 = vmul.f32 %v2382, %v2378
  %v2419 = vmul.f32 %v2382, %v2379
  %v2420 = vmul.f32 %v2386, %v2348
  %v2421 = vmul.f32 %v2386, %v2349
  %v2422 = vmul.f32 %v2386, %v2350
  %v2423 = vmul.f32 %v2386, %v2351
  %v2424 = vmul.f32 %v2386, %v2352
  %v2425 = vmul.f32 %v2386, %v2353
  %v2426 = vmul.f32 %v2386, %v2354
  %v2427 = vmul.f32 %v2386, %v2355
  %v2428 = vmul.f32 %v2386, %v2356
  %v2429 = vmul.f32 %v2386, %v2357
  %v2430 = vmul.f32 %v2386, %v2358
  %v2431 = vmul.f32 %v2386, %v2359
  %v2432 = vmul.f32 %v2386, %v2360
  %v2433 = vmul.f32 %v2386, %v2361
  %v2434 = vmul.f32 %v2386, %v2362
  %v2435 = vmul.f32 %v2386, %v2363
  %v2436 = vmul.f32 %v2386, %v2364
  %v2437 = vmul.f32 %v2386, %v2365
  %v2438 = vmul.f32 %v2386, %v2366
  %v2439 = vmul.f32 %v2386, %v2367
  %v2440 = vmul.f32 %v2386, %v2368
  %v2441 = vmul.f32 %v2386, %v2369
  %v2442 = vmul.f32 %v2386, %v2370
  %v2443 = vmul.f32 %v2386, %v2371
  %v2444 = vmul.f32 %v2386, %v2372
  %v2445 = vmul.f32 %v2386, %v2373
  %v2446 = vmul.f32 %v2386, %v2374
  %v2447 = vmul.f32 %v2386, %v2375
  %v2448 = vmul.f32 %v2386, %v2376
  %v2449 = vmul.f32 %v2386, %v2377
  %v2450 = vmul.f32 %v2386, %v2378
  %v2451 = vmul.f32 %v2386, %v2379
  %v2452 = vadd.f32 %v1976, %v2388
  %v2453 = vadd.f32 %v1979, %v2389
  %v2454 = vadd.f32 %v1984, %v2390
  %v2455 = vadd.f32 %v1987, %v2391
  %v2456 = vadd.f32 %v1992, %v2392
  %v2457 = vadd.f32 %v1995, %v2393
  %v2458 = vadd.f32 %v2000, %v2394
  %v2459 = vadd.f32 %v2003, %v2395
  %v2460 = vadd.f32 %v2008, %v2396
  %v2461 = vadd.f32 %v2011, %v2397
  %v2462 = vadd.f32 %v2016, %v2398
  %v2463 = vadd.f32 %v2019, %v2399
  %v2464 = vadd.f32 %v2024, %v2400
  %v2465 = vadd.f32 %v2027, %v2401
  %v2466 = vadd.f32 %v2032, %v2402
  %v2467 = vadd.f32 %v2035, %v2403
  %v2468 = vadd.f32 %v2040, %v2404
  %v2469 = vadd.f32 %v2043, %v2405
  %v2470 = vadd.f32 %v2048, %v2406
  %v2471 = vadd.f32 %v2051, %v2407
  %v2472 = vadd.f32 %v2056, %v2408
  %v2473 = vadd.f32 %v2059, %v2409
  %v2474 = vadd.f32 %v2064, %v2410
  %v2475 = vadd.f32 %v2067, %v2411
  %v2476 = vadd.f32 %v2072, %v2412
  %v2477 = vadd.f32 %v2075, %v2413
  %v2478 = vadd.f32 %v2080, %v2414
  %v2479 = vadd.f32 %v2083, %v2415
  %v2480 = vadd.f32 %v2088, %v2416
  %v2481 = vadd.f32 %v2091, %v2417
  %v2482 = vadd.f32 %v2096, %v2418
  %v2483 = vadd.f32 %v2099, %v2419
  %v2484 = vadd.f32 %v2104, %v2420
  %v2485 = vadd.f32 %v2107, %v2421
  %v2486 = vadd.f32 %v2112, %v2422
  %v2487 = vadd.f32 %v2115, %v2423
  %v2488 = vadd.f32 %v2120, %v2424
  %v2489 = vadd.f32 %v2123, %v2425
  %v2490 = vadd.f32 %v2128, %v2426
  %v2491 = vadd.f32 %v2131, %v2427
  %v2492 = vadd.f32 %v2136, %v2428
  %v2493 = vadd.f32 %v2139, %v2429
  %v2494 = vadd.f32 %v2144, %v2430
  %v2495 = vadd.f32 %v2147, %v2431
  %v2496 = vadd.f32 %v2152, %v2432
  %v2497 = vadd.f32 %v2155, %v2433
  %v2498 = vadd.f32 %v2160, %v2434
  %v2499 = vadd.f32 %v2163, %v2435
  %v2500 = vadd.f32 %v2168, %v2436
  %v2501 = vadd.f32 %v2171, %v2437
  %v2502 = vadd.f32 %v2176, %v2438
  %v2503 = vadd.f32 %v2179, %v2439
  %v2504 = vadd.f32 %v2184, %v2440
  %v2505 = vadd.f32 %v2187, %v2441
  %v2506 = vadd.f32 %v2192, %v2442
  %v2507 = vadd.f32 %v2195, %v2443
  %v2508 = vadd.f32 %v2200, %v2444
  %v2509 = vadd.f32 %v2203, %v2445
  %v2510 = vadd.f32 %v2208, %v2446
  %v2511 = vadd.f32 %v2211, %v2447
  %v2512 = vadd.f32 %v2216, %v2448
  %v2513 = vadd.f32 %v2219, %v2449
  %v2514 = vadd.f32 %v2224, %v2450
  %v2515 = vadd.f32 %v2227, %v2451
  %2516 = vset.pattern.permute.xlu0 1
  %2517 = vperm.xlu0 %2516, %v2343
  %v2518 = vpop.permute.xlu0 %2517
  %2520 = vset.pattern.permute.xlu0 1
  %2521 = vperm.xlu0 %2520, %v2347
  %v2522 = vpop.permute.xlu0 %2521
  %v2524 = vmul.f32 %v2518, %v2348
  %v2525 = vmul.f32 %v2518, %v2349
  %v2526 = vmul.f32 %v2518, %v2350
  %v2527 = vmul.f32 %v2518, %v2351
  %v2528 = vmul.f32 %v2518, %v2352
  %v2529 = vmul.f32 %v2518, %v2353
  %v2530 = vmul.f32 %v2518, %v2354
  %v2531 = vmul.f32 %v2518, %v2355
  %v2532 = vmul.f32 %v2518, %v2356
  %v2533 = vmul.f32 %v2518, %v2357
  %v2534 = vmul.f32 %v2518, %v2358
  %v2535 = vmul.f32 %v2518, %v2359
  %v2536 = vmul.f32 %v2518, %v2360
  %v2537 = vmul.f32 %v2518, %v2361
  %v2538 = vmul.f32 %v2518, %v2362
  %v2539 = vmul.f32 %v2518, %v2363
  %v2540 = vmul.f32 %v2518, %v2364
  %v2541 = vmul.f32 %v2518, %v2365
  %v2542 = vmul.f32 %v2518, %v2366
  %v2543 = vmul.f32 %v2518, %v2367
  %v2544 = vmul.f32 %v2518, %v2368
  %v2545 = vmul.f32 %v2518, %v2369
  %v2546 = vmul.f32 %v2518, %v2370
  %v2547 = vmul.f32 %v2518, %v2371
  %v2548 = vmul.f32 %v2518, %v2372
  %v2549 = vmul.f32 %v2518, %v2373
  %v2550 = vmul.f32 %v2518, %v2374
  %v2551 = vmul.f32 %v2518, %v2375
  %v2552 = vmul.f32 %v2518, %v2376
  %v2553 = vmul.f32 %v2518, %v2377
  %v2554 = vmul.f32 %v2518, %v2378
  %v2555 = vmul.f32 %v2518, %v2379
  %v2556 = vmul.f32 %v2522, %v2348
  %v2557 = vmul.f32 %v2522, %v2349
  %v2558 = vmul.f32 %v2522, %v2350
  %v2559 = vmul.f32 %v2522, %v2351
  %v2560 = vmul.f32 %v2522, %v2352
  %v2561 = vmul.f32 %v2522, %v2353
  %v2562 = vmul.f32 %v2522, %v2354
  %v2563 = vmul.f32 %v2522, %v2355
  %v2564 = vmul.f32 %v2522, %v2356
  %v2565 = vmul.f32 %v2522, %v2357
  %v2566 = vmul.f32 %v2522, %v2358
  %v2567 = vmul.f32 %v2522, %v2359
  %v2568 = vmul.f32 %v2522, %v2360
  %v2569 = vmul.f32 %v2522, %v2361
  %v2570 = vmul.f32 %v2522, %v2362
  %v2571 = vmul.f32 %v2522, %v2363
  %v2572 = vmul.f32 %v2522, %v2364
  %v2573 = vmul.f32 %v2522, %v2365
  %v2574 = vmul.f32 %v2522, %v2366
  %v2575 = vmul.f32 %v2522, %v2367
  %v2576 = vmul.f32 %v2522, %v2368
  %v2577 = vmul.f32 %v2522, %v2369
  %v2578 = vmul.f32 %v2522, %v2370
  %v2579 = vmul.f32 %v2522, %v2371
  %v2580 = vmul.f32 %v2522, %v2372
  %v2581 = vmul.f32 %v2522, %v2373
  %v2582 = vmul.f32 %v2522, %v2374
  %v2583 = vmul.f32 %v2522, %v2375
  %v2584 = vmul.f32 %v2522, %v2376
  %v2585 = vmul.f32 %v2522, %v2377
  %v2586 = vmul.f32 %v2522, %v2378
  %v2587 = vmul.f32 %v2522, %v2379
  %2652 = vrot.lane.b32.xlu0 %v2524, 96
  %v2653 = vpop.permute.xlu0 %2652
  %2654 = vrot.lane.b32.xlu0 %v2525, 96
  %v2655 = vpop.permute.xlu0 %2654
  %2656 = vrot.lane.b32.xlu0 %v2526, 96
  %v2657 = vpop.permute.xlu0 %2656
  %2658 = vrot.lane.b32.xlu0 %v2527, 96
  %v2659 = vpop.permute.xlu0 %2658
  %2660 = vrot.lane.b32.xlu0 %v2528, 96
  %v2661 = vpop.permute.xlu0 %2660
  %2662 = vrot.lane.b32.xlu0 %v2529, 96
  %v2663 = vpop.permute.xlu0 %2662
  %2664 = vrot.lane.b32.xlu0 %v2530, 96
  %v2665 = vpop.permute.xlu0 %2664
  %2666 = vrot.lane.b32.xlu0 %v2531, 96
  %v2667 = vpop.permute.xlu0 %2666
  %2668 = vrot.lane.b32.xlu0 %v2532, 96
  %v2669 = vpop.permute.xlu0 %2668
  %2670 = vrot.lane.b32.xlu0 %v2533, 96
  %v2671 = vpop.permute.xlu0 %2670
  %2672 = vrot.lane.b32.xlu0 %v2534, 96
  %v2673 = vpop.permute.xlu0 %2672
  %2674 = vrot.lane.b32.xlu0 %v2535, 96
  %v2675 = vpop.permute.xlu0 %2674
  %2676 = vrot.lane.b32.xlu0 %v2536, 96
  %v2677 = vpop.permute.xlu0 %2676
  %2678 = vrot.lane.b32.xlu0 %v2537, 96
  %v2679 = vpop.permute.xlu0 %2678
  %2680 = vrot.lane.b32.xlu0 %v2538, 96
  %v2681 = vpop.permute.xlu0 %2680
  %2682 = vrot.lane.b32.xlu0 %v2539, 96
  %v2683 = vpop.permute.xlu0 %2682
  %2684 = vrot.lane.b32.xlu0 %v2540, 96
  %v2685 = vpop.permute.xlu0 %2684
  %2686 = vrot.lane.b32.xlu0 %v2541, 96
  %v2687 = vpop.permute.xlu0 %2686
  %2688 = vrot.lane.b32.xlu0 %v2542, 96
  %v2689 = vpop.permute.xlu0 %2688
  %2690 = vrot.lane.b32.xlu0 %v2543, 96
  %v2691 = vpop.permute.xlu0 %2690
  %2692 = vrot.lane.b32.xlu0 %v2544, 96
  %v2693 = vpop.permute.xlu0 %2692
  %2694 = vrot.lane.b32.xlu0 %v2545, 96
  %v2695 = vpop.permute.xlu0 %2694
  %2696 = vrot.lane.b32.xlu0 %v2546, 96
  %v2697 = vpop.permute.xlu0 %2696
  %2698 = vrot.lane.b32.xlu0 %v2547, 96
  %v2699 = vpop.permute.xlu0 %2698
  %2700 = vrot.lane.b32.xlu0 %v2548, 96
  %v2701 = vpop.permute.xlu0 %2700
  %2702 = vrot.lane.b32.xlu0 %v2549, 96
  %v2703 = vpop.permute.xlu0 %2702
  %2704 = vrot.lane.b32.xlu0 %v2550, 96
  %v2705 = vpop.permute.xlu0 %2704
  %2706 = vrot.lane.b32.xlu0 %v2551, 96
  %v2707 = vpop.permute.xlu0 %2706
  %2708 = vrot.lane.b32.xlu0 %v2552, 96
  %v2709 = vpop.permute.xlu0 %2708
  %2710 = vrot.lane.b32.xlu0 %v2553, 96
  %v2711 = vpop.permute.xlu0 %2710
  %2712 = vrot.lane.b32.xlu0 %v2554, 96
  %v2713 = vpop.permute.xlu0 %2712
  %2714 = vrot.lane.b32.xlu0 %v2555, 96
  %v2715 = vpop.permute.xlu0 %2714
  %2716 = vrot.lane.b32.xlu0 %v2556, 96
  %v2717 = vpop.permute.xlu0 %2716
  %2718 = vrot.lane.b32.xlu0 %v2557, 96
  %v2719 = vpop.permute.xlu0 %2718
  %2720 = vrot.lane.b32.xlu0 %v2558, 96
  %v2721 = vpop.permute.xlu0 %2720
  %2722 = vrot.lane.b32.xlu0 %v2559, 96
  %v2723 = vpop.permute.xlu0 %2722
  %2724 = vrot.lane.b32.xlu0 %v2560, 96
  %v2725 = vpop.permute.xlu0 %2724
  %2726 = vrot.lane.b32.xlu0 %v2561, 96
  %v2727 = vpop.permute.xlu0 %2726
  %2728 = vrot.lane.b32.xlu0 %v2562, 96
  %v2729 = vpop.permute.xlu0 %2728
  %2730 = vrot.lane.b32.xlu0 %v2563, 96
  %v2731 = vpop.permute.xlu0 %2730
  %2732 = vrot.lane.b32.xlu0 %v2564, 96
  %v2733 = vpop.permute.xlu0 %2732
  %2734 = vrot.lane.b32.xlu0 %v2565, 96
  %v2735 = vpop.permute.xlu0 %2734
  %2736 = vrot.lane.b32.xlu0 %v2566, 96
  %v2737 = vpop.permute.xlu0 %2736
  %2738 = vrot.lane.b32.xlu0 %v2567, 96
  %v2739 = vpop.permute.xlu0 %2738
  %2740 = vrot.lane.b32.xlu0 %v2568, 96
  %v2741 = vpop.permute.xlu0 %2740
  %2742 = vrot.lane.b32.xlu0 %v2569, 96
  %v2743 = vpop.permute.xlu0 %2742
  %2744 = vrot.lane.b32.xlu0 %v2570, 96
  %v2745 = vpop.permute.xlu0 %2744
  %2746 = vrot.lane.b32.xlu0 %v2571, 96
  %v2747 = vpop.permute.xlu0 %2746
  %2748 = vrot.lane.b32.xlu0 %v2572, 96
  %v2749 = vpop.permute.xlu0 %2748
  %2750 = vrot.lane.b32.xlu0 %v2573, 96
  %v2751 = vpop.permute.xlu0 %2750
  %2752 = vrot.lane.b32.xlu0 %v2574, 96
  %v2753 = vpop.permute.xlu0 %2752
  %2754 = vrot.lane.b32.xlu0 %v2575, 96
  %v2755 = vpop.permute.xlu0 %2754
  %2756 = vrot.lane.b32.xlu0 %v2576, 96
  %v2757 = vpop.permute.xlu0 %2756
  %2758 = vrot.lane.b32.xlu0 %v2577, 96
  %v2759 = vpop.permute.xlu0 %2758
  %2760 = vrot.lane.b32.xlu0 %v2578, 96
  %v2761 = vpop.permute.xlu0 %2760
  %2762 = vrot.lane.b32.xlu0 %v2579, 96
  %v2763 = vpop.permute.xlu0 %2762
  %2764 = vrot.lane.b32.xlu0 %v2580, 96
  %v2765 = vpop.permute.xlu0 %2764
  %2766 = vrot.lane.b32.xlu0 %v2581, 96
  %v2767 = vpop.permute.xlu0 %2766
  %2768 = vrot.lane.b32.xlu0 %v2582, 96
  %v2769 = vpop.permute.xlu0 %2768
  %2770 = vrot.lane.b32.xlu0 %v2583, 96
  %v2771 = vpop.permute.xlu0 %2770
  %2772 = vrot.lane.b32.xlu0 %v2584, 96
  %v2773 = vpop.permute.xlu0 %2772
  %2774 = vrot.lane.b32.xlu0 %v2585, 96
  %v2775 = vpop.permute.xlu0 %2774
  %2776 = vrot.lane.b32.xlu0 %v2586, 96
  %v2777 = vpop.permute.xlu0 %2776
  %2778 = vrot.lane.b32.xlu0 %v2587, 96
  %v2779 = vpop.permute.xlu0 %2778
  %v2844 = vadd.f32 %v2452, %v2653
  %v2845 = vadd.f32 %v2453, %v2655
  %v2846 = vadd.f32 %v2454, %v2657
  %v2847 = vadd.f32 %v2455, %v2659
  %v2848 = vadd.f32 %v2456, %v2661
  %v2849 = vadd.f32 %v2457, %v2663
  %v2850 = vadd.f32 %v2458, %v2665
  %v2851 = vadd.f32 %v2459, %v2667
  %v2852 = vadd.f32 %v2460, %v2669
  %v2853 = vadd.f32 %v2461, %v2671
  %v2854 = vadd.f32 %v2462, %v2673
  %v2855 = vadd.f32 %v2463, %v2675
  %v2856 = vadd.f32 %v2464, %v2677
  %v2857 = vadd.f32 %v2465, %v2679
  %v2858 = vadd.f32 %v2466, %v2681
  %v2859 = vadd.f32 %v2467, %v2683
  %v2860 = vadd.f32 %v2468, %v2685
  %v2861 = vadd.f32 %v2469, %v2687
  %v2862 = vadd.f32 %v2470, %v2689
  %v2863 = vadd.f32 %v2471, %v2691
  %v2864 = vadd.f32 %v2472, %v2693
  %v2865 = vadd.f32 %v2473, %v2695
  %v2866 = vadd.f32 %v2474, %v2697
  %v2867 = vadd.f32 %v2475, %v2699
  %v2868 = vadd.f32 %v2476, %v2701
  %v2869 = vadd.f32 %v2477, %v2703
  %v2870 = vadd.f32 %v2478, %v2705
  %v2871 = vadd.f32 %v2479, %v2707
  %v2872 = vadd.f32 %v2480, %v2709
  %v2873 = vadd.f32 %v2481, %v2711
  %v2874 = vadd.f32 %v2482, %v2713
  %v2875 = vadd.f32 %v2483, %v2715
  %v2876 = vadd.f32 %v2484, %v2717
  %v2877 = vadd.f32 %v2485, %v2719
  %v2878 = vadd.f32 %v2486, %v2721
  %v2879 = vadd.f32 %v2487, %v2723
  %v2880 = vadd.f32 %v2488, %v2725
  %v2881 = vadd.f32 %v2489, %v2727
  %v2882 = vadd.f32 %v2490, %v2729
  %v2883 = vadd.f32 %v2491, %v2731
  %v2884 = vadd.f32 %v2492, %v2733
  %v2885 = vadd.f32 %v2493, %v2735
  %v2886 = vadd.f32 %v2494, %v2737
  %v2887 = vadd.f32 %v2495, %v2739
  %v2888 = vadd.f32 %v2496, %v2741
  %v2889 = vadd.f32 %v2497, %v2743
  %v2890 = vadd.f32 %v2498, %v2745
  %v2891 = vadd.f32 %v2499, %v2747
  %v2892 = vadd.f32 %v2500, %v2749
  %v2893 = vadd.f32 %v2501, %v2751
  %v2894 = vadd.f32 %v2502, %v2753
  %v2895 = vadd.f32 %v2503, %v2755
  %v2896 = vadd.f32 %v2504, %v2757
  %v2897 = vadd.f32 %v2505, %v2759
  %v2898 = vadd.f32 %v2506, %v2761
  %v2899 = vadd.f32 %v2507, %v2763
  %v2900 = vadd.f32 %v2508, %v2765
  %v2901 = vadd.f32 %v2509, %v2767
  %v2902 = vadd.f32 %v2510, %v2769
  %v2903 = vadd.f32 %v2511, %v2771
  %v2904 = vadd.f32 %v2512, %v2773
  %v2905 = vadd.f32 %v2513, %v2775
  %v2906 = vadd.f32 %v2514, %v2777
  %v2907 = vadd.f32 %v2515, %v2779
  %2908 = vset.pattern.permute.xlu0 2
  %2909 = vperm.xlu0 %2908, %v2343
  %v2910 = vpop.permute.xlu0 %2909
  %2912 = vset.pattern.permute.xlu0 2
  %2913 = vperm.xlu0 %2912, %v2347
  %v2914 = vpop.permute.xlu0 %2913
  %v2916 = vmul.f32 %v2910, %v2348
  %v2917 = vmul.f32 %v2910, %v2349
  %v2918 = vmul.f32 %v2910, %v2350
  %v2919 = vmul.f32 %v2910, %v2351
  %v2920 = vmul.f32 %v2910, %v2352
  %v2921 = vmul.f32 %v2910, %v2353
  %v2922 = vmul.f32 %v2910, %v2354
  %v2923 = vmul.f32 %v2910, %v2355
  %v2924 = vmul.f32 %v2910, %v2356
  %v2925 = vmul.f32 %v2910, %v2357
  %v2926 = vmul.f32 %v2910, %v2358
  %v2927 = vmul.f32 %v2910, %v2359
  %v2928 = vmul.f32 %v2910, %v2360
  %v2929 = vmul.f32 %v2910, %v2361
  %v2930 = vmul.f32 %v2910, %v2362
  %v2931 = vmul.f32 %v2910, %v2363
  %v2932 = vmul.f32 %v2910, %v2364
  %v2933 = vmul.f32 %v2910, %v2365
  %v2934 = vmul.f32 %v2910, %v2366
  %v2935 = vmul.f32 %v2910, %v2367
  %v2936 = vmul.f32 %v2910, %v2368
  %v2937 = vmul.f32 %v2910, %v2369
  %v2938 = vmul.f32 %v2910, %v2370
  %v2939 = vmul.f32 %v2910, %v2371
  %v2940 = vmul.f32 %v2910, %v2372
  %v2941 = vmul.f32 %v2910, %v2373
  %v2942 = vmul.f32 %v2910, %v2374
  %v2943 = vmul.f32 %v2910, %v2375
  %v2944 = vmul.f32 %v2910, %v2376
  %v2945 = vmul.f32 %v2910, %v2377
  %v2946 = vmul.f32 %v2910, %v2378
  %v2947 = vmul.f32 %v2910, %v2379
  %v2948 = vmul.f32 %v2914, %v2348
  %v2949 = vmul.f32 %v2914, %v2349
  %v2950 = vmul.f32 %v2914, %v2350
  %v2951 = vmul.f32 %v2914, %v2351
  %v2952 = vmul.f32 %v2914, %v2352
  %v2953 = vmul.f32 %v2914, %v2353
  %v2954 = vmul.f32 %v2914, %v2354
  %v2955 = vmul.f32 %v2914, %v2355
  %v2956 = vmul.f32 %v2914, %v2356
  %v2957 = vmul.f32 %v2914, %v2357
  %v2958 = vmul.f32 %v2914, %v2358
  %v2959 = vmul.f32 %v2914, %v2359
  %v2960 = vmul.f32 %v2914, %v2360
  %v2961 = vmul.f32 %v2914, %v2361
  %v2962 = vmul.f32 %v2914, %v2362
  %v2963 = vmul.f32 %v2914, %v2363
  %v2964 = vmul.f32 %v2914, %v2364
  %v2965 = vmul.f32 %v2914, %v2365
  %v2966 = vmul.f32 %v2914, %v2366
  %v2967 = vmul.f32 %v2914, %v2367
  %v2968 = vmul.f32 %v2914, %v2368
  %v2969 = vmul.f32 %v2914, %v2369
  %v2970 = vmul.f32 %v2914, %v2370
  %v2971 = vmul.f32 %v2914, %v2371
  %v2972 = vmul.f32 %v2914, %v2372
  %v2973 = vmul.f32 %v2914, %v2373
  %v2974 = vmul.f32 %v2914, %v2374
  %v2975 = vmul.f32 %v2914, %v2375
  %v2976 = vmul.f32 %v2914, %v2376
  %v2977 = vmul.f32 %v2914, %v2377
  %v2978 = vmul.f32 %v2914, %v2378
  %v2979 = vmul.f32 %v2914, %v2379
  %3044 = vrot.lane.b32.xlu0 %v2916, 64
  %v3045 = vpop.permute.xlu0 %3044
  %3046 = vrot.lane.b32.xlu0 %v2917, 64
  %v3047 = vpop.permute.xlu0 %3046
  %3048 = vrot.lane.b32.xlu0 %v2918, 64
  %v3049 = vpop.permute.xlu0 %3048
  %3050 = vrot.lane.b32.xlu0 %v2919, 64
  %v3051 = vpop.permute.xlu0 %3050
  %3052 = vrot.lane.b32.xlu0 %v2920, 64
  %v3053 = vpop.permute.xlu0 %3052
  %3054 = vrot.lane.b32.xlu0 %v2921, 64
  %v3055 = vpop.permute.xlu0 %3054
  %3056 = vrot.lane.b32.xlu0 %v2922, 64
  %v3057 = vpop.permute.xlu0 %3056
  %3058 = vrot.lane.b32.xlu0 %v2923, 64
  %v3059 = vpop.permute.xlu0 %3058
  %3060 = vrot.lane.b32.xlu0 %v2924, 64
  %v3061 = vpop.permute.xlu0 %3060
  %3062 = vrot.lane.b32.xlu0 %v2925, 64
  %v3063 = vpop.permute.xlu0 %3062
  %3064 = vrot.lane.b32.xlu0 %v2926, 64
  %v3065 = vpop.permute.xlu0 %3064
  %3066 = vrot.lane.b32.xlu0 %v2927, 64
  %v3067 = vpop.permute.xlu0 %3066
  %3068 = vrot.lane.b32.xlu0 %v2928, 64
  %v3069 = vpop.permute.xlu0 %3068
  %3070 = vrot.lane.b32.xlu0 %v2929, 64
  %v3071 = vpop.permute.xlu0 %3070
  %3072 = vrot.lane.b32.xlu0 %v2930, 64
  %v3073 = vpop.permute.xlu0 %3072
  %3074 = vrot.lane.b32.xlu0 %v2931, 64
  %v3075 = vpop.permute.xlu0 %3074
  %3076 = vrot.lane.b32.xlu0 %v2932, 64
  %v3077 = vpop.permute.xlu0 %3076
  %3078 = vrot.lane.b32.xlu0 %v2933, 64
  %v3079 = vpop.permute.xlu0 %3078
  %3080 = vrot.lane.b32.xlu0 %v2934, 64
  %v3081 = vpop.permute.xlu0 %3080
  %3082 = vrot.lane.b32.xlu0 %v2935, 64
  %v3083 = vpop.permute.xlu0 %3082
  %3084 = vrot.lane.b32.xlu0 %v2936, 64
  %v3085 = vpop.permute.xlu0 %3084
  %3086 = vrot.lane.b32.xlu0 %v2937, 64
  %v3087 = vpop.permute.xlu0 %3086
  %3088 = vrot.lane.b32.xlu0 %v2938, 64
  %v3089 = vpop.permute.xlu0 %3088
  %3090 = vrot.lane.b32.xlu0 %v2939, 64
  %v3091 = vpop.permute.xlu0 %3090
  %3092 = vrot.lane.b32.xlu0 %v2940, 64
  %v3093 = vpop.permute.xlu0 %3092
  %3094 = vrot.lane.b32.xlu0 %v2941, 64
  %v3095 = vpop.permute.xlu0 %3094
  %3096 = vrot.lane.b32.xlu0 %v2942, 64
  %v3097 = vpop.permute.xlu0 %3096
  %3098 = vrot.lane.b32.xlu0 %v2943, 64
  %v3099 = vpop.permute.xlu0 %3098
  %3100 = vrot.lane.b32.xlu0 %v2944, 64
  %v3101 = vpop.permute.xlu0 %3100
  %3102 = vrot.lane.b32.xlu0 %v2945, 64
  %v3103 = vpop.permute.xlu0 %3102
  %3104 = vrot.lane.b32.xlu0 %v2946, 64
  %v3105 = vpop.permute.xlu0 %3104
  %3106 = vrot.lane.b32.xlu0 %v2947, 64
  %v3107 = vpop.permute.xlu0 %3106
  %3108 = vrot.lane.b32.xlu0 %v2948, 64
  %v3109 = vpop.permute.xlu0 %3108
  %3110 = vrot.lane.b32.xlu0 %v2949, 64
  %v3111 = vpop.permute.xlu0 %3110
  %3112 = vrot.lane.b32.xlu0 %v2950, 64
  %v3113 = vpop.permute.xlu0 %3112
  %3114 = vrot.lane.b32.xlu0 %v2951, 64
  %v3115 = vpop.permute.xlu0 %3114
  %3116 = vrot.lane.b32.xlu0 %v2952, 64
  %v3117 = vpop.permute.xlu0 %3116
  %3118 = vrot.lane.b32.xlu0 %v2953, 64
  %v3119 = vpop.permute.xlu0 %3118
  %3120 = vrot.lane.b32.xlu0 %v2954, 64
  %v3121 = vpop.permute.xlu0 %3120
  %3122 = vrot.lane.b32.xlu0 %v2955, 64
  %v3123 = vpop.permute.xlu0 %3122
  %3124 = vrot.lane.b32.xlu0 %v2956, 64
  %v3125 = vpop.permute.xlu0 %3124
  %3126 = vrot.lane.b32.xlu0 %v2957, 64
  %v3127 = vpop.permute.xlu0 %3126
  %3128 = vrot.lane.b32.xlu0 %v2958, 64
  %v3129 = vpop.permute.xlu0 %3128
  %3130 = vrot.lane.b32.xlu0 %v2959, 64
  %v3131 = vpop.permute.xlu0 %3130
  %3132 = vrot.lane.b32.xlu0 %v2960, 64
  %v3133 = vpop.permute.xlu0 %3132
  %3134 = vrot.lane.b32.xlu0 %v2961, 64
  %v3135 = vpop.permute.xlu0 %3134
  %3136 = vrot.lane.b32.xlu0 %v2962, 64
  %v3137 = vpop.permute.xlu0 %3136
  %3138 = vrot.lane.b32.xlu0 %v2963, 64
  %v3139 = vpop.permute.xlu0 %3138
  %3140 = vrot.lane.b32.xlu0 %v2964, 64
  %v3141 = vpop.permute.xlu0 %3140
  %3142 = vrot.lane.b32.xlu0 %v2965, 64
  %v3143 = vpop.permute.xlu0 %3142
  %3144 = vrot.lane.b32.xlu0 %v2966, 64
  %v3145 = vpop.permute.xlu0 %3144
  %3146 = vrot.lane.b32.xlu0 %v2967, 64
  %v3147 = vpop.permute.xlu0 %3146
  %3148 = vrot.lane.b32.xlu0 %v2968, 64
  %v3149 = vpop.permute.xlu0 %3148
  %3150 = vrot.lane.b32.xlu0 %v2969, 64
  %v3151 = vpop.permute.xlu0 %3150
  %3152 = vrot.lane.b32.xlu0 %v2970, 64
  %v3153 = vpop.permute.xlu0 %3152
  %3154 = vrot.lane.b32.xlu0 %v2971, 64
  %v3155 = vpop.permute.xlu0 %3154
  %3156 = vrot.lane.b32.xlu0 %v2972, 64
  %v3157 = vpop.permute.xlu0 %3156
  %3158 = vrot.lane.b32.xlu0 %v2973, 64
  %v3159 = vpop.permute.xlu0 %3158
  %3160 = vrot.lane.b32.xlu0 %v2974, 64
  %v3161 = vpop.permute.xlu0 %3160
  %3162 = vrot.lane.b32.xlu0 %v2975, 64
  %v3163 = vpop.permute.xlu0 %3162
  %3164 = vrot.lane.b32.xlu0 %v2976, 64
  %v3165 = vpop.permute.xlu0 %3164
  %3166 = vrot.lane.b32.xlu0 %v2977, 64
  %v3167 = vpop.permute.xlu0 %3166
  %3168 = vrot.lane.b32.xlu0 %v2978, 64
  %v3169 = vpop.permute.xlu0 %3168
  %3170 = vrot.lane.b32.xlu0 %v2979, 64
  %v3171 = vpop.permute.xlu0 %3170
  %v3236 = vadd.f32 %v2844, %v3045
  %v3237 = vadd.f32 %v2845, %v3047
  %v3238 = vadd.f32 %v2846, %v3049
  %v3239 = vadd.f32 %v2847, %v3051
  %v3240 = vadd.f32 %v2848, %v3053
  %v3241 = vadd.f32 %v2849, %v3055
  %v3242 = vadd.f32 %v2850, %v3057
  %v3243 = vadd.f32 %v2851, %v3059
  %v3244 = vadd.f32 %v2852, %v3061
  %v3245 = vadd.f32 %v2853, %v3063
  %v3246 = vadd.f32 %v2854, %v3065
  %v3247 = vadd.f32 %v2855, %v3067
  %v3248 = vadd.f32 %v2856, %v3069
  %v3249 = vadd.f32 %v2857, %v3071
  %v3250 = vadd.f32 %v2858, %v3073
  %v3251 = vadd.f32 %v2859, %v3075
  %v3252 = vadd.f32 %v2860, %v3077
  %v3253 = vadd.f32 %v2861, %v3079
  %v3254 = vadd.f32 %v2862, %v3081
  %v3255 = vadd.f32 %v2863, %v3083
  %v3256 = vadd.f32 %v2864, %v3085
  %v3257 = vadd.f32 %v2865, %v3087
  %v3258 = vadd.f32 %v2866, %v3089
  %v3259 = vadd.f32 %v2867, %v3091
  %v3260 = vadd.f32 %v2868, %v3093
  %v3261 = vadd.f32 %v2869, %v3095
  %v3262 = vadd.f32 %v2870, %v3097
  %v3263 = vadd.f32 %v2871, %v3099
  %v3264 = vadd.f32 %v2872, %v3101
  %v3265 = vadd.f32 %v2873, %v3103
  %v3266 = vadd.f32 %v2874, %v3105
  %v3267 = vadd.f32 %v2875, %v3107
  %v3268 = vadd.f32 %v2876, %v3109
  %v3269 = vadd.f32 %v2877, %v3111
  %v3270 = vadd.f32 %v2878, %v3113
  %v3271 = vadd.f32 %v2879, %v3115
  %v3272 = vadd.f32 %v2880, %v3117
  %v3273 = vadd.f32 %v2881, %v3119
  %v3274 = vadd.f32 %v2882, %v3121
  %v3275 = vadd.f32 %v2883, %v3123
  %v3276 = vadd.f32 %v2884, %v3125
  %v3277 = vadd.f32 %v2885, %v3127
  %v3278 = vadd.f32 %v2886, %v3129
  %v3279 = vadd.f32 %v2887, %v3131
  %v3280 = vadd.f32 %v2888, %v3133
  %v3281 = vadd.f32 %v2889, %v3135
  %v3282 = vadd.f32 %v2890, %v3137
  %v3283 = vadd.f32 %v2891, %v3139
  %v3284 = vadd.f32 %v2892, %v3141
  %v3285 = vadd.f32 %v2893, %v3143
  %v3286 = vadd.f32 %v2894, %v3145
  %v3287 = vadd.f32 %v2895, %v3147
  %v3288 = vadd.f32 %v2896, %v3149
  %v3289 = vadd.f32 %v2897, %v3151
  %v3290 = vadd.f32 %v2898, %v3153
  %v3291 = vadd.f32 %v2899, %v3155
  %v3292 = vadd.f32 %v2900, %v3157
  %v3293 = vadd.f32 %v2901, %v3159
  %v3294 = vadd.f32 %v2902, %v3161
  %v3295 = vadd.f32 %v2903, %v3163
  %v3296 = vadd.f32 %v2904, %v3165
  %v3297 = vadd.f32 %v2905, %v3167
  %v3298 = vadd.f32 %v2906, %v3169
  %v3299 = vadd.f32 %v2907, %v3171
  %3300 = vset.pattern.permute.xlu0 3
  %3301 = vperm.xlu0 %3300, %v2343
  %v3302 = vpop.permute.xlu0 %3301
  %3304 = vset.pattern.permute.xlu0 3
  %3305 = vperm.xlu0 %3304, %v2347
  %v3306 = vpop.permute.xlu0 %3305
  %v3308 = vmul.f32 %v3302, %v2348
  %v3309 = vmul.f32 %v3302, %v2349
  %v3310 = vmul.f32 %v3302, %v2350
  %v3311 = vmul.f32 %v3302, %v2351
  %v3312 = vmul.f32 %v3302, %v2352
  %v3313 = vmul.f32 %v3302, %v2353
  %v3314 = vmul.f32 %v3302, %v2354
  %v3315 = vmul.f32 %v3302, %v2355
  %v3316 = vmul.f32 %v3302, %v2356
  %v3317 = vmul.f32 %v3302, %v2357
  %v3318 = vmul.f32 %v3302, %v2358
  %v3319 = vmul.f32 %v3302, %v2359
  %v3320 = vmul.f32 %v3302, %v2360
  %v3321 = vmul.f32 %v3302, %v2361
  %v3322 = vmul.f32 %v3302, %v2362
  %v3323 = vmul.f32 %v3302, %v2363
  %v3324 = vmul.f32 %v3302, %v2364
  %v3325 = vmul.f32 %v3302, %v2365
  %v3326 = vmul.f32 %v3302, %v2366
  %v3327 = vmul.f32 %v3302, %v2367
  %v3328 = vmul.f32 %v3302, %v2368
  %v3329 = vmul.f32 %v3302, %v2369
  %v3330 = vmul.f32 %v3302, %v2370
  %v3331 = vmul.f32 %v3302, %v2371
  %v3332 = vmul.f32 %v3302, %v2372
  %v3333 = vmul.f32 %v3302, %v2373
  %v3334 = vmul.f32 %v3302, %v2374
  %v3335 = vmul.f32 %v3302, %v2375
  %v3336 = vmul.f32 %v3302, %v2376
  %v3337 = vmul.f32 %v3302, %v2377
  %v3338 = vmul.f32 %v3302, %v2378
  %v3339 = vmul.f32 %v3302, %v2379
  %v3340 = vmul.f32 %v3306, %v2348
  %v3341 = vmul.f32 %v3306, %v2349
  %v3342 = vmul.f32 %v3306, %v2350
  %v3343 = vmul.f32 %v3306, %v2351
  %v3344 = vmul.f32 %v3306, %v2352
  %v3345 = vmul.f32 %v3306, %v2353
  %v3346 = vmul.f32 %v3306, %v2354
  %v3347 = vmul.f32 %v3306, %v2355
  %v3348 = vmul.f32 %v3306, %v2356
  %v3349 = vmul.f32 %v3306, %v2357
  %v3350 = vmul.f32 %v3306, %v2358
  %v3351 = vmul.f32 %v3306, %v2359
  %v3352 = vmul.f32 %v3306, %v2360
  %v3353 = vmul.f32 %v3306, %v2361
  %v3354 = vmul.f32 %v3306, %v2362
  %v3355 = vmul.f32 %v3306, %v2363
  %v3356 = vmul.f32 %v3306, %v2364
  %v3357 = vmul.f32 %v3306, %v2365
  %v3358 = vmul.f32 %v3306, %v2366
  %v3359 = vmul.f32 %v3306, %v2367
  %v3360 = vmul.f32 %v3306, %v2368
  %v3361 = vmul.f32 %v3306, %v2369
  %v3362 = vmul.f32 %v3306, %v2370
  %v3363 = vmul.f32 %v3306, %v2371
  %v3364 = vmul.f32 %v3306, %v2372
  %v3365 = vmul.f32 %v3306, %v2373
  %v3366 = vmul.f32 %v3306, %v2374
  %v3367 = vmul.f32 %v3306, %v2375
  %v3368 = vmul.f32 %v3306, %v2376
  %v3369 = vmul.f32 %v3306, %v2377
  %v3370 = vmul.f32 %v3306, %v2378
  %v3371 = vmul.f32 %v3306, %v2379
  %3436 = vrot.lane.b32.xlu0 %v3308, 32
  %v3437 = vpop.permute.xlu0 %3436
  %3438 = vrot.lane.b32.xlu0 %v3309, 32
  %v3439 = vpop.permute.xlu0 %3438
  %3440 = vrot.lane.b32.xlu0 %v3310, 32
  %v3441 = vpop.permute.xlu0 %3440
  %3442 = vrot.lane.b32.xlu0 %v3311, 32
  %v3443 = vpop.permute.xlu0 %3442
  %3444 = vrot.lane.b32.xlu0 %v3312, 32
  %v3445 = vpop.permute.xlu0 %3444
  %3446 = vrot.lane.b32.xlu0 %v3313, 32
  %v3447 = vpop.permute.xlu0 %3446
  %3448 = vrot.lane.b32.xlu0 %v3314, 32
  %v3449 = vpop.permute.xlu0 %3448
  %3450 = vrot.lane.b32.xlu0 %v3315, 32
  %v3451 = vpop.permute.xlu0 %3450
  %3452 = vrot.lane.b32.xlu0 %v3316, 32
  %v3453 = vpop.permute.xlu0 %3452
  %3454 = vrot.lane.b32.xlu0 %v3317, 32
  %v3455 = vpop.permute.xlu0 %3454
  %3456 = vrot.lane.b32.xlu0 %v3318, 32
  %v3457 = vpop.permute.xlu0 %3456
  %3458 = vrot.lane.b32.xlu0 %v3319, 32
  %v3459 = vpop.permute.xlu0 %3458
  %3460 = vrot.lane.b32.xlu0 %v3320, 32
  %v3461 = vpop.permute.xlu0 %3460
  %3462 = vrot.lane.b32.xlu0 %v3321, 32
  %v3463 = vpop.permute.xlu0 %3462
  %3464 = vrot.lane.b32.xlu0 %v3322, 32
  %v3465 = vpop.permute.xlu0 %3464
  %3466 = vrot.lane.b32.xlu0 %v3323, 32
  %v3467 = vpop.permute.xlu0 %3466
  %3468 = vrot.lane.b32.xlu0 %v3324, 32
  %v3469 = vpop.permute.xlu0 %3468
  %3470 = vrot.lane.b32.xlu0 %v3325, 32
  %v3471 = vpop.permute.xlu0 %3470
  %3472 = vrot.lane.b32.xlu0 %v3326, 32
  %v3473 = vpop.permute.xlu0 %3472
  %3474 = vrot.lane.b32.xlu0 %v3327, 32
  %v3475 = vpop.permute.xlu0 %3474
  %3476 = vrot.lane.b32.xlu0 %v3328, 32
  %v3477 = vpop.permute.xlu0 %3476
  %3478 = vrot.lane.b32.xlu0 %v3329, 32
  %v3479 = vpop.permute.xlu0 %3478
  %3480 = vrot.lane.b32.xlu0 %v3330, 32
  %v3481 = vpop.permute.xlu0 %3480
  %3482 = vrot.lane.b32.xlu0 %v3331, 32
  %v3483 = vpop.permute.xlu0 %3482
  %3484 = vrot.lane.b32.xlu0 %v3332, 32
  %v3485 = vpop.permute.xlu0 %3484
  %3486 = vrot.lane.b32.xlu0 %v3333, 32
  %v3487 = vpop.permute.xlu0 %3486
  %3488 = vrot.lane.b32.xlu0 %v3334, 32
  %v3489 = vpop.permute.xlu0 %3488
  %3490 = vrot.lane.b32.xlu0 %v3335, 32
  %v3491 = vpop.permute.xlu0 %3490
  %3492 = vrot.lane.b32.xlu0 %v3336, 32
  %v3493 = vpop.permute.xlu0 %3492
  %3494 = vrot.lane.b32.xlu0 %v3337, 32
  %v3495 = vpop.permute.xlu0 %3494
  %3496 = vrot.lane.b32.xlu0 %v3338, 32
  %v3497 = vpop.permute.xlu0 %3496
  %3498 = vrot.lane.b32.xlu0 %v3339, 32
  %v3499 = vpop.permute.xlu0 %3498
  %3500 = vrot.lane.b32.xlu0 %v3340, 32
  %v3501 = vpop.permute.xlu0 %3500
  %3502 = vrot.lane.b32.xlu0 %v3341, 32
  %v3503 = vpop.permute.xlu0 %3502
  %3504 = vrot.lane.b32.xlu0 %v3342, 32
  %v3505 = vpop.permute.xlu0 %3504
  %3506 = vrot.lane.b32.xlu0 %v3343, 32
  %v3507 = vpop.permute.xlu0 %3506
  %3508 = vrot.lane.b32.xlu0 %v3344, 32
  %v3509 = vpop.permute.xlu0 %3508
  %3510 = vrot.lane.b32.xlu0 %v3345, 32
  %v3511 = vpop.permute.xlu0 %3510
  %3512 = vrot.lane.b32.xlu0 %v3346, 32
  %v3513 = vpop.permute.xlu0 %3512
  %3514 = vrot.lane.b32.xlu0 %v3347, 32
  %v3515 = vpop.permute.xlu0 %3514
  %3516 = vrot.lane.b32.xlu0 %v3348, 32
  %v3517 = vpop.permute.xlu0 %3516
  %3518 = vrot.lane.b32.xlu0 %v3349, 32
  %v3519 = vpop.permute.xlu0 %3518
  %3520 = vrot.lane.b32.xlu0 %v3350, 32
  %v3521 = vpop.permute.xlu0 %3520
  %3522 = vrot.lane.b32.xlu0 %v3351, 32
  %v3523 = vpop.permute.xlu0 %3522
  %3524 = vrot.lane.b32.xlu0 %v3352, 32
  %v3525 = vpop.permute.xlu0 %3524
  %3526 = vrot.lane.b32.xlu0 %v3353, 32
  %v3527 = vpop.permute.xlu0 %3526
  %3528 = vrot.lane.b32.xlu0 %v3354, 32
  %v3529 = vpop.permute.xlu0 %3528
  %3530 = vrot.lane.b32.xlu0 %v3355, 32
  %v3531 = vpop.permute.xlu0 %3530
  %3532 = vrot.lane.b32.xlu0 %v3356, 32
  %v3533 = vpop.permute.xlu0 %3532
  %3534 = vrot.lane.b32.xlu0 %v3357, 32
  %v3535 = vpop.permute.xlu0 %3534
  %3536 = vrot.lane.b32.xlu0 %v3358, 32
  %v3537 = vpop.permute.xlu0 %3536
  %3538 = vrot.lane.b32.xlu0 %v3359, 32
  %v3539 = vpop.permute.xlu0 %3538
  %3540 = vrot.lane.b32.xlu0 %v3360, 32
  %v3541 = vpop.permute.xlu0 %3540
  %3542 = vrot.lane.b32.xlu0 %v3361, 32
  %v3543 = vpop.permute.xlu0 %3542
  %3544 = vrot.lane.b32.xlu0 %v3362, 32
  %v3545 = vpop.permute.xlu0 %3544
  %3546 = vrot.lane.b32.xlu0 %v3363, 32
  %v3547 = vpop.permute.xlu0 %3546
  %3548 = vrot.lane.b32.xlu0 %v3364, 32
  %v3549 = vpop.permute.xlu0 %3548
  %3550 = vrot.lane.b32.xlu0 %v3365, 32
  %v3551 = vpop.permute.xlu0 %3550
  %3552 = vrot.lane.b32.xlu0 %v3366, 32
  %v3553 = vpop.permute.xlu0 %3552
  %3554 = vrot.lane.b32.xlu0 %v3367, 32
  %v3555 = vpop.permute.xlu0 %3554
  %3556 = vrot.lane.b32.xlu0 %v3368, 32
  %v3557 = vpop.permute.xlu0 %3556
  %3558 = vrot.lane.b32.xlu0 %v3369, 32
  %v3559 = vpop.permute.xlu0 %3558
  %3560 = vrot.lane.b32.xlu0 %v3370, 32
  %v3561 = vpop.permute.xlu0 %3560
  %3562 = vrot.lane.b32.xlu0 %v3371, 32
  %v3563 = vpop.permute.xlu0 %3562
  %v3628 = vadd.f32 %v3236, %v3437
  %v3629 = vadd.f32 %v3237, %v3439
  %v3630 = vadd.f32 %v3238, %v3441
  %v3631 = vadd.f32 %v3239, %v3443
  %v3632 = vadd.f32 %v3240, %v3445
  %v3633 = vadd.f32 %v3241, %v3447
  %v3634 = vadd.f32 %v3242, %v3449
  %v3635 = vadd.f32 %v3243, %v3451
  %v3636 = vadd.f32 %v3244, %v3453
  %v3637 = vadd.f32 %v3245, %v3455
  %v3638 = vadd.f32 %v3246, %v3457
  %v3639 = vadd.f32 %v3247, %v3459
  %v3640 = vadd.f32 %v3248, %v3461
  %v3641 = vadd.f32 %v3249, %v3463
  %v3642 = vadd.f32 %v3250, %v3465
  %v3643 = vadd.f32 %v3251, %v3467
  %v3644 = vadd.f32 %v3252, %v3469
  %v3645 = vadd.f32 %v3253, %v3471
  %v3646 = vadd.f32 %v3254, %v3473
  %v3647 = vadd.f32 %v3255, %v3475
  %v3648 = vadd.f32 %v3256, %v3477
  %v3649 = vadd.f32 %v3257, %v3479
  %v3650 = vadd.f32 %v3258, %v3481
  %v3651 = vadd.f32 %v3259, %v3483
  %v3652 = vadd.f32 %v3260, %v3485
  %v3653 = vadd.f32 %v3261, %v3487
  %v3654 = vadd.f32 %v3262, %v3489
  %v3655 = vadd.f32 %v3263, %v3491
  %v3656 = vadd.f32 %v3264, %v3493
  %v3657 = vadd.f32 %v3265, %v3495
  %v3658 = vadd.f32 %v3266, %v3497
  %v3659 = vadd.f32 %v3267, %v3499
  %v3660 = vadd.f32 %v3268, %v3501
  %v3661 = vadd.f32 %v3269, %v3503
  %v3662 = vadd.f32 %v3270, %v3505
  %v3663 = vadd.f32 %v3271, %v3507
  %v3664 = vadd.f32 %v3272, %v3509
  %v3665 = vadd.f32 %v3273, %v3511
  %v3666 = vadd.f32 %v3274, %v3513
  %v3667 = vadd.f32 %v3275, %v3515
  %v3668 = vadd.f32 %v3276, %v3517
  %v3669 = vadd.f32 %v3277, %v3519
  %v3670 = vadd.f32 %v3278, %v3521
  %v3671 = vadd.f32 %v3279, %v3523
  %v3672 = vadd.f32 %v3280, %v3525
  %v3673 = vadd.f32 %v3281, %v3527
  %v3674 = vadd.f32 %v3282, %v3529
  %v3675 = vadd.f32 %v3283, %v3531
  %v3676 = vadd.f32 %v3284, %v3533
  %v3677 = vadd.f32 %v3285, %v3535
  %v3678 = vadd.f32 %v3286, %v3537
  %v3679 = vadd.f32 %v3287, %v3539
  %v3680 = vadd.f32 %v3288, %v3541
  %v3681 = vadd.f32 %v3289, %v3543
  %v3682 = vadd.f32 %v3290, %v3545
  %v3683 = vadd.f32 %v3291, %v3547
  %v3684 = vadd.f32 %v3292, %v3549
  %v3685 = vadd.f32 %v3293, %v3551
  %v3686 = vadd.f32 %v3294, %v3553
  %v3687 = vadd.f32 %v3295, %v3555
  %v3688 = vadd.f32 %v3296, %v3557
  %v3689 = vadd.f32 %v3297, %v3559
  %v3690 = vadd.f32 %v3298, %v3561
  %v3691 = vadd.f32 %v3299, %v3563
  %vm3692 = vcmp.gt.f32.partialorder %v3628, 0.0
  %vm3693 = vcmp.gt.f32.partialorder %v3629, 0.0
  %vm3694 = vcmp.gt.f32.partialorder %v3630, 0.0
  %vm3695 = vcmp.gt.f32.partialorder %v3631, 0.0
  %vm3696 = vcmp.gt.f32.partialorder %v3632, 0.0
  %vm3697 = vcmp.gt.f32.partialorder %v3633, 0.0
  %vm3698 = vcmp.gt.f32.partialorder %v3634, 0.0
  %vm3699 = vcmp.gt.f32.partialorder %v3635, 0.0
  %vm3700 = vcmp.gt.f32.partialorder %v3636, 0.0
  %vm3701 = vcmp.gt.f32.partialorder %v3637, 0.0
  %vm3702 = vcmp.gt.f32.partialorder %v3638, 0.0
  %vm3703 = vcmp.gt.f32.partialorder %v3639, 0.0
  %vm3704 = vcmp.gt.f32.partialorder %v3640, 0.0
  %vm3705 = vcmp.gt.f32.partialorder %v3641, 0.0
  %vm3706 = vcmp.gt.f32.partialorder %v3642, 0.0
  %vm3707 = vcmp.gt.f32.partialorder %v3643, 0.0
  %vm3708 = vcmp.gt.f32.partialorder %v3644, 0.0
  %vm3709 = vcmp.gt.f32.partialorder %v3645, 0.0
  %vm3710 = vcmp.gt.f32.partialorder %v3646, 0.0
  %vm3711 = vcmp.gt.f32.partialorder %v3647, 0.0
  %vm3712 = vcmp.gt.f32.partialorder %v3648, 0.0
  %vm3713 = vcmp.gt.f32.partialorder %v3649, 0.0
  %vm3714 = vcmp.gt.f32.partialorder %v3650, 0.0
  %vm3715 = vcmp.gt.f32.partialorder %v3651, 0.0
  %vm3716 = vcmp.gt.f32.partialorder %v3652, 0.0
  %vm3717 = vcmp.gt.f32.partialorder %v3653, 0.0
  %vm3718 = vcmp.gt.f32.partialorder %v3654, 0.0
  %vm3719 = vcmp.gt.f32.partialorder %v3655, 0.0
  %vm3720 = vcmp.gt.f32.partialorder %v3656, 0.0
  %vm3721 = vcmp.gt.f32.partialorder %v3657, 0.0
  %vm3722 = vcmp.gt.f32.partialorder %v3658, 0.0
  %vm3723 = vcmp.gt.f32.partialorder %v3659, 0.0
  %vm3724 = vcmp.gt.f32.partialorder %v3660, 0.0
  %vm3725 = vcmp.gt.f32.partialorder %v3661, 0.0
  %vm3726 = vcmp.gt.f32.partialorder %v3662, 0.0
  %vm3727 = vcmp.gt.f32.partialorder %v3663, 0.0
  %vm3728 = vcmp.gt.f32.partialorder %v3664, 0.0
  %vm3729 = vcmp.gt.f32.partialorder %v3665, 0.0
  %vm3730 = vcmp.gt.f32.partialorder %v3666, 0.0
  %vm3731 = vcmp.gt.f32.partialorder %v3667, 0.0
  %vm3732 = vcmp.gt.f32.partialorder %v3668, 0.0
  %vm3733 = vcmp.gt.f32.partialorder %v3669, 0.0
  %vm3734 = vcmp.gt.f32.partialorder %v3670, 0.0
  %vm3735 = vcmp.gt.f32.partialorder %v3671, 0.0
  %vm3736 = vcmp.gt.f32.partialorder %v3672, 0.0
  %vm3737 = vcmp.gt.f32.partialorder %v3673, 0.0
  %vm3738 = vcmp.gt.f32.partialorder %v3674, 0.0
  %vm3739 = vcmp.gt.f32.partialorder %v3675, 0.0
  %vm3740 = vcmp.gt.f32.partialorder %v3676, 0.0
  %vm3741 = vcmp.gt.f32.partialorder %v3677, 0.0
  %vm3742 = vcmp.gt.f32.partialorder %v3678, 0.0
  %vm3743 = vcmp.gt.f32.partialorder %v3679, 0.0
  %vm3744 = vcmp.gt.f32.partialorder %v3680, 0.0
  %vm3745 = vcmp.gt.f32.partialorder %v3681, 0.0
  %vm3746 = vcmp.gt.f32.partialorder %v3682, 0.0
  %vm3747 = vcmp.gt.f32.partialorder %v3683, 0.0
  %vm3748 = vcmp.gt.f32.partialorder %v3684, 0.0
  %vm3749 = vcmp.gt.f32.partialorder %v3685, 0.0
  %vm3750 = vcmp.gt.f32.partialorder %v3686, 0.0
  %vm3751 = vcmp.gt.f32.partialorder %v3687, 0.0
  %vm3752 = vcmp.gt.f32.partialorder %v3688, 0.0
  %vm3753 = vcmp.gt.f32.partialorder %v3689, 0.0
  %vm3754 = vcmp.gt.f32.partialorder %v3690, 0.0
  %vm3755 = vcmp.gt.f32.partialorder %v3691, 0.0
  %v3756 = vmul.f32 %v3628, 0.2
  %v3757 = vmul.f32 %v3629, 0.2
  %v3758 = vmul.f32 %v3630, 0.2
  %v3759 = vmul.f32 %v3631, 0.2
  %v3760 = vmul.f32 %v3632, 0.2
  %v3761 = vmul.f32 %v3633, 0.2
  %v3762 = vmul.f32 %v3634, 0.2
  %v3763 = vmul.f32 %v3635, 0.2
  %v3764 = vmul.f32 %v3636, 0.2
  %v3765 = vmul.f32 %v3637, 0.2
  %v3766 = vmul.f32 %v3638, 0.2
  %v3767 = vmul.f32 %v3639, 0.2
  %v3768 = vmul.f32 %v3640, 0.2
  %v3769 = vmul.f32 %v3641, 0.2
  %v3770 = vmul.f32 %v3642, 0.2
  %v3771 = vmul.f32 %v3643, 0.2
  %v3772 = vmul.f32 %v3644, 0.2
  %v3773 = vmul.f32 %v3645, 0.2
  %v3774 = vmul.f32 %v3646, 0.2
  %v3775 = vmul.f32 %v3647, 0.2
  %v3776 = vmul.f32 %v3648, 0.2
  %v3777 = vmul.f32 %v3649, 0.2
  %v3778 = vmul.f32 %v3650, 0.2
  %v3779 = vmul.f32 %v3651, 0.2
  %v3780 = vmul.f32 %v3652, 0.2
  %v3781 = vmul.f32 %v3653, 0.2
  %v3782 = vmul.f32 %v3654, 0.2
  %v3783 = vmul.f32 %v3655, 0.2
  %v3784 = vmul.f32 %v3656, 0.2
  %v3785 = vmul.f32 %v3657, 0.2
  %v3786 = vmul.f32 %v3658, 0.2
  %v3787 = vmul.f32 %v3659, 0.2
  %v3788 = vmul.f32 %v3660, 0.2
  %v3789 = vmul.f32 %v3661, 0.2
  %v3790 = vmul.f32 %v3662, 0.2
  %v3791 = vmul.f32 %v3663, 0.2
  %v3792 = vmul.f32 %v3664, 0.2
  %v3793 = vmul.f32 %v3665, 0.2
  %v3794 = vmul.f32 %v3666, 0.2
  %v3795 = vmul.f32 %v3667, 0.2
  %v3796 = vmul.f32 %v3668, 0.2
  %v3797 = vmul.f32 %v3669, 0.2
  %v3798 = vmul.f32 %v3670, 0.2
  %v3799 = vmul.f32 %v3671, 0.2
  %v3800 = vmul.f32 %v3672, 0.2
  %v3801 = vmul.f32 %v3673, 0.2
  %v3802 = vmul.f32 %v3674, 0.2
  %v3803 = vmul.f32 %v3675, 0.2
  %v3804 = vmul.f32 %v3676, 0.2
  %v3805 = vmul.f32 %v3677, 0.2
  %v3806 = vmul.f32 %v3678, 0.2
  %v3807 = vmul.f32 %v3679, 0.2
  %v3808 = vmul.f32 %v3680, 0.2
  %v3809 = vmul.f32 %v3681, 0.2
  %v3810 = vmul.f32 %v3682, 0.2
  %v3811 = vmul.f32 %v3683, 0.2
  %v3812 = vmul.f32 %v3684, 0.2
  %v3813 = vmul.f32 %v3685, 0.2
  %v3814 = vmul.f32 %v3686, 0.2
  %v3815 = vmul.f32 %v3687, 0.2
  %v3816 = vmul.f32 %v3688, 0.2
  %v3817 = vmul.f32 %v3689, 0.2
  %v3818 = vmul.f32 %v3690, 0.2
  %v3819 = vmul.f32 %v3691, 0.2
  %v3820 = vsel %vm3692, %v3628, %v3756
  %v3821 = vsel %vm3693, %v3629, %v3757
  %v3822 = vsel %vm3694, %v3630, %v3758
  %v3823 = vsel %vm3695, %v3631, %v3759
  %v3824 = vsel %vm3696, %v3632, %v3760
  %v3825 = vsel %vm3697, %v3633, %v3761
  %v3826 = vsel %vm3698, %v3634, %v3762
  %v3827 = vsel %vm3699, %v3635, %v3763
  %v3828 = vsel %vm3700, %v3636, %v3764
  %v3829 = vsel %vm3701, %v3637, %v3765
  %v3830 = vsel %vm3702, %v3638, %v3766
  %v3831 = vsel %vm3703, %v3639, %v3767
  %v3832 = vsel %vm3704, %v3640, %v3768
  %v3833 = vsel %vm3705, %v3641, %v3769
  %v3834 = vsel %vm3706, %v3642, %v3770
  %v3835 = vsel %vm3707, %v3643, %v3771
  %v3836 = vsel %vm3708, %v3644, %v3772
  %v3837 = vsel %vm3709, %v3645, %v3773
  %v3838 = vsel %vm3710, %v3646, %v3774
  %v3839 = vsel %vm3711, %v3647, %v3775
  %v3840 = vsel %vm3712, %v3648, %v3776
  %v3841 = vsel %vm3713, %v3649, %v3777
  %v3842 = vsel %vm3714, %v3650, %v3778
  %v3843 = vsel %vm3715, %v3651, %v3779
  %v3844 = vsel %vm3716, %v3652, %v3780
  %v3845 = vsel %vm3717, %v3653, %v3781
  %v3846 = vsel %vm3718, %v3654, %v3782
  %v3847 = vsel %vm3719, %v3655, %v3783
  %v3848 = vsel %vm3720, %v3656, %v3784
  %v3849 = vsel %vm3721, %v3657, %v3785
  %v3850 = vsel %vm3722, %v3658, %v3786
  %v3851 = vsel %vm3723, %v3659, %v3787
  %v3852 = vsel %vm3724, %v3660, %v3788
  %v3853 = vsel %vm3725, %v3661, %v3789
  %v3854 = vsel %vm3726, %v3662, %v3790
  %v3855 = vsel %vm3727, %v3663, %v3791
  %v3856 = vsel %vm3728, %v3664, %v3792
  %v3857 = vsel %vm3729, %v3665, %v3793
  %v3858 = vsel %vm3730, %v3666, %v3794
  %v3859 = vsel %vm3731, %v3667, %v3795
  %v3860 = vsel %vm3732, %v3668, %v3796
  %v3861 = vsel %vm3733, %v3669, %v3797
  %v3862 = vsel %vm3734, %v3670, %v3798
  %v3863 = vsel %vm3735, %v3671, %v3799
  %v3864 = vsel %vm3736, %v3672, %v3800
  %v3865 = vsel %vm3737, %v3673, %v3801
  %v3866 = vsel %vm3738, %v3674, %v3802
  %v3867 = vsel %vm3739, %v3675, %v3803
  %v3868 = vsel %vm3740, %v3676, %v3804
  %v3869 = vsel %vm3741, %v3677, %v3805
  %v3870 = vsel %vm3742, %v3678, %v3806
  %v3871 = vsel %vm3743, %v3679, %v3807
  %v3872 = vsel %vm3744, %v3680, %v3808
  %v3873 = vsel %vm3745, %v3681, %v3809
  %v3874 = vsel %vm3746, %v3682, %v3810
  %v3875 = vsel %vm3747, %v3683, %v3811
  %v3876 = vsel %vm3748, %v3684, %v3812
  %v3877 = vsel %vm3749, %v3685, %v3813
  %v3878 = vsel %vm3750, %v3686, %v3814
  %v3879 = vsel %vm3751, %v3687, %v3815
  %v3880 = vsel %vm3752, %v3688, %v3816
  %v3881 = vsel %vm3753, %v3689, %v3817
  %v3882 = vsel %vm3754, %v3690, %v3818
  %v3883 = vsel %vm3755, %v3691, %v3819
  %v3884 = vld [vmem:[%s8] sm:$0xf]
  %v3885 = vpack.c.bf16 %v3821, %v3820
  %v3886 = vpack.c.bf16 %v3823, %v3822
  %v3887 = vpack.c.bf16 %v3825, %v3824
  %v3888 = vpack.c.bf16 %v3827, %v3826
  %v3889 = vpack.c.bf16 %v3829, %v3828
  %v3890 = vpack.c.bf16 %v3831, %v3830
  %v3891 = vpack.c.bf16 %v3833, %v3832
  %v3892 = vpack.c.bf16 %v3835, %v3834
  %v3893 = vpack.c.bf16 %v3837, %v3836
  %v3894 = vpack.c.bf16 %v3839, %v3838
  %v3895 = vpack.c.bf16 %v3841, %v3840
  %v3896 = vpack.c.bf16 %v3843, %v3842
  %v3897 = vpack.c.bf16 %v3845, %v3844
  %v3898 = vpack.c.bf16 %v3847, %v3846
  %v3899 = vpack.c.bf16 %v3849, %v3848
  %v3900 = vpack.c.bf16 %v3851, %v3850
  %v3901 = vpack.c.bf16 %v3853, %v3852
  %v3902 = vpack.c.bf16 %v3855, %v3854
  %v3903 = vpack.c.bf16 %v3857, %v3856
  %v3904 = vpack.c.bf16 %v3859, %v3858
  %v3905 = vpack.c.bf16 %v3861, %v3860
  %v3906 = vpack.c.bf16 %v3863, %v3862
  %v3907 = vpack.c.bf16 %v3865, %v3864
  %v3908 = vpack.c.bf16 %v3867, %v3866
  %v3909 = vpack.c.bf16 %v3869, %v3868
  %v3910 = vpack.c.bf16 %v3871, %v3870
  %v3911 = vpack.c.bf16 %v3873, %v3872
  %v3912 = vpack.c.bf16 %v3875, %v3874
  %v3913 = vpack.c.bf16 %v3877, %v3876
  %v3914 = vpack.c.bf16 %v3879, %v3878
  %v3915 = vpack.c.bf16 %v3881, %v3880
  %v3916 = vpack.c.bf16 %v3883, %v3882
  %v3919 = vunpack.c.l.s4 1966171168
  %v3920 = vunpack.c.0.s8 %v3919
  %v3921 = vlaneseq
  %v3922 = vshrl.u32 %v3921, 7
  %v3923 = vsub.s32 %v3920, %v3922
  %v3924 = vrot.slane %v3884, %v3923
  %v3925 = vcombine.high %v3924, %v3924
  %v3927 = vunpack.c.l.s4 1966171168
  %v3928 = vunpack.c.0.s8 %v3927
  %v3929 = vlaneseq
  %v3930 = vshrl.u32 %v3929, 7
  %v3931 = vsub.s32 %v3928, %v3930
  %v3932 = vrot.slane %v3924, %v3931
  %v3934 = vunpack.c.l.s4 1966171168
  %v3935 = vunpack.c.0.s8 %v3934
  %v3936 = vlaneseq
  %v3937 = vshrl.u32 %v3936, 7
  %v3938 = vsub.s32 %v3935, %v3937
  %v3939 = vrot.slane %v3925, %v3938
  %v3940 = vcombine.high %v3932, %v3932
  %v3941 = vcombine.high %v3939, %v3939
  %3946 = vmatprep.subr.bf16.mxu0 0
  %3947 = vmatpush1.bf16.msra.mxu0 %v3892
  %3948 = vmatprep.subr.bf16.mxu0 0
  %3949 = vmatpush1.bf16.msra.mxu0 %v3891
  %3950 = vmatprep.subr.bf16.mxu0 0
  %3951 = vmatpush1.bf16.msra.mxu0 %v3890
  %3952 = vmatprep.subr.bf16.mxu0 0
  %3953 = vmatpush1.bf16.msra.mxu0 %v3889
  %3954 = vmatprep.subr.bf16.mxu0 0
  %3955 = vmatpush1.bf16.msra.mxu0 %v3888
  %3956 = vmatprep.subr.bf16.mxu0 0
  %3957 = vmatpush1.bf16.msra.mxu0 %v3887
  %3958 = vmatprep.subr.bf16.mxu0 0
  %3959 = vmatpush1.bf16.msra.mxu0 %v3886
  %3960 = vmatprep.subr.bf16.mxu0 0
  %3961 = vmatpush1.bf16.msra.mxu0 %v3885
  %3962 = vmatprep.subr.bf16.mxu0 0
  %3963 = vmatpush2.bf16.msra.mxu0 %v3900
  %3964 = vmatprep.subr.bf16.mxu0 0
  %3965 = vmatpush2.bf16.msra.mxu0 %v3899
  %3966 = vmatprep.subr.bf16.mxu0 0
  %3967 = vmatpush2.bf16.msra.mxu0 %v3898
  %3968 = vmatprep.subr.bf16.mxu0 0
  %3969 = vmatpush2.bf16.msra.mxu0 %v3897
  %3970 = vmatprep.subr.bf16.mxu0 0
  %3971 = vmatpush2.bf16.msra.mxu0 %v3896
  %3972 = vmatprep.subr.bf16.mxu0 0
  %3973 = vmatpush2.bf16.msra.mxu0 %v3895
  %3974 = vmatprep.subr.bf16.mxu0 0
  %3975 = vmatpush2.bf16.msra.mxu0 %v3894
  %3976 = vmatprep.subr.bf16.mxu0 0
  %3977 = vmatpush2.bf16.msra.mxu0 %v3893
  %3978 = vmatprep.mubr.bf16.mxu0 %v3939
  %3979 = vmatmul.mubr.bf16.gmra.mxu0 %v3932
  %v3980 = vpop.f32.mrf.mxu0
  %v3981 = vadd.f32 0.0, %v3980
  %v3982 = vpop.f32.mrf.mxu0
  %v3983 = vpop.f32.mrf.mxu0
  %v3984 = vpop.f32.mrf.mxu0
  %3985 = vdwg.mxu0
  %3986 = vmatprep.subr.bf16.mxu0 0
  %3987 = vmatpush1.bf16.msra.mxu0 %v3908
  %3988 = vmatprep.subr.bf16.mxu0 0
  %3989 = vmatpush1.bf16.msra.mxu0 %v3907
  %3990 = vmatprep.subr.bf16.mxu0 0
  %3991 = vmatpush1.bf16.msra.mxu0 %v3906
  %3992 = vmatprep.subr.bf16.mxu0 0
  %3993 = vmatpush1.bf16.msra.mxu0 %v3905
  %3994 = vmatprep.subr.bf16.mxu0 0
  %3995 = vmatpush1.bf16.msra.mxu0 %v3904
  %3996 = vmatprep.subr.bf16.mxu0 0
  %3997 = vmatpush1.bf16.msra.mxu0 %v3903
  %3998 = vmatprep.subr.bf16.mxu0 0
  %3999 = vmatpush1.bf16.msra.mxu0 %v3902
  %4000 = vmatprep.subr.bf16.mxu0 0
  %4001 = vmatpush1.bf16.msra.mxu0 %v3901
  %4002 = vmatprep.subr.bf16.mxu0 0
  %4003 = vmatpush2.bf16.msra.mxu0 %v3916
  %4004 = vmatprep.subr.bf16.mxu0 0
  %4005 = vmatpush2.bf16.msra.mxu0 %v3915
  %4006 = vmatprep.subr.bf16.mxu0 0
  %4007 = vmatpush2.bf16.msra.mxu0 %v3914
  %4008 = vmatprep.subr.bf16.mxu0 0
  %4009 = vmatpush2.bf16.msra.mxu0 %v3913
  %4010 = vmatprep.subr.bf16.mxu0 0
  %4011 = vmatpush2.bf16.msra.mxu0 %v3912
  %4012 = vmatprep.subr.bf16.mxu0 0
  %4013 = vmatpush2.bf16.msra.mxu0 %v3911
  %4014 = vmatprep.subr.bf16.mxu0 0
  %4015 = vmatpush2.bf16.msra.mxu0 %v3910
  %4016 = vmatprep.subr.bf16.mxu0 0
  %4017 = vmatpush2.bf16.msra.mxu0 %v3909
  %4018 = vmatprep.mubr.bf16.mxu0 %v3941
  %4019 = vmatmul.mubr.bf16.gmra.mxu0 %v3940
  %v4020 = vpop.f32.mrf.mxu0
  %v4021 = vadd.f32 %v3981, %v4020
  %v4022 = vpop.f32.mrf.mxu0
  %v4023 = vpop.f32.mrf.mxu0
  %v4024 = vpop.f32.mrf.mxu0
  %4025 = vdwg.mxu0
  %v4026 = vpack.c.bf16 %v4021, %v4021
  %v4027 = vld [vmem:[%s9] sm:$0xf]
  %v4028 = vld [vmem:[%s9 + $0x4] sm:$0xf]
  %v4029 = vld [vmem:[%s9 + $0x8] sm:$0xf]
  %v4030 = vld [vmem:[%s9 + $0xc] sm:$0xf]
  %v4031 = vld [vmem:[#allocation2] sm:$0x1]
  %v4033 = vlaneseq
  %v4034 = vshrl.u32 %v4033, 7
  %v4035 = vsub.s32 0, %v4034
  %v4036 = vrot.slane %v4031, %v4035
  %v4042 = vunpack.c.l.b16 %v4027
  %v4043 = vunpack.c.l.b16 %v4028
  %v4044 = vunpack.c.l.b16 %v4029
  %v4045 = vunpack.c.l.b16 %v4030
  %v4046 = vpack.c.b16 %v4043, %v4042
  %v4047 = vpack.c.b16 %v4045, %v4044
  %v4051 = vsel %vm1556, %v4026, 0
  %4053 = vmatprep.subr.bf16.mxu0 0
  %4054 = vmatpush1.bf16.msra.mxu0 0
  %4055 = vmatprep.subr.bf16.mxu0 0
  %4056 = vmatpush1.bf16.msra.mxu0 0
  %4057 = vmatprep.subr.bf16.mxu0 0
  %4058 = vmatpush1.bf16.msra.mxu0 0
  %4059 = vmatprep.subr.bf16.mxu0 0
  %4060 = vmatpush1.bf16.msra.mxu0 0
  %4061 = vmatprep.subr.bf16.mxu0 0
  %4062 = vmatpush1.bf16.msra.mxu0 0
  %4063 = vmatprep.subr.bf16.mxu0 0
  %4064 = vmatpush1.bf16.msra.mxu0 0
  %4065 = vmatprep.subr.bf16.mxu0 0
  %4066 = vmatpush1.bf16.msra.mxu0 %v4047
  %4067 = vmatprep.subr.bf16.mxu0 0
  %4068 = vmatpush1.bf16.msra.mxu0 %v4046
  %4069 = vmatprep.subr.bf16.mxu0 0
  %4070 = vmatpush2.bf16.msra.mxu0 0
  %4071 = vmatprep.subr.bf16.mxu0 0
  %4072 = vmatpush2.bf16.msra.mxu0 0
  %4073 = vmatprep.subr.bf16.mxu0 0
  %4074 = vmatpush2.bf16.msra.mxu0 0
  %4075 = vmatprep.subr.bf16.mxu0 0
  %4076 = vmatpush2.bf16.msra.mxu0 0
  %4077 = vmatprep.subr.bf16.mxu0 0
  %4078 = vmatpush2.bf16.msra.mxu0 0
  %4079 = vmatprep.subr.bf16.mxu0 0
  %4080 = vmatpush2.bf16.msra.mxu0 0
  %4081 = vmatprep.subr.bf16.mxu0 0
  %4082 = vmatpush2.bf16.msra.mxu0 0
  %4083 = vmatprep.subr.bf16.mxu0 0
  %4084 = vmatpush2.bf16.msra.mxu0 0
  %4085 = vmatprep.mubr.bf16.mxu0 0
  %4086 = vmatmul.mubr.bf16.gmra.mxu0 %v4051
  %v4087 = vpop.f32.mrf.mxu0
  %v4088 = vadd.f32 %v4036, %v4087
  %v4089 = vpop.f32.mrf.mxu0
  %v4090 = vpop.f32.mrf.mxu0
  %v4091 = vpop.f32.mrf.mxu0
  %4092 = vdwg.mxu0
  %vm4093 = vcmask 1024
  %4094 = vst.msk [vmem:[%s11] sm:$0x3] %vm4093, %v4088
  // Predicated region
  $region46: #{tpu_custom_call.1} parent=0 // pred_check
    _
  $region47: #{tpu_custom_call.1} parent=0 // pred_check_branch
    %4096 = sbr.rel (0) target = $region49
  $region48: #{tpu_custom_call.1} parent=0 // pred_region
    _
  $region49: #{tpu_custom_call.1} parent=0 // pred_fallthru
    _
  // Predicated region
  $region50: #{tpu_custom_call.1} parent=0 // pred_check
    _
  $region51: #{tpu_custom_call.1} parent=0 // pred_check_branch
    %4098 = sbr.rel (0) target = $region53
  $region52: #{tpu_custom_call.1} parent=0 // pred_region
    _
  $region53: #{tpu_custom_call.1} parent=0 // pred_fallthru
    _

</llo_original>
